<compile_context>
chip_gen: v5e
topology: v5e:2x2
jax: 0.10.0
libtpu: 0.0.40
codegen_flags: <defaults>
</compile_context>

<pallas_src>
import functools

import jax
import jax.numpy as jnp
import numpy as np
from jax.experimental import pallas as pl
from jax.experimental.pallas import tpu as pltpu

_LANE = 128
_SUB = 8


def _round_up(x, m):
    return ((x + m - 1) // m) * m


# -----------------------------------------------------------------------------
# Fused multi-stage kernel: one batch element (one Tp lane slice) per grid step.
# -----------------------------------------------------------------------------
def _make_fused_kernel(num_layers, num_later_stages, t_valid, t_pad,
                       cf, c_pad, c_valid):
    dils = [2 ** i for i in range(num_layers)]
    tail = t_pad - t_valid
    # Layers whose dilation does not fit inside the zero time-pad tail need
    # explicit edge masks on the rolled taps (e.g. when T is already a
    # multiple of 128).  Static, per-layer decision.
    need_edge_mask = [d > tail for d in dils]
    need_pad_zero = tail > 0

    def kernel(x_ref, m_ref,
               w_in1, b_in1, wst1, bd1, w11, b11, wo1, bo1,
               w_ins, b_ins, wsts, bds, w1s, b1s, wos, bos,
               out_ref):
        x = x_ref[...]                      # (Din_p, Tp) bf16
        m = m_ref[...]                      # (1, Tp)     f32
        tp = x.shape[1]

        # Hoisted mask broadcasts (JAX does not CSE broadcast_in_dim).
        m_feat = jnp.broadcast_to(m, (cf, tp))
        m_out = jnp.broadcast_to(m, (c_pad, tp))

        lane_t = jax.lax.broadcasted_iota(jnp.int32, (1, tp), 1)
        pad_valid = None
        if need_pad_zero:
            pad_valid = jnp.broadcast_to(
                (lane_t < t_valid).astype(jnp.float32), (cf, tp))
        lmasks, rmasks = {}, {}
        for i, d in enumerate(dils):
            if need_edge_mask[i]:
                lmasks[i] = jnp.broadcast_to(
                    (lane_t >= d).astype(jnp.float32), (cf, tp))
                rmasks[i] = jnp.broadcast_to(
                    (lane_t < (t_valid - d)).astype(jnp.float32), (cf, tp))

        def stage_body(xs, w_in, b_in, wst, bd, w1, b1, w_out, b_out):
            # xs: (Din, Tp) bf16.  Every dot is bf16 x bf16 -> f32 on the MXU.
            feat = jnp.dot(w_in, xs, preferred_element_type=jnp.float32) + b_in
            if need_pad_zero:
                # Keep the time-pad columns of feat at zero: the circular
                # rolls below then wrap in zeros (== Conv1d zero padding)
                # without any per-layer lane-mask multiplies.
                feat = feat * pad_valid
            for i, d in enumerate(dils):
                # One stacked MXU pass for all three taps, shift afterwards.
                y_all = jnp.dot(wst[i], feat.astype(jnp.bfloat16),
                                preferred_element_type=jnp.float32)
                y_l = pltpu.roll(y_all[:cf, :], d % tp, axis=1)
                y_c = y_all[cf:2 * cf, :]
                y_r = pltpu.roll(y_all[2 * cf:, :], (tp - d) % tp, axis=1)
                if need_edge_mask[i]:
                    y_l = y_l * lmasks[i]
                    y_r = y_r * rmasks[i]
                y = jnp.maximum(y_l + y_c + y_r + bd[i], 0.0)          # relu
                y = jnp.dot(w1[i], y.astype(jnp.bfloat16),
                            preferred_element_type=jnp.float32) + b1[i]
                # nn.Dropout == identity at inference.
                feat = (feat + y) * m_feat               # residual + mask
            return (jnp.dot(w_out, feat.astype(jnp.bfloat16),
                            preferred_element_type=jnp.float32)
                    + b_out) * m_out

        # ---- stage 1 (no softmax on its input) ----
        out = stage_body(x, w_in1[...], b_in1[...], wst1[...], bd1[...],
                         w11[...], b11[...], wo1[...], bo1[...])
        out_ref[0] = out

        # ---- later stages: softmax over classes * mask, then the stage ----
        if num_later_stages > 0 and c_pad != c_valid:
            class_valid = jax.lax.broadcasted_iota(
                jnp.int32, (c_pad, tp), 0) < c_valid
        for s in range(num_later_stages):
            if c_pad != c_valid:
                z = jnp.where(class_valid, out, -jnp.inf)  # drop padded rows
            else:
                z = out
            zmax = jnp.max(z, axis=0, keepdims=True)
            e = jnp.exp(z - zmax)
            # TODO(synk): bf16 exp on v6e/v7x (2x EUP); kept f32 so the same
            #             kernel also runs on v5e (no bf16 EUP there).
            p = e * pl.reciprocal(jnp.sum(e, axis=0, keepdims=True),
                                  approx=True)
            xs = (p * m_out).astype(jnp.bfloat16)
            out = stage_body(xs, w_ins[s], b_ins[s], wsts[s], bds[s],
                             w1s[s], b1s[s], wos[s], bos[s])
            out_ref[s + 1] = out

    return kernel


# -----------------------------------------------------------------------------
# MultiStageModel forward (packing glue in plain JAX, hot path fused in Pallas).
# -----------------------------------------------------------------------------
def multi_stage_forward(x, mask, params, *, sample_rate: int):
    B, dim, T = x.shape
    mask1 = mask[:, 0:1, ::sample_rate]                    # (B, 1, T)

    w_in1 = params["stage1"][0]
    w_out1 = params["stage1"][6]
    Cf = w_in1.shape[0]
    C = w_out1.shape[0]
    L = params["stage1"][2].shape[0]
    S = 1 + len(params["stages"])

    Tp = _round_up(T, _LANE)
    Cfp = _round_up(Cf, _SUB)
    Cp = _round_up(C, _SUB)
    Dinp = _round_up(dim, _SUB)

    # ---- pack activations: (B, C, T) -> (Cpad, B*Tp); x goes bf16 (MXU) ----
    def pack(a, c_to):
        a = jnp.pad(a, ((0, 0), (0, c_to - a.shape[1]), (0, Tp - T)))
        return jnp.transpose(a, (1, 0, 2)).reshape(c_to, B * Tp)

    xp = pack(x, Dinp).astype(jnp.bfloat16)
    mp = pack(mask1, 1).astype(jnp.float32)

    def _pad2(w, r, c):
        return jnp.pad(w, ((0, r - w.shape[0]), (0, c - w.shape[1])))

    def prep_stage(p, din_p):
        w_in, b_in, wd, bd, w1, b1, w_out, b_out = p
        w_in = _pad2(w_in, Cfp, din_p).astype(jnp.bfloat16)
        b_in = _pad2(b_in, Cfp, 1)
        wd = jnp.pad(wd, ((0, 0), (0, 0), (0, Cfp - Cf), (0, Cfp - Cf)))
        wst = wd.reshape(L, 3 * Cfp, Cfp).astype(jnp.bfloat16)   # taps stacked
        bd = jnp.pad(bd, ((0, 0), (0, Cfp - Cf), (0, 0)))
        w1 = jnp.pad(w1, ((0, 0), (0, Cfp - Cf), (0, Cfp - Cf))).astype(jnp.bfloat16)
        b1 = jnp.pad(b1, ((0, 0), (0, Cfp - Cf), (0, 0)))
        w_out = _pad2(w_out, Cp, Cfp).astype(jnp.bfloat16)
        b_out = _pad2(b_out, Cp, 1)
        return (w_in, b_in, wst, bd, w1, b1, w_out, b_out)

    s1 = prep_stage(params["stage1"], Dinp)
    if S > 1:
        later = [prep_stage(p, Cp) for p in params["stages"]]
        stacked = tuple(jnp.stack([st[k] for st in later], axis=0)
                        for k in range(8))
    else:
        # Never read (the in-kernel static stage loop has range 0).
        stacked = tuple(jnp.zeros((1,) + a.shape, a.dtype) for a in s1)

    kernel = _make_fused_kernel(L, S - 1, T, Tp, Cfp, Cp, C)
    weight_ops = s1 + stacked
    operands = (xp, mp) + weight_ops

    def _const_spec(a):     # whole array, resident across the grid
        return pl.BlockSpec(a.shape, lambda b, nd=a.ndim: (0,) * nd)

    in_specs = ([pl.BlockSpec((Dinp, Tp), lambda b: (0, b)),
                 pl.BlockSpec((1, Tp), lambda b: (0, b))]
                + [_const_spec(a) for a in weight_ops])
    out_spec = pl.BlockSpec((S, Cp, Tp), lambda b: (0, 0, b))

    # Explicit VMEM budget: double-buffered activation/output blocks +
    # resident weights + live intermediates, capped at v7x's 64 MiB physical.
    def _nbytes(a):
        return int(a.size) * a.dtype.itemsize
    blk = Dinp * Tp * 2 + Tp * 4 + S * Cp * Tp * 4
    wbytes = sum(_nbytes(a) for a in weight_ops)
    live = (10 * Cfp + 8 * Cp) * Tp * 4
    vmem_limit = int(min(max(2 * (2 * blk + wbytes) + live, 16 << 20), 64 << 20))

    out_packed = pl.pallas_call(
        kernel,
        out_shape=jax.ShapeDtypeStruct((S, Cp, B * Tp), jnp.float32),
        grid=(B,),
        in_specs=in_specs,
        out_specs=out_spec,
        compiler_params=pltpu.CompilerParams(
            dimension_semantics=("parallel",),       # v7x: 2 TCs split batch
            vmem_limit_bytes=vmem_limit),
    )(*operands)

    # (S, Cp, B*Tp) -> (S, B, C, T) -> nearest-neighbour upsample by sample_rate
    out = out_packed.reshape(S, Cp, B, Tp)[:, :C, :, :T].transpose(0, 2, 1, 3)
    return jnp.repeat(out, sample_rate, axis=-1)


# -----------------------------------------------------------------------------
# Deterministic parameter construction.
# -----------------------------------------------------------------------------
def init_stage_params(key, num_layers, num_f_maps, dim, num_classes, scale=0.1):
    ks = jax.random.split(key, 8)
    w_in = jax.random.normal(ks[0], (num_f_maps, dim), jnp.float32) * scale
    b_in = jax.random.normal(ks[1], (num_f_maps, 1), jnp.float32) * scale
    wd = jax.random.normal(ks[2], (num_layers, 3, num_f_maps, num_f_maps),
                           jnp.float32) * scale
    bd = jax.random.normal(ks[3], (num_layers, num_f_maps, 1), jnp.float32) * scale
    w1 = jax.random.normal(ks[4], (num_layers, num_f_maps, num_f_maps),
                           jnp.float32) * scale
    b1 = jax.random.normal(ks[5], (num_layers, num_f_maps, 1), jnp.float32) * scale
    w_out = jax.random.normal(ks[6], (num_classes, num_f_maps), jnp.float32) * scale
    b_out = jax.random.normal(ks[7], (num_classes, 1), jnp.float32) * scale
    return (w_in, b_in, wd, bd, w1, b1, w_out, b_out)


def init_params(key, num_stages, num_layers, num_f_maps, dim, num_classes):
    keys = jax.random.split(key, num_stages)
    return {
        "stage1": init_stage_params(keys[0], num_layers, num_f_maps, dim,
                                    num_classes),
        "stages": [
            init_stage_params(keys[s], num_layers, num_f_maps, num_classes,
                              num_classes)
            for s in range(1, num_stages)
        ],
    }


# -----------------------------------------------------------------------------
# Pure-JAX reference.  It mirrors the kernel's bf16 rounding points (operand
# quantization only; all accumulation in f32) so the comparison isolates the
# kernel mechanics; the only remaining deltas are accumulation order and the
# approximate EUP reciprocal in the softmax denominator.
# -----------------------------------------------------------------------------
def _q(a):
    return a.astype(jnp.bfloat16).astype(jnp.float32)


def _ref_stage(x, mask1, params, apply_softmax):
    w_in, b_in, wd, bd, w1, b1, w_out, b_out = params
    hp = jax.lax.Precision.HIGHEST
    if apply_softmax:
        x = jax.nn.softmax(x, axis=1) * mask1
    xq = _q(x)
    feat = jnp.einsum("oi,bit->bot", _q(w_in), xq, precision=hp) + b_in[None]
    B, Cf, T = feat.shape
    for i in range(wd.shape[0]):
        d = 2 ** i
        fq = _q(feat)
        zpad = jnp.zeros((B, Cf, d), jnp.float32)
        left = jnp.concatenate([zpad, fq[:, :, :T - d]], axis=2)
        right = jnp.concatenate([fq[:, :, d:], zpad], axis=2)
        y = (jnp.einsum("oi,bit->bot", _q(wd[i, 0]), left, precision=hp)
             + jnp.einsum("oi,bit->bot", _q(wd[i, 1]), fq, precision=hp)
             + jnp.einsum("oi,bit->bot", _q(wd[i, 2]), right, precision=hp)
             + bd[i][None])
        y = _q(jnp.maximum(y, 0.0))
        y = jnp.einsum("oi,bit->bot", _q(w1[i]), y, precision=hp) + b1[i][None]
        feat = (feat + y) * mask1
    return (jnp.einsum("oi,bit->bot", _q(w_out), _q(feat), precision=hp)
            + b_out[None]) * mask1


def _ref_multi_stage(x, mask, params, sample_rate):
    mask1 = mask[:, :, ::sample_rate][:, 0:1, :]
    out = _ref_stage(x, mask1, params["stage1"], False)
    outs = [out]
    for sp in params["stages"]:
        out = _ref_stage(out, mask1, sp, True)
        outs.append(out)
    return jnp.repeat(jnp.stack(outs, axis=0), sample_rate, axis=-1)


# -----------------------------------------------------------------------------
if __name__ == "__main__":
    # MultiStageModel(num_stages=3, num_layers=4, num_f_maps=16, dim=6,
    #                 num_classes=8, sample_rate=2, out_feature=False)
    num_stages, num_layers, num_f_maps, dim, num_classes = 3, 4, 16, 6, 8
    sample_rate = 2
    B, T = 3, 24                       # x temporal length (already subsampled)
    T_full = T * sample_rate           # mask temporal length

    key = jax.random.PRNGKey(0)
    kx, kp = jax.random.split(key)

    x = jax.random.normal(kx, (B, dim, T), jnp.float32)
    # binary mask with per-sequence valid lengths
    lengths = jnp.array([T_full, (3 * T_full) // 4, T_full // 2])
    t_idx = jnp.arange(T_full)
    mask = (t_idx[None, None, :] < lengths[:, None, None]).astype(jnp.float32)
    mask = jnp.broadcast_to(mask, (B, num_classes, T_full))

    params = init_params(kp, num_stages, num_layers, num_f_maps, dim,
                         num_classes)

    fwd = jax.jit(functools.partial(multi_stage_forward,
                                    sample_rate=sample_rate))
    out = fwd(x, mask, params)
    jax.block_until_ready(out)

    ref = _ref_multi_stage(x, mask, params, sample_rate)
    # Tolerance covers the approximate EUP reciprocal in the softmax and
    # bf16-operand accumulation-order differences.
    np.testing.assert_allclose(np.asarray(out), np.asarray(ref),
                               rtol=5e-3, atol=5e-3)
    assert out.shape == (num_stages, B, num_classes, T_full)

    print("KERNEL_OK")
</pallas_src>

<mosaic_0001>
module attributes {stable_mosaic.version = 11 : i64} {
  func.func @kernel(%arg0: i32, %arg1: memref<8x128xbf16, #tpu.memory_space<vmem>>, %arg2: memref<1x128xf32, #tpu.memory_space<vmem>>, %arg3: memref<16x8xbf16, #tpu.memory_space<vmem>>, %arg4: memref<16x1xf32, #tpu.memory_space<vmem>>, %arg5: memref<4x48x16xbf16, #tpu.memory_space<vmem>>, %arg6: memref<4x16x1xf32, #tpu.memory_space<vmem>>, %arg7: memref<4x16x16xbf16, #tpu.memory_space<vmem>>, %arg8: memref<4x16x1xf32, #tpu.memory_space<vmem>>, %arg9: memref<8x16xbf16, #tpu.memory_space<vmem>>, %arg10: memref<8x1xf32, #tpu.memory_space<vmem>>, %arg11: memref<2x16x8xbf16, #tpu.memory_space<vmem>>, %arg12: memref<2x16x1xf32, #tpu.memory_space<vmem>>, %arg13: memref<2x4x48x16xbf16, #tpu.memory_space<vmem>>, %arg14: memref<2x4x16x1xf32, #tpu.memory_space<vmem>>, %arg15: memref<2x4x16x16xbf16, #tpu.memory_space<vmem>>, %arg16: memref<2x4x16x1xf32, #tpu.memory_space<vmem>>, %arg17: memref<2x8x16xbf16, #tpu.memory_space<vmem>>, %arg18: memref<2x8x1xf32, #tpu.memory_space<vmem>>, %arg19: memref<3x8x128xf32, #tpu.memory_space<vmem>>) attributes {dimension_semantics = [#tpu.dimension_semantics<parallel>], iteration_bounds = array<i64: 3>, scalar_prefetch = 0 : i64, scratch_operands = 0 : i64, tpu.core_type = #tpu.core_type<tc>, window_params = [{transform_indices = @transform_0, window_bounds = array<i64: 8, 128>}, {transform_indices = @transform_1, window_bounds = array<i64: 1, 128>}, {pipeline_mode = #tpu.pipeline_mode<synchronous>, transform_indices = @transform_2, window_bounds = array<i64: 16, 8>}, {pipeline_mode = #tpu.pipeline_mode<synchronous>, transform_indices = @transform_3, window_bounds = array<i64: 16, 1>}, {pipeline_mode = #tpu.pipeline_mode<synchronous>, transform_indices = @transform_4, window_bounds = array<i64: 4, 48, 16>}, {pipeline_mode = #tpu.pipeline_mode<synchronous>, transform_indices = @transform_5, window_bounds = array<i64: 4, 16, 1>}, {pipeline_mode = #tpu.pipeline_mode<synchronous>, transform_indices = @transform_6, window_bounds = array<i64: 4, 16, 16>}, {pipeline_mode = #tpu.pipeline_mode<synchronous>, transform_indices = @transform_7, window_bounds = array<i64: 4, 16, 1>}, {pipeline_mode = #tpu.pipeline_mode<synchronous>, transform_indices = @transform_8, window_bounds = array<i64: 8, 16>}, {pipeline_mode = #tpu.pipeline_mode<synchronous>, transform_indices = @transform_9, window_bounds = array<i64: 8, 1>}, {pipeline_mode = #tpu.pipeline_mode<synchronous>, transform_indices = @transform_10, window_bounds = array<i64: 2, 16, 8>}, {pipeline_mode = #tpu.pipeline_mode<synchronous>, transform_indices = @transform_11, window_bounds = array<i64: 2, 16, 1>}, {pipeline_mode = #tpu.pipeline_mode<synchronous>, transform_indices = @transform_12, window_bounds = array<i64: 2, 4, 48, 16>}, {pipeline_mode = #tpu.pipeline_mode<synchronous>, transform_indices = @transform_13, window_bounds = array<i64: 2, 4, 16, 1>}, {pipeline_mode = #tpu.pipeline_mode<synchronous>, transform_indices = @transform_14, window_bounds = array<i64: 2, 4, 16, 16>}, {pipeline_mode = #tpu.pipeline_mode<synchronous>, transform_indices = @transform_15, window_bounds = array<i64: 2, 4, 16, 1>}, {pipeline_mode = #tpu.pipeline_mode<synchronous>, transform_indices = @transform_16, window_bounds = array<i64: 2, 8, 16>}, {pipeline_mode = #tpu.pipeline_mode<synchronous>, transform_indices = @transform_17, window_bounds = array<i64: 2, 8, 1>}, {transform_indices = @transform_18, window_bounds = array<i64: 3, 8, 128>}]} {
    %c0 = arith.constant 0 : index
    %c0_0 = arith.constant 0 : index
    %0 = vector.load %arg1[%c0, %c0_0] : memref<8x128xbf16, #tpu.memory_space<vmem>>, vector<8x128xbf16>
    %c0_1 = arith.constant 0 : index
    %c0_2 = arith.constant 0 : index
    %1 = vector.load %arg2[%c0_1, %c0_2] : memref<1x128xf32, #tpu.memory_space<vmem>>, vector<1x128xf32>
    %2 = vector.shape_cast %1 : vector<1x128xf32> to vector<1x128xf32>
    %3 = vector.broadcast %2 : vector<1x128xf32> to vector<16x128xf32>
    %4 = vector.shape_cast %1 : vector<1x128xf32> to vector<1x128xf32>
    %5 = vector.broadcast %4 : vector<1x128xf32> to vector<8x128xf32>
    %6 = tpu.iota {dimensions = array<i32: 1>} : vector<1x128xi32>
    %c24_i32 = arith.constant 24 : i32
    %7 = vector.broadcast %c24_i32 : i32 to vector<1x128xi32>
    %8 = arith.cmpi slt, %6, %7 : vector<1x128xi32>
    %9 = arith.extui %8 : vector<1x128xi1> to vector<1x128xi32>
    %10 = arith.sitofp %9 : vector<1x128xi32> to vector<1x128xf32>
    %11 = vector.shape_cast %10 : vector<1x128xf32> to vector<1x128xf32>
    %12 = vector.broadcast %11 : vector<1x128xf32> to vector<16x128xf32>
    %c0_3 = arith.constant 0 : index
    %c0_4 = arith.constant 0 : index
    %13 = vector.load %arg3[%c0_3, %c0_4] : memref<16x8xbf16, #tpu.memory_space<vmem>>, vector<16x8xbf16>
    %c0_5 = arith.constant 0 : index
    %c0_6 = arith.constant 0 : index
    %14 = vector.load %arg4[%c0_5, %c0_6] : memref<16x1xf32, #tpu.memory_space<vmem>>, vector<16x1xf32>
    %c0_7 = arith.constant 0 : index
    %c0_8 = arith.constant 0 : index
    %c0_9 = arith.constant 0 : index
    %15 = vector.load %arg5[%c0_7, %c0_8, %c0_9] : memref<4x48x16xbf16, #tpu.memory_space<vmem>>, vector<4x48x16xbf16>
    %c0_10 = arith.constant 0 : index
    %c0_11 = arith.constant 0 : index
    %c0_12 = arith.constant 0 : index
    %16 = vector.load %arg6[%c0_10, %c0_11, %c0_12] : memref<4x16x1xf32, #tpu.memory_space<vmem>>, vector<4x16x1xf32>
    %c0_13 = arith.constant 0 : index
    %c0_14 = arith.constant 0 : index
    %c0_15 = arith.constant 0 : index
    %17 = vector.load %arg7[%c0_13, %c0_14, %c0_15] : memref<4x16x16xbf16, #tpu.memory_space<vmem>>, vector<4x16x16xbf16>
    %c0_16 = arith.constant 0 : index
    %c0_17 = arith.constant 0 : index
    %c0_18 = arith.constant 0 : index
    %18 = vector.load %arg8[%c0_16, %c0_17, %c0_18] : memref<4x16x1xf32, #tpu.memory_space<vmem>>, vector<4x16x1xf32>
    %c0_19 = arith.constant 0 : index
    %c0_20 = arith.constant 0 : index
    %19 = vector.load %arg9[%c0_19, %c0_20] : memref<8x16xbf16, #tpu.memory_space<vmem>>, vector<8x16xbf16>
    %c0_21 = arith.constant 0 : index
    %c0_22 = arith.constant 0 : index
    %20 = vector.load %arg10[%c0_21, %c0_22] : memref<8x1xf32, #tpu.memory_space<vmem>>, vector<8x1xf32>
    %cst = arith.constant dense<0.000000e+00> : vector<16x128xf32>
    %21 = tpu.matmul %13, %0, %cst {dimension_numbers = #tpu.dot_dimension_numbers<[1], [0], [0], [1], [0, 0, 1, 1], [], []>} : vector<16x8xbf16>, vector<8x128xbf16>, vector<16x128xf32> -> vector<16x128xf32>
    %22 = vector.broadcast %14 : vector<16x1xf32> to vector<16x128xf32>
    %23 = arith.addf %21, %22 : vector<16x128xf32>
    %24 = arith.mulf %23, %12 : vector<16x128xf32>
    %25 = vector.extract_strided_slice %15 {offsets = [0, 0, 0], sizes = [1, 48, 16], strides = [1, 1, 1]} : vector<4x48x16xbf16> to vector<1x48x16xbf16>
    %26 = vector.shape_cast %25 : vector<1x48x16xbf16> to vector<48x16xbf16>
    %27 = arith.truncf %24 : vector<16x128xf32> to vector<16x128xbf16>
    %cst_23 = arith.constant dense<0.000000e+00> : vector<48x128xf32>
    %28 = tpu.matmul %26, %27, %cst_23 {dimension_numbers = #tpu.dot_dimension_numbers<[1], [0], [0], [1], [0, 0, 1, 1], [], []>} : vector<48x16xbf16>, vector<16x128xbf16>, vector<48x128xf32> -> vector<48x128xf32>
    %29 = vector.extract_strided_slice %28 {offsets = [0, 0], sizes = [16, 128], strides = [1, 1]} : vector<48x128xf32> to vector<16x128xf32>
    %c1_i32 = arith.constant 1 : i32
    %30 = tpu.dynamic_rotate %29 by %c1_i32 dim 1 : vector<16x128xf32>, i32 -> vector<16x128xf32>
    %31 = vector.extract_strided_slice %28 {offsets = [16, 0], sizes = [16, 128], strides = [1, 1]} : vector<48x128xf32> to vector<16x128xf32>
    %32 = vector.extract_strided_slice %28 {offsets = [32, 0], sizes = [16, 128], strides = [1, 1]} : vector<48x128xf32> to vector<16x128xf32>
    %c127_i32 = arith.constant 127 : i32
    %33 = tpu.dynamic_rotate %32 by %c127_i32 dim 1 : vector<16x128xf32>, i32 -> vector<16x128xf32>
    %34 = arith.addf %30, %31 : vector<16x128xf32>
    %35 = arith.addf %34, %33 : vector<16x128xf32>
    %36 = vector.extract_strided_slice %16 {offsets = [0, 0, 0], sizes = [1, 16, 1], strides = [1, 1, 1]} : vector<4x16x1xf32> to vector<1x16x1xf32>
    %37 = vector.shape_cast %36 : vector<1x16x1xf32> to vector<16x1xf32>
    %38 = vector.broadcast %37 : vector<16x1xf32> to vector<16x128xf32>
    %39 = arith.addf %35, %38 : vector<16x128xf32>
    %cst_24 = arith.constant 0.000000e+00 : f32
    %40 = vector.broadcast %cst_24 : f32 to vector<16x128xf32>
    %41 = arith.maximumf %39, %40 : vector<16x128xf32>
    %42 = vector.extract_strided_slice %17 {offsets = [0, 0, 0], sizes = [1, 16, 16], strides = [1, 1, 1]} : vector<4x16x16xbf16> to vector<1x16x16xbf16>
    %43 = vector.shape_cast %42 : vector<1x16x16xbf16> to vector<16x16xbf16>
    %44 = arith.truncf %41 : vector<16x128xf32> to vector<16x128xbf16>
    %cst_25 = arith.constant dense<0.000000e+00> : vector<16x128xf32>
    %45 = tpu.matmul %43, %44, %cst_25 {dimension_numbers = #tpu.dot_dimension_numbers<[1], [0], [0], [1], [0, 0, 1, 1], [], []>} : vector<16x16xbf16>, vector<16x128xbf16>, vector<16x128xf32> -> vector<16x128xf32>
    %46 = vector.extract_strided_slice %18 {offsets = [0, 0, 0], sizes = [1, 16, 1], strides = [1, 1, 1]} : vector<4x16x1xf32> to vector<1x16x1xf32>
    %47 = vector.shape_cast %46 : vector<1x16x1xf32> to vector<16x1xf32>
    %48 = vector.broadcast %47 : vector<16x1xf32> to vector<16x128xf32>
    %49 = arith.addf %45, %48 : vector<16x128xf32>
    %50 = arith.addf %24, %49 : vector<16x128xf32>
    %51 = arith.mulf %50, %3 : vector<16x128xf32>
    %52 = vector.extract_strided_slice %15 {offsets = [1, 0, 0], sizes = [1, 48, 16], strides = [1, 1, 1]} : vector<4x48x16xbf16> to vector<1x48x16xbf16>
    %53 = vector.shape_cast %52 : vector<1x48x16xbf16> to vector<48x16xbf16>
    %54 = arith.truncf %51 : vector<16x128xf32> to vector<16x128xbf16>
    %cst_26 = arith.constant dense<0.000000e+00> : vector<48x128xf32>
    %55 = tpu.matmul %53, %54, %cst_26 {dimension_numbers = #tpu.dot_dimension_numbers<[1], [0], [0], [1], [0, 0, 1, 1], [], []>} : vector<48x16xbf16>, vector<16x128xbf16>, vector<48x128xf32> -> vector<48x128xf32>
    %56 = vector.extract_strided_slice %55 {offsets = [0, 0], sizes = [16, 128], strides = [1, 1]} : vector<48x128xf32> to vector<16x128xf32>
    %c2_i32 = arith.constant 2 : i32
    %57 = tpu.dynamic_rotate %56 by %c2_i32 dim 1 : vector<16x128xf32>, i32 -> vector<16x128xf32>
    %58 = vector.extract_strided_slice %55 {offsets = [16, 0], sizes = [16, 128], strides = [1, 1]} : vector<48x128xf32> to vector<16x128xf32>
    %59 = vector.extract_strided_slice %55 {offsets = [32, 0], sizes = [16, 128], strides = [1, 1]} : vector<48x128xf32> to vector<16x128xf32>
    %c126_i32 = arith.constant 126 : i32
    %60 = tpu.dynamic_rotate %59 by %c126_i32 dim 1 : vector<16x128xf32>, i32 -> vector<16x128xf32>
    %61 = arith.addf %57, %58 : vector<16x128xf32>
    %62 = arith.addf %61, %60 : vector<16x128xf32>
    %63 = vector.extract_strided_slice %16 {offsets = [1, 0, 0], sizes = [1, 16, 1], strides = [1, 1, 1]} : vector<4x16x1xf32> to vector<1x16x1xf32>
    %64 = vector.shape_cast %63 : vector<1x16x1xf32> to vector<16x1xf32>
    %65 = vector.broadcast %64 : vector<16x1xf32> to vector<16x128xf32>
    %66 = arith.addf %62, %65 : vector<16x128xf32>
    %cst_27 = arith.constant 0.000000e+00 : f32
    %67 = vector.broadcast %cst_27 : f32 to vector<16x128xf32>
    %68 = arith.maximumf %66, %67 : vector<16x128xf32>
    %69 = vector.extract_strided_slice %17 {offsets = [1, 0, 0], sizes = [1, 16, 16], strides = [1, 1, 1]} : vector<4x16x16xbf16> to vector<1x16x16xbf16>
    %70 = vector.shape_cast %69 : vector<1x16x16xbf16> to vector<16x16xbf16>
    %71 = arith.truncf %68 : vector<16x128xf32> to vector<16x128xbf16>
    %cst_28 = arith.constant dense<0.000000e+00> : vector<16x128xf32>
    %72 = tpu.matmul %70, %71, %cst_28 {dimension_numbers = #tpu.dot_dimension_numbers<[1], [0], [0], [1], [0, 0, 1, 1], [], []>} : vector<16x16xbf16>, vector<16x128xbf16>, vector<16x128xf32> -> vector<16x128xf32>
    %73 = vector.extract_strided_slice %18 {offsets = [1, 0, 0], sizes = [1, 16, 1], strides = [1, 1, 1]} : vector<4x16x1xf32> to vector<1x16x1xf32>
    %74 = vector.shape_cast %73 : vector<1x16x1xf32> to vector<16x1xf32>
    %75 = vector.broadcast %74 : vector<16x1xf32> to vector<16x128xf32>
    %76 = arith.addf %72, %75 : vector<16x128xf32>
    %77 = arith.addf %51, %76 : vector<16x128xf32>
    %78 = arith.mulf %77, %3 : vector<16x128xf32>
    %79 = vector.extract_strided_slice %15 {offsets = [2, 0, 0], sizes = [1, 48, 16], strides = [1, 1, 1]} : vector<4x48x16xbf16> to vector<1x48x16xbf16>
    %80 = vector.shape_cast %79 : vector<1x48x16xbf16> to vector<48x16xbf16>
    %81 = arith.truncf %78 : vector<16x128xf32> to vector<16x128xbf16>
    %cst_29 = arith.constant dense<0.000000e+00> : vector<48x128xf32>
    %82 = tpu.matmul %80, %81, %cst_29 {dimension_numbers = #tpu.dot_dimension_numbers<[1], [0], [0], [1], [0, 0, 1, 1], [], []>} : vector<48x16xbf16>, vector<16x128xbf16>, vector<48x128xf32> -> vector<48x128xf32>
    %83 = vector.extract_strided_slice %82 {offsets = [0, 0], sizes = [16, 128], strides = [1, 1]} : vector<48x128xf32> to vector<16x128xf32>
    %c4_i32 = arith.constant 4 : i32
    %84 = tpu.dynamic_rotate %83 by %c4_i32 dim 1 : vector<16x128xf32>, i32 -> vector<16x128xf32>
    %85 = vector.extract_strided_slice %82 {offsets = [16, 0], sizes = [16, 128], strides = [1, 1]} : vector<48x128xf32> to vector<16x128xf32>
    %86 = vector.extract_strided_slice %82 {offsets = [32, 0], sizes = [16, 128], strides = [1, 1]} : vector<48x128xf32> to vector<16x128xf32>
    %c124_i32 = arith.constant 124 : i32
    %87 = tpu.dynamic_rotate %86 by %c124_i32 dim 1 : vector<16x128xf32>, i32 -> vector<16x128xf32>
    %88 = arith.addf %84, %85 : vector<16x128xf32>
    %89 = arith.addf %88, %87 : vector<16x128xf32>
    %90 = vector.extract_strided_slice %16 {offsets = [2, 0, 0], sizes = [1, 16, 1], strides = [1, 1, 1]} : vector<4x16x1xf32> to vector<1x16x1xf32>
    %91 = vector.shape_cast %90 : vector<1x16x1xf32> to vector<16x1xf32>
    %92 = vector.broadcast %91 : vector<16x1xf32> to vector<16x128xf32>
    %93 = arith.addf %89, %92 : vector<16x128xf32>
    %cst_30 = arith.constant 0.000000e+00 : f32
    %94 = vector.broadcast %cst_30 : f32 to vector<16x128xf32>
    %95 = arith.maximumf %93, %94 : vector<16x128xf32>
    %96 = vector.extract_strided_slice %17 {offsets = [2, 0, 0], sizes = [1, 16, 16], strides = [1, 1, 1]} : vector<4x16x16xbf16> to vector<1x16x16xbf16>
    %97 = vector.shape_cast %96 : vector<1x16x16xbf16> to vector<16x16xbf16>
    %98 = arith.truncf %95 : vector<16x128xf32> to vector<16x128xbf16>
    %cst_31 = arith.constant dense<0.000000e+00> : vector<16x128xf32>
    %99 = tpu.matmul %97, %98, %cst_31 {dimension_numbers = #tpu.dot_dimension_numbers<[1], [0], [0], [1], [0, 0, 1, 1], [], []>} : vector<16x16xbf16>, vector<16x128xbf16>, vector<16x128xf32> -> vector<16x128xf32>
    %100 = vector.extract_strided_slice %18 {offsets = [2, 0, 0], sizes = [1, 16, 1], strides = [1, 1, 1]} : vector<4x16x1xf32> to vector<1x16x1xf32>
    %101 = vector.shape_cast %100 : vector<1x16x1xf32> to vector<16x1xf32>
    %102 = vector.broadcast %101 : vector<16x1xf32> to vector<16x128xf32>
    %103 = arith.addf %99, %102 : vector<16x128xf32>
    %104 = arith.addf %78, %103 : vector<16x128xf32>
    %105 = arith.mulf %104, %3 : vector<16x128xf32>
    %106 = vector.extract_strided_slice %15 {offsets = [3, 0, 0], sizes = [1, 48, 16], strides = [1, 1, 1]} : vector<4x48x16xbf16> to vector<1x48x16xbf16>
    %107 = vector.shape_cast %106 : vector<1x48x16xbf16> to vector<48x16xbf16>
    %108 = arith.truncf %105 : vector<16x128xf32> to vector<16x128xbf16>
    %cst_32 = arith.constant dense<0.000000e+00> : vector<48x128xf32>
    %109 = tpu.matmul %107, %108, %cst_32 {dimension_numbers = #tpu.dot_dimension_numbers<[1], [0], [0], [1], [0, 0, 1, 1], [], []>} : vector<48x16xbf16>, vector<16x128xbf16>, vector<48x128xf32> -> vector<48x128xf32>
    %110 = vector.extract_strided_slice %109 {offsets = [0, 0], sizes = [16, 128], strides = [1, 1]} : vector<48x128xf32> to vector<16x128xf32>
    %c8_i32 = arith.constant 8 : i32
    %111 = tpu.dynamic_rotate %110 by %c8_i32 dim 1 : vector<16x128xf32>, i32 -> vector<16x128xf32>
    %112 = vector.extract_strided_slice %109 {offsets = [16, 0], sizes = [16, 128], strides = [1, 1]} : vector<48x128xf32> to vector<16x128xf32>
    %113 = vector.extract_strided_slice %109 {offsets = [32, 0], sizes = [16, 128], strides = [1, 1]} : vector<48x128xf32> to vector<16x128xf32>
    %c120_i32 = arith.constant 120 : i32
    %114 = tpu.dynamic_rotate %113 by %c120_i32 dim 1 : vector<16x128xf32>, i32 -> vector<16x128xf32>
    %115 = arith.addf %111, %112 : vector<16x128xf32>
    %116 = arith.addf %115, %114 : vector<16x128xf32>
    %117 = vector.extract_strided_slice %16 {offsets = [3, 0, 0], sizes = [1, 16, 1], strides = [1, 1, 1]} : vector<4x16x1xf32> to vector<1x16x1xf32>
    %118 = vector.shape_cast %117 : vector<1x16x1xf32> to vector<16x1xf32>
    %119 = vector.broadcast %118 : vector<16x1xf32> to vector<16x128xf32>
    %120 = arith.addf %116, %119 : vector<16x128xf32>
    %cst_33 = arith.constant 0.000000e+00 : f32
    %121 = vector.broadcast %cst_33 : f32 to vector<16x128xf32>
    %122 = arith.maximumf %120, %121 : vector<16x128xf32>
    %123 = vector.extract_strided_slice %17 {offsets = [3, 0, 0], sizes = [1, 16, 16], strides = [1, 1, 1]} : vector<4x16x16xbf16> to vector<1x16x16xbf16>
    %124 = vector.shape_cast %123 : vector<1x16x16xbf16> to vector<16x16xbf16>
    %125 = arith.truncf %122 : vector<16x128xf32> to vector<16x128xbf16>
    %cst_34 = arith.constant dense<0.000000e+00> : vector<16x128xf32>
    %126 = tpu.matmul %124, %125, %cst_34 {dimension_numbers = #tpu.dot_dimension_numbers<[1], [0], [0], [1], [0, 0, 1, 1], [], []>} : vector<16x16xbf16>, vector<16x128xbf16>, vector<16x128xf32> -> vector<16x128xf32>
    %127 = vector.extract_strided_slice %18 {offsets = [3, 0, 0], sizes = [1, 16, 1], strides = [1, 1, 1]} : vector<4x16x1xf32> to vector<1x16x1xf32>
    %128 = vector.shape_cast %127 : vector<1x16x1xf32> to vector<16x1xf32>
    %129 = vector.broadcast %128 : vector<16x1xf32> to vector<16x128xf32>
    %130 = arith.addf %126, %129 : vector<16x128xf32>
    %131 = arith.addf %105, %130 : vector<16x128xf32>
    %132 = arith.mulf %131, %3 : vector<16x128xf32>
    %133 = arith.truncf %132 : vector<16x128xf32> to vector<16x128xbf16>
    %cst_35 = arith.constant dense<0.000000e+00> : vector<8x128xf32>
    %134 = tpu.matmul %19, %133, %cst_35 {dimension_numbers = #tpu.dot_dimension_numbers<[1], [0], [0], [1], [0, 0, 1, 1], [], []>} : vector<8x16xbf16>, vector<16x128xbf16>, vector<8x128xf32> -> vector<8x128xf32>
    %135 = vector.broadcast %20 : vector<8x1xf32> to vector<8x128xf32>
    %136 = arith.addf %134, %135 : vector<8x128xf32>
    %137 = arith.mulf %136, %5 : vector<8x128xf32>
    %c0_36 = arith.constant 0 : index
    %c0_37 = arith.constant 0 : index
    %c0_38 = arith.constant 0 : index
    %138 = vector.load %arg19[%c0_36, %c0_37, %c0_38] : memref<3x8x128xf32, #tpu.memory_space<vmem>>, vector<1x8x128xf32>
    %139 = vector.shape_cast %138 : vector<1x8x128xf32> to vector<8x128xf32>
    %140 = vector.shape_cast %137 : vector<8x128xf32> to vector<1x8x128xf32>
    tpu.vector_store %arg19[%c0_36, %c0_37, %c0_38], %140 {strides = array<i32>} : memref<3x8x128xf32, #tpu.memory_space<vmem>>, vector<1x8x128xf32>,
    %cst_39 = arith.constant dense<0xFF800000> : vector<128xf32>
    %141 = vector.multi_reduction <maximumf>, %137, %cst_39 [0] : vector<8x128xf32> to vector<128xf32>
    %142 = vector.shape_cast %141 : vector<128xf32> to vector<1x128xf32>
    %143 = vector.broadcast %142 : vector<1x128xf32> to vector<8x128xf32>
    %144 = arith.subf %137, %143 : vector<8x128xf32>
    %145 = math.exp %144 : vector<8x128xf32>
    %cst_40 = arith.constant dense<0.000000e+00> : vector<128xf32>
    %146 = vector.multi_reduction <add>, %145, %cst_40 [0] : vector<8x128xf32> to vector<128xf32>
    %147 = vector.shape_cast %146 : vector<128xf32> to vector<1x128xf32>
    %148 = tpu.reciprocal %147 {approx = true} : vector<1x128xf32> -> vector<1x128xf32>
    %149 = vector.broadcast %148 : vector<1x128xf32> to vector<8x128xf32>
    %150 = arith.mulf %145, %149 : vector<8x128xf32>
    %151 = arith.mulf %150, %5 : vector<8x128xf32>
    %152 = arith.truncf %151 : vector<8x128xf32> to vector<8x128xbf16>
    %c0_41 = arith.constant 0 : index
    %c0_42 = arith.constant 0 : index
    %c0_43 = arith.constant 0 : index
    %153 = vector.load %arg11[%c0_41, %c0_42, %c0_43] : memref<2x16x8xbf16, #tpu.memory_space<vmem>>, vector<1x16x8xbf16>
    %154 = vector.shape_cast %153 : vector<1x16x8xbf16> to vector<16x8xbf16>
    %c0_44 = arith.constant 0 : index
    %c0_45 = arith.constant 0 : index
    %c0_46 = arith.constant 0 : index
    %155 = vector.load %arg12[%c0_44, %c0_45, %c0_46] : memref<2x16x1xf32, #tpu.memory_space<vmem>>, vector<1x16x1xf32>
    %156 = vector.shape_cast %155 : vector<1x16x1xf32> to vector<16x1xf32>
    %c0_47 = arith.constant 0 : index
    %c0_48 = arith.constant 0 : index
    %c0_49 = arith.constant 0 : index
    %c0_50 = arith.constant 0 : index
    %157 = vector.load %arg13[%c0_47, %c0_48, %c0_49, %c0_50] : memref<2x4x48x16xbf16, #tpu.memory_space<vmem>>, vector<1x4x48x16xbf16>
    %158 = vector.shape_cast %157 : vector<1x4x48x16xbf16> to vector<4x48x16xbf16>
    %c0_51 = arith.constant 0 : index
    %c0_52 = arith.constant 0 : index
    %c0_53 = arith.constant 0 : index
    %c0_54 = arith.constant 0 : index
    %159 = vector.load %arg14[%c0_51, %c0_52, %c0_53, %c0_54] : memref<2x4x16x1xf32, #tpu.memory_space<vmem>>, vector<1x4x16x1xf32>
    %160 = vector.shape_cast %159 : vector<1x4x16x1xf32> to vector<4x16x1xf32>
    %c0_55 = arith.constant 0 : index
    %c0_56 = arith.constant 0 : index
    %c0_57 = arith.constant 0 : index
    %c0_58 = arith.constant 0 : index
    %161 = vector.load %arg15[%c0_55, %c0_56, %c0_57, %c0_58] : memref<2x4x16x16xbf16, #tpu.memory_space<vmem>>, vector<1x4x16x16xbf16>
    %162 = vector.shape_cast %161 : vector<1x4x16x16xbf16> to vector<4x16x16xbf16>
    %c0_59 = arith.constant 0 : index
    %c0_60 = arith.constant 0 : index
    %c0_61 = arith.constant 0 : index
    %c0_62 = arith.constant 0 : index
    %163 = vector.load %arg16[%c0_59, %c0_60, %c0_61, %c0_62] : memref<2x4x16x1xf32, #tpu.memory_space<vmem>>, vector<1x4x16x1xf32>
    %164 = vector.shape_cast %163 : vector<1x4x16x1xf32> to vector<4x16x1xf32>
    %c0_63 = arith.constant 0 : index
    %c0_64 = arith.constant 0 : index
    %c0_65 = arith.constant 0 : index
    %165 = vector.load %arg17[%c0_63, %c0_64, %c0_65] : memref<2x8x16xbf16, #tpu.memory_space<vmem>>, vector<1x8x16xbf16>
    %166 = vector.shape_cast %165 : vector<1x8x16xbf16> to vector<8x16xbf16>
    %c0_66 = arith.constant 0 : index
    %c0_67 = arith.constant 0 : index
    %c0_68 = arith.constant 0 : index
    %167 = vector.load %arg18[%c0_66, %c0_67, %c0_68] : memref<2x8x1xf32, #tpu.memory_space<vmem>>, vector<1x8x1xf32>
    %168 = vector.shape_cast %167 : vector<1x8x1xf32> to vector<8x1xf32>
    %cst_69 = arith.constant dense<0.000000e+00> : vector<16x128xf32>
    %169 = tpu.matmul %154, %152, %cst_69 {dimension_numbers = #tpu.dot_dimension_numbers<[1], [0], [0], [1], [0, 0, 1, 1], [], []>} : vector<16x8xbf16>, vector<8x128xbf16>, vector<16x128xf32> -> vector<16x128xf32>
    %170 = vector.broadcast %156 : vector<16x1xf32> to vector<16x128xf32>
    %171 = arith.addf %169, %170 : vector<16x128xf32>
    %172 = arith.mulf %171, %12 : vector<16x128xf32>
    %173 = vector.extract_strided_slice %158 {offsets = [0, 0, 0], sizes = [1, 48, 16], strides = [1, 1, 1]} : vector<4x48x16xbf16> to vector<1x48x16xbf16>
    %174 = vector.shape_cast %173 : vector<1x48x16xbf16> to vector<48x16xbf16>
    %175 = arith.truncf %172 : vector<16x128xf32> to vector<16x128xbf16>
    %cst_70 = arith.constant dense<0.000000e+00> : vector<48x128xf32>
    %176 = tpu.matmul %174, %175, %cst_70 {dimension_numbers = #tpu.dot_dimension_numbers<[1], [0], [0], [1], [0, 0, 1, 1], [], []>} : vector<48x16xbf16>, vector<16x128xbf16>, vector<48x128xf32> -> vector<48x128xf32>
    %177 = vector.extract_strided_slice %176 {offsets = [0, 0], sizes = [16, 128], strides = [1, 1]} : vector<48x128xf32> to vector<16x128xf32>
    %c1_i32_71 = arith.constant 1 : i32
    %178 = tpu.dynamic_rotate %177 by %c1_i32_71 dim 1 : vector<16x128xf32>, i32 -> vector<16x128xf32>
    %179 = vector.extract_strided_slice %176 {offsets = [16, 0], sizes = [16, 128], strides = [1, 1]} : vector<48x128xf32> to vector<16x128xf32>
    %180 = vector.extract_strided_slice %176 {offsets = [32, 0], sizes = [16, 128], strides = [1, 1]} : vector<48x128xf32> to vector<16x128xf32>
    %c127_i32_72 = arith.constant 127 : i32
    %181 = tpu.dynamic_rotate %180 by %c127_i32_72 dim 1 : vector<16x128xf32>, i32 -> vector<16x128xf32>
    %182 = arith.addf %178, %179 : vector<16x128xf32>
    %183 = arith.addf %182, %181 : vector<16x128xf32>
    %184 = vector.extract_strided_slice %160 {offsets = [0, 0, 0], sizes = [1, 16, 1], strides = [1, 1, 1]} : vector<4x16x1xf32> to vector<1x16x1xf32>
    %185 = vector.shape_cast %184 : vector<1x16x1xf32> to vector<16x1xf32>
    %186 = vector.broadcast %185 : vector<16x1xf32> to vector<16x128xf32>
    %187 = arith.addf %183, %186 : vector<16x128xf32>
    %cst_73 = arith.constant 0.000000e+00 : f32
    %188 = vector.broadcast %cst_73 : f32 to vector<16x128xf32>
    %189 = arith.maximumf %187, %188 : vector<16x128xf32>
    %190 = vector.extract_strided_slice %162 {offsets = [0, 0, 0], sizes = [1, 16, 16], strides = [1, 1, 1]} : vector<4x16x16xbf16> to vector<1x16x16xbf16>
    %191 = vector.shape_cast %190 : vector<1x16x16xbf16> to vector<16x16xbf16>
    %192 = arith.truncf %189 : vector<16x128xf32> to vector<16x128xbf16>
    %cst_74 = arith.constant dense<0.000000e+00> : vector<16x128xf32>
    %193 = tpu.matmul %191, %192, %cst_74 {dimension_numbers = #tpu.dot_dimension_numbers<[1], [0], [0], [1], [0, 0, 1, 1], [], []>} : vector<16x16xbf16>, vector<16x128xbf16>, vector<16x128xf32> -> vector<16x128xf32>
    %194 = vector.extract_strided_slice %164 {offsets = [0, 0, 0], sizes = [1, 16, 1], strides = [1, 1, 1]} : vector<4x16x1xf32> to vector<1x16x1xf32>
    %195 = vector.shape_cast %194 : vector<1x16x1xf32> to vector<16x1xf32>
    %196 = vector.broadcast %195 : vector<16x1xf32> to vector<16x128xf32>
    %197 = arith.addf %193, %196 : vector<16x128xf32>
    %198 = arith.addf %172, %197 : vector<16x128xf32>
    %199 = arith.mulf %198, %3 : vector<16x128xf32>
    %200 = vector.extract_strided_slice %158 {offsets = [1, 0, 0], sizes = [1, 48, 16], strides = [1, 1, 1]} : vector<4x48x16xbf16> to vector<1x48x16xbf16>
    %201 = vector.shape_cast %200 : vector<1x48x16xbf16> to vector<48x16xbf16>
    %202 = arith.truncf %199 : vector<16x128xf32> to vector<16x128xbf16>
    %cst_75 = arith.constant dense<0.000000e+00> : vector<48x128xf32>
    %203 = tpu.matmul %201, %202, %cst_75 {dimension_numbers = #tpu.dot_dimension_numbers<[1], [0], [0], [1], [0, 0, 1, 1], [], []>} : vector<48x16xbf16>, vector<16x128xbf16>, vector<48x128xf32> -> vector<48x128xf32>
    %204 = vector.extract_strided_slice %203 {offsets = [0, 0], sizes = [16, 128], strides = [1, 1]} : vector<48x128xf32> to vector<16x128xf32>
    %c2_i32_76 = arith.constant 2 : i32
    %205 = tpu.dynamic_rotate %204 by %c2_i32_76 dim 1 : vector<16x128xf32>, i32 -> vector<16x128xf32>
    %206 = vector.extract_strided_slice %203 {offsets = [16, 0], sizes = [16, 128], strides = [1, 1]} : vector<48x128xf32> to vector<16x128xf32>
    %207 = vector.extract_strided_slice %203 {offsets = [32, 0], sizes = [16, 128], strides = [1, 1]} : vector<48x128xf32> to vector<16x128xf32>
    %c126_i32_77 = arith.constant 126 : i32
    %208 = tpu.dynamic_rotate %207 by %c126_i32_77 dim 1 : vector<16x128xf32>, i32 -> vector<16x128xf32>
    %209 = arith.addf %205, %206 : vector<16x128xf32>
    %210 = arith.addf %209, %208 : vector<16x128xf32>
    %211 = vector.extract_strided_slice %160 {offsets = [1, 0, 0], sizes = [1, 16, 1], strides = [1, 1, 1]} : vector<4x16x1xf32> to vector<1x16x1xf32>
    %212 = vector.shape_cast %211 : vector<1x16x1xf32> to vector<16x1xf32>
    %213 = vector.broadcast %212 : vector<16x1xf32> to vector<16x128xf32>
    %214 = arith.addf %210, %213 : vector<16x128xf32>
    %cst_78 = arith.constant 0.000000e+00 : f32
    %215 = vector.broadcast %cst_78 : f32 to vector<16x128xf32>
    %216 = arith.maximumf %214, %215 : vector<16x128xf32>
    %217 = vector.extract_strided_slice %162 {offsets = [1, 0, 0], sizes = [1, 16, 16], strides = [1, 1, 1]} : vector<4x16x16xbf16> to vector<1x16x16xbf16>
    %218 = vector.shape_cast %217 : vector<1x16x16xbf16> to vector<16x16xbf16>
    %219 = arith.truncf %216 : vector<16x128xf32> to vector<16x128xbf16>
    %cst_79 = arith.constant dense<0.000000e+00> : vector<16x128xf32>
    %220 = tpu.matmul %218, %219, %cst_79 {dimension_numbers = #tpu.dot_dimension_numbers<[1], [0], [0], [1], [0, 0, 1, 1], [], []>} : vector<16x16xbf16>, vector<16x128xbf16>, vector<16x128xf32> -> vector<16x128xf32>
    %221 = vector.extract_strided_slice %164 {offsets = [1, 0, 0], sizes = [1, 16, 1], strides = [1, 1, 1]} : vector<4x16x1xf32> to vector<1x16x1xf32>
    %222 = vector.shape_cast %221 : vector<1x16x1xf32> to vector<16x1xf32>
    %223 = vector.broadcast %222 : vector<16x1xf32> to vector<16x128xf32>
    %224 = arith.addf %220, %223 : vector<16x128xf32>
    %225 = arith.addf %199, %224 : vector<16x128xf32>
    %226 = arith.mulf %225, %3 : vector<16x128xf32>
    %227 = vector.extract_strided_slice %158 {offsets = [2, 0, 0], sizes = [1, 48, 16], strides = [1, 1, 1]} : vector<4x48x16xbf16> to vector<1x48x16xbf16>
    %228 = vector.shape_cast %227 : vector<1x48x16xbf16> to vector<48x16xbf16>
    %229 = arith.truncf %226 : vector<16x128xf32> to vector<16x128xbf16>
    %cst_80 = arith.constant dense<0.000000e+00> : vector<48x128xf32>
    %230 = tpu.matmul %228, %229, %cst_80 {dimension_numbers = #tpu.dot_dimension_numbers<[1], [0], [0], [1], [0, 0, 1, 1], [], []>} : vector<48x16xbf16>, vector<16x128xbf16>, vector<48x128xf32> -> vector<48x128xf32>
    %231 = vector.extract_strided_slice %230 {offsets = [0, 0], sizes = [16, 128], strides = [1, 1]} : vector<48x128xf32> to vector<16x128xf32>
    %c4_i32_81 = arith.constant 4 : i32
    %232 = tpu.dynamic_rotate %231 by %c4_i32_81 dim 1 : vector<16x128xf32>, i32 -> vector<16x128xf32>
    %233 = vector.extract_strided_slice %230 {offsets = [16, 0], sizes = [16, 128], strides = [1, 1]} : vector<48x128xf32> to vector<16x128xf32>
    %234 = vector.extract_strided_slice %230 {offsets = [32, 0], sizes = [16, 128], strides = [1, 1]} : vector<48x128xf32> to vector<16x128xf32>
    %c124_i32_82 = arith.constant 124 : i32
    %235 = tpu.dynamic_rotate %234 by %c124_i32_82 dim 1 : vector<16x128xf32>, i32 -> vector<16x128xf32>
    %236 = arith.addf %232, %233 : vector<16x128xf32>
    %237 = arith.addf %236, %235 : vector<16x128xf32>
    %238 = vector.extract_strided_slice %160 {offsets = [2, 0, 0], sizes = [1, 16, 1], strides = [1, 1, 1]} : vector<4x16x1xf32> to vector<1x16x1xf32>
    %239 = vector.shape_cast %238 : vector<1x16x1xf32> to vector<16x1xf32>
    %240 = vector.broadcast %239 : vector<16x1xf32> to vector<16x128xf32>
    %241 = arith.addf %237, %240 : vector<16x128xf32>
    %cst_83 = arith.constant 0.000000e+00 : f32
    %242 = vector.broadcast %cst_83 : f32 to vector<16x128xf32>
    %243 = arith.maximumf %241, %242 : vector<16x128xf32>
    %244 = vector.extract_strided_slice %162 {offsets = [2, 0, 0], sizes = [1, 16, 16], strides = [1, 1, 1]} : vector<4x16x16xbf16> to vector<1x16x16xbf16>
    %245 = vector.shape_cast %244 : vector<1x16x16xbf16> to vector<16x16xbf16>
    %246 = arith.truncf %243 : vector<16x128xf32> to vector<16x128xbf16>
    %cst_84 = arith.constant dense<0.000000e+00> : vector<16x128xf32>
    %247 = tpu.matmul %245, %246, %cst_84 {dimension_numbers = #tpu.dot_dimension_numbers<[1], [0], [0], [1], [0, 0, 1, 1], [], []>} : vector<16x16xbf16>, vector<16x128xbf16>, vector<16x128xf32> -> vector<16x128xf32>
    %248 = vector.extract_strided_slice %164 {offsets = [2, 0, 0], sizes = [1, 16, 1], strides = [1, 1, 1]} : vector<4x16x1xf32> to vector<1x16x1xf32>
    %249 = vector.shape_cast %248 : vector<1x16x1xf32> to vector<16x1xf32>
    %250 = vector.broadcast %249 : vector<16x1xf32> to vector<16x128xf32>
    %251 = arith.addf %247, %250 : vector<16x128xf32>
    %252 = arith.addf %226, %251 : vector<16x128xf32>
    %253 = arith.mulf %252, %3 : vector<16x128xf32>
    %254 = vector.extract_strided_slice %158 {offsets = [3, 0, 0], sizes = [1, 48, 16], strides = [1, 1, 1]} : vector<4x48x16xbf16> to vector<1x48x16xbf16>
    %255 = vector.shape_cast %254 : vector<1x48x16xbf16> to vector<48x16xbf16>
    %256 = arith.truncf %253 : vector<16x128xf32> to vector<16x128xbf16>
    %cst_85 = arith.constant dense<0.000000e+00> : vector<48x128xf32>
    %257 = tpu.matmul %255, %256, %cst_85 {dimension_numbers = #tpu.dot_dimension_numbers<[1], [0], [0], [1], [0, 0, 1, 1], [], []>} : vector<48x16xbf16>, vector<16x128xbf16>, vector<48x128xf32> -> vector<48x128xf32>
    %258 = vector.extract_strided_slice %257 {offsets = [0, 0], sizes = [16, 128], strides = [1, 1]} : vector<48x128xf32> to vector<16x128xf32>
    %c8_i32_86 = arith.constant 8 : i32
    %259 = tpu.dynamic_rotate %258 by %c8_i32_86 dim 1 : vector<16x128xf32>, i32 -> vector<16x128xf32>
    %260 = vector.extract_strided_slice %257 {offsets = [16, 0], sizes = [16, 128], strides = [1, 1]} : vector<48x128xf32> to vector<16x128xf32>
    %261 = vector.extract_strided_slice %257 {offsets = [32, 0], sizes = [16, 128], strides = [1, 1]} : vector<48x128xf32> to vector<16x128xf32>
    %c120_i32_87 = arith.constant 120 : i32
    %262 = tpu.dynamic_rotate %261 by %c120_i32_87 dim 1 : vector<16x128xf32>, i32 -> vector<16x128xf32>
    %263 = arith.addf %259, %260 : vector<16x128xf32>
    %264 = arith.addf %263, %262 : vector<16x128xf32>
    %265 = vector.extract_strided_slice %160 {offsets = [3, 0, 0], sizes = [1, 16, 1], strides = [1, 1, 1]} : vector<4x16x1xf32> to vector<1x16x1xf32>
    %266 = vector.shape_cast %265 : vector<1x16x1xf32> to vector<16x1xf32>
    %267 = vector.broadcast %266 : vector<16x1xf32> to vector<16x128xf32>
    %268 = arith.addf %264, %267 : vector<16x128xf32>
    %cst_88 = arith.constant 0.000000e+00 : f32
    %269 = vector.broadcast %cst_88 : f32 to vector<16x128xf32>
    %270 = arith.maximumf %268, %269 : vector<16x128xf32>
    %271 = vector.extract_strided_slice %162 {offsets = [3, 0, 0], sizes = [1, 16, 16], strides = [1, 1, 1]} : vector<4x16x16xbf16> to vector<1x16x16xbf16>
    %272 = vector.shape_cast %271 : vector<1x16x16xbf16> to vector<16x16xbf16>
    %273 = arith.truncf %270 : vector<16x128xf32> to vector<16x128xbf16>
    %cst_89 = arith.constant dense<0.000000e+00> : vector<16x128xf32>
    %274 = tpu.matmul %272, %273, %cst_89 {dimension_numbers = #tpu.dot_dimension_numbers<[1], [0], [0], [1], [0, 0, 1, 1], [], []>} : vector<16x16xbf16>, vector<16x128xbf16>, vector<16x128xf32> -> vector<16x128xf32>
    %275 = vector.extract_strided_slice %164 {offsets = [3, 0, 0], sizes = [1, 16, 1], strides = [1, 1, 1]} : vector<4x16x1xf32> to vector<1x16x1xf32>
    %276 = vector.shape_cast %275 : vector<1x16x1xf32> to vector<16x1xf32>
    %277 = vector.broadcast %276 : vector<16x1xf32> to vector<16x128xf32>
    %278 = arith.addf %274, %277 : vector<16x128xf32>
    %279 = arith.addf %253, %278 : vector<16x128xf32>
    %280 = arith.mulf %279, %3 : vector<16x128xf32>
    %281 = arith.truncf %280 : vector<16x128xf32> to vector<16x128xbf16>
    %cst_90 = arith.constant dense<0.000000e+00> : vector<8x128xf32>
    %282 = tpu.matmul %166, %281, %cst_90 {dimension_numbers = #tpu.dot_dimension_numbers<[1], [0], [0], [1], [0, 0, 1, 1], [], []>} : vector<8x16xbf16>, vector<16x128xbf16>, vector<8x128xf32> -> vector<8x128xf32>
    %283 = vector.broadcast %168 : vector<8x1xf32> to vector<8x128xf32>
    %284 = arith.addf %282, %283 : vector<8x128xf32>
    %285 = arith.mulf %284, %5 : vector<8x128xf32>
    %c1 = arith.constant 1 : index
    %c0_91 = arith.constant 0 : index
    %c0_92 = arith.constant 0 : index
    %286 = vector.load %arg19[%c1, %c0_91, %c0_92] : memref<3x8x128xf32, #tpu.memory_space<vmem>>, vector<1x8x128xf32>
    %287 = vector.shape_cast %286 : vector<1x8x128xf32> to vector<8x128xf32>
    %288 = vector.shape_cast %285 : vector<8x128xf32> to vector<1x8x128xf32>
    tpu.vector_store %arg19[%c1, %c0_91, %c0_92], %288 {strides = array<i32>} : memref<3x8x128xf32, #tpu.memory_space<vmem>>, vector<1x8x128xf32>,
    %cst_93 = arith.constant dense<0xFF800000> : vector<128xf32>
    %289 = vector.multi_reduction <maximumf>, %285, %cst_93 [0] : vector<8x128xf32> to vector<128xf32>
    %290 = vector.shape_cast %289 : vector<128xf32> to vector<1x128xf32>
    %291 = vector.broadcast %290 : vector<1x128xf32> to vector<8x128xf32>
    %292 = arith.subf %285, %291 : vector<8x128xf32>
    %293 = math.exp %292 : vector<8x128xf32>
    %cst_94 = arith.constant dense<0.000000e+00> : vector<128xf32>
    %294 = vector.multi_reduction <add>, %293, %cst_94 [0] : vector<8x128xf32> to vector<128xf32>
    %295 = vector.shape_cast %294 : vector<128xf32> to vector<1x128xf32>
    %296 = tpu.reciprocal %295 {approx = true} : vector<1x128xf32> -> vector<1x128xf32>
    %297 = vector.broadcast %296 : vector<1x128xf32> to vector<8x128xf32>
    %298 = arith.mulf %293, %297 : vector<8x128xf32>
    %299 = arith.mulf %298, %5 : vector<8x128xf32>
    %300 = arith.truncf %299 : vector<8x128xf32> to vector<8x128xbf16>
    %c1_95 = arith.constant 1 : index
    %c0_96 = arith.constant 0 : index
    %c0_97 = arith.constant 0 : index
    %301 = vector.load %arg11[%c1_95, %c0_96, %c0_97] : memref<2x16x8xbf16, #tpu.memory_space<vmem>>, vector<1x16x8xbf16>
    %302 = vector.shape_cast %301 : vector<1x16x8xbf16> to vector<16x8xbf16>
    %c1_98 = arith.constant 1 : index
    %c0_99 = arith.constant 0 : index
    %c0_100 = arith.constant 0 : index
    %303 = vector.load %arg12[%c1_98, %c0_99, %c0_100] : memref<2x16x1xf32, #tpu.memory_space<vmem>>, vector<1x16x1xf32>
    %304 = vector.shape_cast %303 : vector<1x16x1xf32> to vector<16x1xf32>
    %c1_101 = arith.constant 1 : index
    %c0_102 = arith.constant 0 : index
    %c0_103 = arith.constant 0 : index
    %c0_104 = arith.constant 0 : index
    %305 = vector.load %arg13[%c1_101, %c0_102, %c0_103, %c0_104] : memref<2x4x48x16xbf16, #tpu.memory_space<vmem>>, vector<1x4x48x16xbf16>
    %306 = vector.shape_cast %305 : vector<1x4x48x16xbf16> to vector<4x48x16xbf16>
    %c1_105 = arith.constant 1 : index
    %c0_106 = arith.constant 0 : index
    %c0_107 = arith.constant 0 : index
    %c0_108 = arith.constant 0 : index
    %307 = vector.load %arg14[%c1_105, %c0_106, %c0_107, %c0_108] : memref<2x4x16x1xf32, #tpu.memory_space<vmem>>, vector<1x4x16x1xf32>
    %308 = vector.shape_cast %307 : vector<1x4x16x1xf32> to vector<4x16x1xf32>
    %c1_109 = arith.constant 1 : index
    %c0_110 = arith.constant 0 : index
    %c0_111 = arith.constant 0 : index
    %c0_112 = arith.constant 0 : index
    %309 = vector.load %arg15[%c1_109, %c0_110, %c0_111, %c0_112] : memref<2x4x16x16xbf16, #tpu.memory_space<vmem>>, vector<1x4x16x16xbf16>
    %310 = vector.shape_cast %309 : vector<1x4x16x16xbf16> to vector<4x16x16xbf16>
    %c1_113 = arith.constant 1 : index
    %c0_114 = arith.constant 0 : index
    %c0_115 = arith.constant 0 : index
    %c0_116 = arith.constant 0 : index
    %311 = vector.load %arg16[%c1_113, %c0_114, %c0_115, %c0_116] : memref<2x4x16x1xf32, #tpu.memory_space<vmem>>, vector<1x4x16x1xf32>
    %312 = vector.shape_cast %311 : vector<1x4x16x1xf32> to vector<4x16x1xf32>
    %c1_117 = arith.constant 1 : index
    %c0_118 = arith.constant 0 : index
    %c0_119 = arith.constant 0 : index
    %313 = vector.load %arg17[%c1_117, %c0_118, %c0_119] : memref<2x8x16xbf16, #tpu.memory_space<vmem>>, vector<1x8x16xbf16>
    %314 = vector.shape_cast %313 : vector<1x8x16xbf16> to vector<8x16xbf16>
    %c1_120 = arith.constant 1 : index
    %c0_121 = arith.constant 0 : index
    %c0_122 = arith.constant 0 : index
    %315 = vector.load %arg18[%c1_120, %c0_121, %c0_122] : memref<2x8x1xf32, #tpu.memory_space<vmem>>, vector<1x8x1xf32>
    %316 = vector.shape_cast %315 : vector<1x8x1xf32> to vector<8x1xf32>
    %cst_123 = arith.constant dense<0.000000e+00> : vector<16x128xf32>
    %317 = tpu.matmul %302, %300, %cst_123 {dimension_numbers = #tpu.dot_dimension_numbers<[1], [0], [0], [1], [0, 0, 1, 1], [], []>} : vector<16x8xbf16>, vector<8x128xbf16>, vector<16x128xf32> -> vector<16x128xf32>
    %318 = vector.broadcast %304 : vector<16x1xf32> to vector<16x128xf32>
    %319 = arith.addf %317, %318 : vector<16x128xf32>
    %320 = arith.mulf %319, %12 : vector<16x128xf32>
    %321 = vector.extract_strided_slice %306 {offsets = [0, 0, 0], sizes = [1, 48, 16], strides = [1, 1, 1]} : vector<4x48x16xbf16> to vector<1x48x16xbf16>
    %322 = vector.shape_cast %321 : vector<1x48x16xbf16> to vector<48x16xbf16>
    %323 = arith.truncf %320 : vector<16x128xf32> to vector<16x128xbf16>
    %cst_124 = arith.constant dense<0.000000e+00> : vector<48x128xf32>
    %324 = tpu.matmul %322, %323, %cst_124 {dimension_numbers = #tpu.dot_dimension_numbers<[1], [0], [0], [1], [0, 0, 1, 1], [], []>} : vector<48x16xbf16>, vector<16x128xbf16>, vector<48x128xf32> -> vector<48x128xf32>
    %325 = vector.extract_strided_slice %324 {offsets = [0, 0], sizes = [16, 128], strides = [1, 1]} : vector<48x128xf32> to vector<16x128xf32>
    %c1_i32_125 = arith.constant 1 : i32
    %326 = tpu.dynamic_rotate %325 by %c1_i32_125 dim 1 : vector<16x128xf32>, i32 -> vector<16x128xf32>
    %327 = vector.extract_strided_slice %324 {offsets = [16, 0], sizes = [16, 128], strides = [1, 1]} : vector<48x128xf32> to vector<16x128xf32>
    %328 = vector.extract_strided_slice %324 {offsets = [32, 0], sizes = [16, 128], strides = [1, 1]} : vector<48x128xf32> to vector<16x128xf32>
    %c127_i32_126 = arith.constant 127 : i32
    %329 = tpu.dynamic_rotate %328 by %c127_i32_126 dim 1 : vector<16x128xf32>, i32 -> vector<16x128xf32>
    %330 = arith.addf %326, %327 : vector<16x128xf32>
    %331 = arith.addf %330, %329 : vector<16x128xf32>
    %332 = vector.extract_strided_slice %308 {offsets = [0, 0, 0], sizes = [1, 16, 1], strides = [1, 1, 1]} : vector<4x16x1xf32> to vector<1x16x1xf32>
    %333 = vector.shape_cast %332 : vector<1x16x1xf32> to vector<16x1xf32>
    %334 = vector.broadcast %333 : vector<16x1xf32> to vector<16x128xf32>
    %335 = arith.addf %331, %334 : vector<16x128xf32>
    %cst_127 = arith.constant 0.000000e+00 : f32
    %336 = vector.broadcast %cst_127 : f32 to vector<16x128xf32>
    %337 = arith.maximumf %335, %336 : vector<16x128xf32>
    %338 = vector.extract_strided_slice %310 {offsets = [0, 0, 0], sizes = [1, 16, 16], strides = [1, 1, 1]} : vector<4x16x16xbf16> to vector<1x16x16xbf16>
    %339 = vector.shape_cast %338 : vector<1x16x16xbf16> to vector<16x16xbf16>
    %340 = arith.truncf %337 : vector<16x128xf32> to vector<16x128xbf16>
    %cst_128 = arith.constant dense<0.000000e+00> : vector<16x128xf32>
    %341 = tpu.matmul %339, %340, %cst_128 {dimension_numbers = #tpu.dot_dimension_numbers<[1], [0], [0], [1], [0, 0, 1, 1], [], []>} : vector<16x16xbf16>, vector<16x128xbf16>, vector<16x128xf32> -> vector<16x128xf32>
    %342 = vector.extract_strided_slice %312 {offsets = [0, 0, 0], sizes = [1, 16, 1], strides = [1, 1, 1]} : vector<4x16x1xf32> to vector<1x16x1xf32>
    %343 = vector.shape_cast %342 : vector<1x16x1xf32> to vector<16x1xf32>
    %344 = vector.broadcast %343 : vector<16x1xf32> to vector<16x128xf32>
    %345 = arith.addf %341, %344 : vector<16x128xf32>
    %346 = arith.addf %320, %345 : vector<16x128xf32>
    %347 = arith.mulf %346, %3 : vector<16x128xf32>
    %348 = vector.extract_strided_slice %306 {offsets = [1, 0, 0], sizes = [1, 48, 16], strides = [1, 1, 1]} : vector<4x48x16xbf16> to vector<1x48x16xbf16>
    %349 = vector.shape_cast %348 : vector<1x48x16xbf16> to vector<48x16xbf16>
    %350 = arith.truncf %347 : vector<16x128xf32> to vector<16x128xbf16>
    %cst_129 = arith.constant dense<0.000000e+00> : vector<48x128xf32>
    %351 = tpu.matmul %349, %350, %cst_129 {dimension_numbers = #tpu.dot_dimension_numbers<[1], [0], [0], [1], [0, 0, 1, 1], [], []>} : vector<48x16xbf16>, vector<16x128xbf16>, vector<48x128xf32> -> vector<48x128xf32>
    %352 = vector.extract_strided_slice %351 {offsets = [0, 0], sizes = [16, 128], strides = [1, 1]} : vector<48x128xf32> to vector<16x128xf32>
    %c2_i32_130 = arith.constant 2 : i32
    %353 = tpu.dynamic_rotate %352 by %c2_i32_130 dim 1 : vector<16x128xf32>, i32 -> vector<16x128xf32>
    %354 = vector.extract_strided_slice %351 {offsets = [16, 0], sizes = [16, 128], strides = [1, 1]} : vector<48x128xf32> to vector<16x128xf32>
    %355 = vector.extract_strided_slice %351 {offsets = [32, 0], sizes = [16, 128], strides = [1, 1]} : vector<48x128xf32> to vector<16x128xf32>
    %c126_i32_131 = arith.constant 126 : i32
    %356 = tpu.dynamic_rotate %355 by %c126_i32_131 dim 1 : vector<16x128xf32>, i32 -> vector<16x128xf32>
    %357 = arith.addf %353, %354 : vector<16x128xf32>
    %358 = arith.addf %357, %356 : vector<16x128xf32>
    %359 = vector.extract_strided_slice %308 {offsets = [1, 0, 0], sizes = [1, 16, 1], strides = [1, 1, 1]} : vector<4x16x1xf32> to vector<1x16x1xf32>
    %360 = vector.shape_cast %359 : vector<1x16x1xf32> to vector<16x1xf32>
    %361 = vector.broadcast %360 : vector<16x1xf32> to vector<16x128xf32>
    %362 = arith.addf %358, %361 : vector<16x128xf32>
    %cst_132 = arith.constant 0.000000e+00 : f32
    %363 = vector.broadcast %cst_132 : f32 to vector<16x128xf32>
    %364 = arith.maximumf %362, %363 : vector<16x128xf32>
    %365 = vector.extract_strided_slice %310 {offsets = [1, 0, 0], sizes = [1, 16, 16], strides = [1, 1, 1]} : vector<4x16x16xbf16> to vector<1x16x16xbf16>
    %366 = vector.shape_cast %365 : vector<1x16x16xbf16> to vector<16x16xbf16>
    %367 = arith.truncf %364 : vector<16x128xf32> to vector<16x128xbf16>
    %cst_133 = arith.constant dense<0.000000e+00> : vector<16x128xf32>
    %368 = tpu.matmul %366, %367, %cst_133 {dimension_numbers = #tpu.dot_dimension_numbers<[1], [0], [0], [1], [0, 0, 1, 1], [], []>} : vector<16x16xbf16>, vector<16x128xbf16>, vector<16x128xf32> -> vector<16x128xf32>
    %369 = vector.extract_strided_slice %312 {offsets = [1, 0, 0], sizes = [1, 16, 1], strides = [1, 1, 1]} : vector<4x16x1xf32> to vector<1x16x1xf32>
    %370 = vector.shape_cast %369 : vector<1x16x1xf32> to vector<16x1xf32>
    %371 = vector.broadcast %370 : vector<16x1xf32> to vector<16x128xf32>
    %372 = arith.addf %368, %371 : vector<16x128xf32>
    %373 = arith.addf %347, %372 : vector<16x128xf32>
    %374 = arith.mulf %373, %3 : vector<16x128xf32>
    %375 = vector.extract_strided_slice %306 {offsets = [2, 0, 0], sizes = [1, 48, 16], strides = [1, 1, 1]} : vector<4x48x16xbf16> to vector<1x48x16xbf16>
    %376 = vector.shape_cast %375 : vector<1x48x16xbf16> to vector<48x16xbf16>
    %377 = arith.truncf %374 : vector<16x128xf32> to vector<16x128xbf16>
    %cst_134 = arith.constant dense<0.000000e+00> : vector<48x128xf32>
    %378 = tpu.matmul %376, %377, %cst_134 {dimension_numbers = #tpu.dot_dimension_numbers<[1], [0], [0], [1], [0, 0, 1, 1], [], []>} : vector<48x16xbf16>, vector<16x128xbf16>, vector<48x128xf32> -> vector<48x128xf32>
    %379 = vector.extract_strided_slice %378 {offsets = [0, 0], sizes = [16, 128], strides = [1, 1]} : vector<48x128xf32> to vector<16x128xf32>
    %c4_i32_135 = arith.constant 4 : i32
    %380 = tpu.dynamic_rotate %379 by %c4_i32_135 dim 1 : vector<16x128xf32>, i32 -> vector<16x128xf32>
    %381 = vector.extract_strided_slice %378 {offsets = [16, 0], sizes = [16, 128], strides = [1, 1]} : vector<48x128xf32> to vector<16x128xf32>
    %382 = vector.extract_strided_slice %378 {offsets = [32, 0], sizes = [16, 128], strides = [1, 1]} : vector<48x128xf32> to vector<16x128xf32>
    %c124_i32_136 = arith.constant 124 : i32
    %383 = tpu.dynamic_rotate %382 by %c124_i32_136 dim 1 : vector<16x128xf32>, i32 -> vector<16x128xf32>
    %384 = arith.addf %380, %381 : vector<16x128xf32>
    %385 = arith.addf %384, %383 : vector<16x128xf32>
    %386 = vector.extract_strided_slice %308 {offsets = [2, 0, 0], sizes = [1, 16, 1], strides = [1, 1, 1]} : vector<4x16x1xf32> to vector<1x16x1xf32>
    %387 = vector.shape_cast %386 : vector<1x16x1xf32> to vector<16x1xf32>
    %388 = vector.broadcast %387 : vector<16x1xf32> to vector<16x128xf32>
    %389 = arith.addf %385, %388 : vector<16x128xf32>
    %cst_137 = arith.constant 0.000000e+00 : f32
    %390 = vector.broadcast %cst_137 : f32 to vector<16x128xf32>
    %391 = arith.maximumf %389, %390 : vector<16x128xf32>
    %392 = vector.extract_strided_slice %310 {offsets = [2, 0, 0], sizes = [1, 16, 16], strides = [1, 1, 1]} : vector<4x16x16xbf16> to vector<1x16x16xbf16>
    %393 = vector.shape_cast %392 : vector<1x16x16xbf16> to vector<16x16xbf16>
    %394 = arith.truncf %391 : vector<16x128xf32> to vector<16x128xbf16>
    %cst_138 = arith.constant dense<0.000000e+00> : vector<16x128xf32>
    %395 = tpu.matmul %393, %394, %cst_138 {dimension_numbers = #tpu.dot_dimension_numbers<[1], [0], [0], [1], [0, 0, 1, 1], [], []>} : vector<16x16xbf16>, vector<16x128xbf16>, vector<16x128xf32> -> vector<16x128xf32>
    %396 = vector.extract_strided_slice %312 {offsets = [2, 0, 0], sizes = [1, 16, 1], strides = [1, 1, 1]} : vector<4x16x1xf32> to vector<1x16x1xf32>
    %397 = vector.shape_cast %396 : vector<1x16x1xf32> to vector<16x1xf32>
    %398 = vector.broadcast %397 : vector<16x1xf32> to vector<16x128xf32>
    %399 = arith.addf %395, %398 : vector<16x128xf32>
    %400 = arith.addf %374, %399 : vector<16x128xf32>
    %401 = arith.mulf %400, %3 : vector<16x128xf32>
    %402 = vector.extract_strided_slice %306 {offsets = [3, 0, 0], sizes = [1, 48, 16], strides = [1, 1, 1]} : vector<4x48x16xbf16> to vector<1x48x16xbf16>
    %403 = vector.shape_cast %402 : vector<1x48x16xbf16> to vector<48x16xbf16>
    %404 = arith.truncf %401 : vector<16x128xf32> to vector<16x128xbf16>
    %cst_139 = arith.constant dense<0.000000e+00> : vector<48x128xf32>
    %405 = tpu.matmul %403, %404, %cst_139 {dimension_numbers = #tpu.dot_dimension_numbers<[1], [0], [0], [1], [0, 0, 1, 1], [], []>} : vector<48x16xbf16>, vector<16x128xbf16>, vector<48x128xf32> -> vector<48x128xf32>
    %406 = vector.extract_strided_slice %405 {offsets = [0, 0], sizes = [16, 128], strides = [1, 1]} : vector<48x128xf32> to vector<16x128xf32>
    %c8_i32_140 = arith.constant 8 : i32
    %407 = tpu.dynamic_rotate %406 by %c8_i32_140 dim 1 : vector<16x128xf32>, i32 -> vector<16x128xf32>
    %408 = vector.extract_strided_slice %405 {offsets = [16, 0], sizes = [16, 128], strides = [1, 1]} : vector<48x128xf32> to vector<16x128xf32>
    %409 = vector.extract_strided_slice %405 {offsets = [32, 0], sizes = [16, 128], strides = [1, 1]} : vector<48x128xf32> to vector<16x128xf32>
    %c120_i32_141 = arith.constant 120 : i32
    %410 = tpu.dynamic_rotate %409 by %c120_i32_141 dim 1 : vector<16x128xf32>, i32 -> vector<16x128xf32>
    %411 = arith.addf %407, %408 : vector<16x128xf32>
    %412 = arith.addf %411, %410 : vector<16x128xf32>
    %413 = vector.extract_strided_slice %308 {offsets = [3, 0, 0], sizes = [1, 16, 1], strides = [1, 1, 1]} : vector<4x16x1xf32> to vector<1x16x1xf32>
    %414 = vector.shape_cast %413 : vector<1x16x1xf32> to vector<16x1xf32>
    %415 = vector.broadcast %414 : vector<16x1xf32> to vector<16x128xf32>
    %416 = arith.addf %412, %415 : vector<16x128xf32>
    %cst_142 = arith.constant 0.000000e+00 : f32
    %417 = vector.broadcast %cst_142 : f32 to vector<16x128xf32>
    %418 = arith.maximumf %416, %417 : vector<16x128xf32>
    %419 = vector.extract_strided_slice %310 {offsets = [3, 0, 0], sizes = [1, 16, 16], strides = [1, 1, 1]} : vector<4x16x16xbf16> to vector<1x16x16xbf16>
    %420 = vector.shape_cast %419 : vector<1x16x16xbf16> to vector<16x16xbf16>
    %421 = arith.truncf %418 : vector<16x128xf32> to vector<16x128xbf16>
    %cst_143 = arith.constant dense<0.000000e+00> : vector<16x128xf32>
    %422 = tpu.matmul %420, %421, %cst_143 {dimension_numbers = #tpu.dot_dimension_numbers<[1], [0], [0], [1], [0, 0, 1, 1], [], []>} : vector<16x16xbf16>, vector<16x128xbf16>, vector<16x128xf32> -> vector<16x128xf32>
    %423 = vector.extract_strided_slice %312 {offsets = [3, 0, 0], sizes = [1, 16, 1], strides = [1, 1, 1]} : vector<4x16x1xf32> to vector<1x16x1xf32>
    %424 = vector.shape_cast %423 : vector<1x16x1xf32> to vector<16x1xf32>
    %425 = vector.broadcast %424 : vector<16x1xf32> to vector<16x128xf32>
    %426 = arith.addf %422, %425 : vector<16x128xf32>
    %427 = arith.addf %401, %426 : vector<16x128xf32>
    %428 = arith.mulf %427, %3 : vector<16x128xf32>
    %429 = arith.truncf %428 : vector<16x128xf32> to vector<16x128xbf16>
    %cst_144 = arith.constant dense<0.000000e+00> : vector<8x128xf32>
    %430 = tpu.matmul %314, %429, %cst_144 {dimension_numbers = #tpu.dot_dimension_numbers<[1], [0], [0], [1], [0, 0, 1, 1], [], []>} : vector<8x16xbf16>, vector<16x128xbf16>, vector<8x128xf32> -> vector<8x128xf32>
    %431 = vector.broadcast %316 : vector<8x1xf32> to vector<8x128xf32>
    %432 = arith.addf %430, %431 : vector<8x128xf32>
    %433 = arith.mulf %432, %5 : vector<8x128xf32>
    %c2 = arith.constant 2 : index
    %c0_145 = arith.constant 0 : index
    %c0_146 = arith.constant 0 : index
    %434 = vector.load %arg19[%c2, %c0_145, %c0_146] : memref<3x8x128xf32, #tpu.memory_space<vmem>>, vector<1x8x128xf32>
    %435 = vector.shape_cast %434 : vector<1x8x128xf32> to vector<8x128xf32>
    %436 = vector.shape_cast %433 : vector<8x128xf32> to vector<1x8x128xf32>
    tpu.vector_store %arg19[%c2, %c0_145, %c0_146], %436 {strides = array<i32>} : memref<3x8x128xf32, #tpu.memory_space<vmem>>, vector<1x8x128xf32>,
    return
  }
  func.func @transform_0(%arg0: i32) -> (i32, i32) {
    %c0_i32 = arith.constant 0 : i32
    %c0_i32_0 = arith.constant 0 : i32
    return %c0_i32, %arg0 : i32, i32
  }
  func.func @transform_1(%arg0: i32) -> (i32, i32) {
    %c0_i32 = arith.constant 0 : i32
    %c0_i32_0 = arith.constant 0 : i32
    return %c0_i32, %arg0 : i32, i32
  }
  func.func @transform_2(%arg0: i32) -> (i32, i32) {
    %c0_i32 = arith.constant 0 : i32
    %c0_i32_0 = arith.constant 0 : i32
    %c0_i32_1 = arith.constant 0 : i32
    return %c0_i32, %c0_i32_0 : i32, i32
  }
  func.func @transform_3(%arg0: i32) -> (i32, i32) {
    %c0_i32 = arith.constant 0 : i32
    %c0_i32_0 = arith.constant 0 : i32
    %c0_i32_1 = arith.constant 0 : i32
    return %c0_i32, %c0_i32_0 : i32, i32
  }
  func.func @transform_4(%arg0: i32) -> (i32, i32, i32) {
    %c0_i32 = arith.constant 0 : i32
    %c0_i32_0 = arith.constant 0 : i32
    %c0_i32_1 = arith.constant 0 : i32
    %c0_i32_2 = arith.constant 0 : i32
    return %c0_i32, %c0_i32_0, %c0_i32_1 : i32, i32, i32
  }
  func.func @transform_5(%arg0: i32) -> (i32, i32, i32) {
    %c0_i32 = arith.constant 0 : i32
    %c0_i32_0 = arith.constant 0 : i32
    %c0_i32_1 = arith.constant 0 : i32
    %c0_i32_2 = arith.constant 0 : i32
    return %c0_i32, %c0_i32_0, %c0_i32_1 : i32, i32, i32
  }
  func.func @transform_6(%arg0: i32) -> (i32, i32, i32) {
    %c0_i32 = arith.constant 0 : i32
    %c0_i32_0 = arith.constant 0 : i32
    %c0_i32_1 = arith.constant 0 : i32
    %c0_i32_2 = arith.constant 0 : i32
    return %c0_i32, %c0_i32_0, %c0_i32_1 : i32, i32, i32
  }
  func.func @transform_7(%arg0: i32) -> (i32, i32, i32) {
    %c0_i32 = arith.constant 0 : i32
    %c0_i32_0 = arith.constant 0 : i32
    %c0_i32_1 = arith.constant 0 : i32
    %c0_i32_2 = arith.constant 0 : i32
    return %c0_i32, %c0_i32_0, %c0_i32_1 : i32, i32, i32
  }
  func.func @transform_8(%arg0: i32) -> (i32, i32) {
    %c0_i32 = arith.constant 0 : i32
    %c0_i32_0 = arith.constant 0 : i32
    %c0_i32_1 = arith.constant 0 : i32
    return %c0_i32, %c0_i32_0 : i32, i32
  }
  func.func @transform_9(%arg0: i32) -> (i32, i32) {
    %c0_i32 = arith.constant 0 : i32
    %c0_i32_0 = arith.constant 0 : i32
    %c0_i32_1 = arith.constant 0 : i32
    return %c0_i32, %c0_i32_0 : i32, i32
  }
  func.func @transform_10(%arg0: i32) -> (i32, i32, i32) {
    %c0_i32 = arith.constant 0 : i32
    %c0_i32_0 = arith.constant 0 : i32
    %c0_i32_1 = arith.constant 0 : i32
    %c0_i32_2 = arith.constant 0 : i32
    return %c0_i32, %c0_i32_0, %c0_i32_1 : i32, i32, i32
  }
  func.func @transform_11(%arg0: i32) -> (i32, i32, i32) {
    %c0_i32 = arith.constant 0 : i32
    %c0_i32_0 = arith.constant 0 : i32
    %c0_i32_1 = arith.constant 0 : i32
    %c0_i32_2 = arith.constant 0 : i32
    return %c0_i32, %c0_i32_0, %c0_i32_1 : i32, i32, i32
  }
  func.func @transform_12(%arg0: i32) -> (i32, i32, i32, i32) {
    %c0_i32 = arith.constant 0 : i32
    %c0_i32_0 = arith.constant 0 : i32
    %c0_i32_1 = arith.constant 0 : i32
    %c0_i32_2 = arith.constant 0 : i32
    %c0_i32_3 = arith.constant 0 : i32
    return %c0_i32, %c0_i32_0, %c0_i32_1, %c0_i32_2 : i32, i32, i32, i32
  }
  func.func @transform_13(%arg0: i32) -> (i32, i32, i32, i32) {
    %c0_i32 = arith.constant 0 : i32
    %c0_i32_0 = arith.constant 0 : i32
    %c0_i32_1 = arith.constant 0 : i32
    %c0_i32_2 = arith.constant 0 : i32
    %c0_i32_3 = arith.constant 0 : i32
    return %c0_i32, %c0_i32_0, %c0_i32_1, %c0_i32_2 : i32, i32, i32, i32
  }
  func.func @transform_14(%arg0: i32) -> (i32, i32, i32, i32) {
    %c0_i32 = arith.constant 0 : i32
    %c0_i32_0 = arith.constant 0 : i32
    %c0_i32_1 = arith.constant 0 : i32
    %c0_i32_2 = arith.constant 0 : i32
    %c0_i32_3 = arith.constant 0 : i32
    return %c0_i32, %c0_i32_0, %c0_i32_1, %c0_i32_2 : i32, i32, i32, i32
  }
  func.func @transform_15(%arg0: i32) -> (i32, i32, i32, i32) {
    %c0_i32 = arith.constant 0 : i32
    %c0_i32_0 = arith.constant 0 : i32
    %c0_i32_1 = arith.constant 0 : i32
    %c0_i32_2 = arith.constant 0 : i32
    %c0_i32_3 = arith.constant 0 : i32
    return %c0_i32, %c0_i32_0, %c0_i32_1, %c0_i32_2 : i32, i32, i32, i32
  }
  func.func @transform_16(%arg0: i32) -> (i32, i32, i32) {
    %c0_i32 = arith.constant 0 : i32
    %c0_i32_0 = arith.constant 0 : i32
    %c0_i32_1 = arith.constant 0 : i32
    %c0_i32_2 = arith.constant 0 : i32
    return %c0_i32, %c0_i32_0, %c0_i32_1 : i32, i32, i32
  }
  func.func @transform_17(%arg0: i32) -> (i32, i32, i32) {
    %c0_i32 = arith.constant 0 : i32
    %c0_i32_0 = arith.constant 0 : i32
    %c0_i32_1 = arith.constant 0 : i32
    %c0_i32_2 = arith.constant 0 : i32
    return %c0_i32, %c0_i32_0, %c0_i32_1 : i32, i32, i32
  }
  func.func @transform_18(%arg0: i32) -> (i32, i32, i32) {
    %c0_i32 = arith.constant 0 : i32
    %c0_i32_0 = arith.constant 0 : i32
    %c0_i32_1 = arith.constant 0 : i32
    return %c0_i32, %c0_i32_0, %arg0 : i32, i32, i32
  }
}

</mosaic_0001>

<llo_original>
// kernel: multi_stage_forward.1
$region0: #{multi_stage_forward.1}
  #allocation0 [shape = 'u32[]', space=smem, size = 0x4, offset = 0x4, fixed_abs, tag = 'smem constant byte address 0x4 - core index']
  #allocation1 [shape = 'u32[72,128]{1,0:T(1,128)}', space=vmem, size = 0x9000, scoped, tag = 'internal scratch']
  %s0 = inlined_call_operand.vmem [shape: bf16[8,384], index: 0, kind: input, shape index: {}]
  %s1 = inlined_call_operand.vmem [shape: f32[1,384], index: 1, kind: input, shape index: {}]
  %s2 = inlined_call_operand.vmem [shape: bf16[16,8], index: 2, kind: input, shape index: {}]
  %s3 = inlined_call_operand.vmem [shape: f32[16,1], index: 3, kind: input, shape index: {}]
  %s4 = inlined_call_operand.vmem [shape: bf16[4,48,16], index: 4, kind: input, shape index: {}]
  %s5 = inlined_call_operand.vmem [shape: f32[4,16,1], index: 5, kind: input, shape index: {}]
  %s6 = inlined_call_operand.vmem [shape: bf16[4,16,16], index: 6, kind: input, shape index: {}]
  %s7 = inlined_call_operand.vmem [shape: f32[4,16,1], index: 7, kind: input, shape index: {}]
  %s8 = inlined_call_operand.vmem [shape: bf16[8,16], index: 8, kind: input, shape index: {}]
  %s9 = inlined_call_operand.vmem [shape: f32[8,1], index: 9, kind: input, shape index: {}]
  %s10 = inlined_call_operand.vmem [shape: bf16[2,16,8], index: 10, kind: input, shape index: {}]
  %s11 = inlined_call_operand.vmem [shape: f32[2,16,1], index: 11, kind: input, shape index: {}]
  %s12 = inlined_call_operand.vmem [shape: bf16[2,4,48,16], index: 12, kind: input, shape index: {}]
  %s13 = inlined_call_operand.vmem [shape: f32[2,4,16,1], index: 13, kind: input, shape index: {}]
  %s14 = inlined_call_operand.vmem [shape: bf16[2,4,16,16], index: 14, kind: input, shape index: {}]
  %s15 = inlined_call_operand.vmem [shape: f32[2,4,16,1], index: 15, kind: input, shape index: {}]
  %s16 = inlined_call_operand.vmem [shape: bf16[2,8,16], index: 16, kind: input, shape index: {}]
  %s17 = inlined_call_operand.vmem [shape: f32[2,8,1], index: 17, kind: input, shape index: {}]
  %s18 = inlined_call_operand.vmem [shape: f32[3,8,384], index: 18, kind: output, shape index: {}]
  %s19 = sld [smem:[#allocation0]]
  $region139: #{multi_stage_forward.1} parent=0
    _
  %s21 = ssub.s32 1, %s19
  %s22 = scalar_select 0, %s21, %s19
  $region1: #{multi_stage_forward.1} parent=0
    #allocation2 [shape = 'u8[24576]{0}', space=vmem, size = 0x6000, scoped, tag = 'output window, operand 0']
    loop: start=0, step=1, limit=5
    $region2: #{multi_stage_forward.1} parent=1 // loop_pre_header
      _
    $region3: #{multi_stage_forward.1} parent=1 // loop_header
      %s24 = sphi 0, %s28
      %p25 = scmp.ge.s32.totalorder %s24, 5
      %s34 = sphi 0, %s36
      %s37 = sphi 0, %s34
      %s38 = sphi 0, %s37
      %s54 = sphi 0, %s38
      %s60 = sphi 0, %s62
      %s63 = sphi 0, %s60
      %s64 = sphi 0, %s63
      %s80 = sphi 0, %s64
      %s84 = sphi 0, %s84
      %s86 = sphi 0, %s84
      %s87 = sphi 0, %s86
      %s101 = sphi 0, %s87
      %s105 = sphi 0, %s105
      %s107 = sphi 0, %s105
      %s108 = sphi 0, %s107
      %s122 = sphi 0, %s108
      %s126 = sphi 0, %s126
      %s128 = sphi 0, %s126
      %s129 = sphi 0, %s128
      %s143 = sphi 0, %s129
      %s147 = sphi 0, %s147
      %s149 = sphi 0, %s147
      %s150 = sphi 0, %s149
      %s164 = sphi 0, %s150
      %s168 = sphi 0, %s168
      %s170 = sphi 0, %s168
      %s171 = sphi 0, %s170
      %s185 = sphi 0, %s171
      %s189 = sphi 0, %s189
      %s191 = sphi 0, %s189
      %s192 = sphi 0, %s191
      %s206 = sphi 0, %s192
      %s210 = sphi 0, %s210
      %s212 = sphi 0, %s210
      %s213 = sphi 0, %s212
      %s227 = sphi 0, %s213
      %s231 = sphi 0, %s231
      %s233 = sphi 0, %s231
      %s234 = sphi 0, %s233
      %s248 = sphi 0, %s234
      %s252 = sphi 0, %s252
      %s254 = sphi 0, %s252
      %s255 = sphi 0, %s254
      %s269 = sphi 0, %s255
      %s273 = sphi 0, %s273
      %s275 = sphi 0, %s273
      %s276 = sphi 0, %s275
      %s290 = sphi 0, %s276
      %s294 = sphi 0, %s294
      %s296 = sphi 0, %s294
      %s297 = sphi 0, %s296
      %s311 = sphi 0, %s297
      %s315 = sphi 0, %s315
      %s317 = sphi 0, %s315
      %s318 = sphi 0, %s317
      %s332 = sphi 0, %s318
      %s336 = sphi 0, %s336
      %s338 = sphi 0, %s336
      %s339 = sphi 0, %s338
      %s353 = sphi 0, %s339
      %s357 = sphi 0, %s357
      %s359 = sphi 0, %s357
      %s360 = sphi 0, %s359
      %s374 = sphi 0, %s360
      %s378 = sphi 0, %s378
      %s380 = sphi 0, %s378
      %s381 = sphi 0, %s380
      %s395 = sphi 0, %s381
      %s399 = sphi 0, %s399
      %s401 = sphi 0, %s399
      %s402 = sphi 0, %s401
      %s416 = sphi 0, %s402
      %s422 = sphi 0, %s424
      %s425 = sphi 0, %s422
      %s426 = sphi 0, %s425
      %s442 = sphi 0, %s426
    $region4: #{multi_stage_forward.1} parent=1 // loop_header_branch
      %27 = sbr.rel (%p25) target = $region8
    $region5: #{multi_stage_forward.1} parent=1 // loop_body
      %s29 = ssub.s32 %s24, 1
      %s30 = ssub.s32 %s24, 2
      %s31 = sadd.s32 %s24, 1
      %s32 = ssub.s32 %s24, %s31
      %p33 = scmp.eq.s32.totalorder %s32, 0
      %s35 = sadd.s32 %s34, 1
      %s36 = scalar_select %p33, %s34, %s35
      %p39 = pneg %p33
      %p40 = scmp.eq.s32.totalorder %s24, 2
      %p41 = por %p39, %p40
      %p42 = scmp.ne.s32.totalorder %s34, %s37
      %p43 = scmp.eq.s32.totalorder %s24, 0
      %p44 = por %p42, %p43
      %p45 = scmp.ne.s32.totalorder %s34, %s37
      %p46 = scmp.eq.s32.totalorder %s29, 2
      %p47 = por %p45, %p46
      %p48 = scmp.ne.s32.totalorder %s37, %s38
      %p49 = scmp.eq.s32.totalorder %s29, 0
      %p50 = por %p48, %p49
      %p51 = scmp.ne.s32.totalorder %s37, %s38
      %p52 = scmp.eq.s32.totalorder %s30, 2
      %p53 = por %p51, %p52
      %p55 = scmp.ne.s32.totalorder %s38, %s54
      %p56 = scmp.eq.s32.totalorder %s30, 0
      %p57 = por %p55, %p56
      %s58 = ssub.s32 %s24, %s31
      %p59 = scmp.eq.s32.totalorder %s58, 0
      %s61 = sadd.s32 %s60, 1
      %s62 = scalar_select %p59, %s60, %s61
      %p65 = pneg %p59
      %p66 = scmp.eq.s32.totalorder %s24, 2
      %p67 = por %p65, %p66
      %p68 = scmp.ne.s32.totalorder %s60, %s63
      %p69 = scmp.eq.s32.totalorder %s24, 0
      %p70 = por %p68, %p69
      %p71 = scmp.ne.s32.totalorder %s60, %s63
      %p72 = scmp.eq.s32.totalorder %s29, 2
      %p73 = por %p71, %p72
      %p74 = scmp.ne.s32.totalorder %s63, %s64
      %p75 = scmp.eq.s32.totalorder %s29, 0
      %p76 = por %p74, %p75
      %p77 = scmp.ne.s32.totalorder %s63, %s64
      %p78 = scmp.eq.s32.totalorder %s30, 2
      %p79 = por %p77, %p78
      %p81 = scmp.ne.s32.totalorder %s64, %s80
      %p82 = scmp.eq.s32.totalorder %s30, 0
      %p83 = por %p81, %p82
      %s85 = sadd.s32 %s84, 1
      %p88 = scmp.eq.s32.totalorder %s24, 2
      %p89 = scmp.ne.s32.totalorder %s84, %s86
      %p90 = scmp.eq.s32.totalorder %s24, 0
      %p91 = por %p89, %p90
      %p92 = scmp.ne.s32.totalorder %s84, %s86
      %p93 = scmp.eq.s32.totalorder %s29, 2
      %p94 = por %p92, %p93
      %p95 = scmp.ne.s32.totalorder %s86, %s87
      %p96 = scmp.eq.s32.totalorder %s29, 0
      %p97 = por %p95, %p96
      %p98 = scmp.ne.s32.totalorder %s86, %s87
      %p99 = scmp.eq.s32.totalorder %s30, 2
      %p100 = por %p98, %p99
      %p102 = scmp.ne.s32.totalorder %s87, %s101
      %p103 = scmp.eq.s32.totalorder %s30, 0
      %p104 = por %p102, %p103
      %s106 = sadd.s32 %s105, 1
      %p109 = scmp.eq.s32.totalorder %s24, 2
      %p110 = scmp.ne.s32.totalorder %s105, %s107
      %p111 = scmp.eq.s32.totalorder %s24, 0
      %p112 = por %p110, %p111
      %p113 = scmp.ne.s32.totalorder %s105, %s107
      %p114 = scmp.eq.s32.totalorder %s29, 2
      %p115 = por %p113, %p114
      %p116 = scmp.ne.s32.totalorder %s107, %s108
      %p117 = scmp.eq.s32.totalorder %s29, 0
      %p118 = por %p116, %p117
      %p119 = scmp.ne.s32.totalorder %s107, %s108
      %p120 = scmp.eq.s32.totalorder %s30, 2
      %p121 = por %p119, %p120
      %p123 = scmp.ne.s32.totalorder %s108, %s122
      %p124 = scmp.eq.s32.totalorder %s30, 0
      %p125 = por %p123, %p124
      %s127 = sadd.s32 %s126, 1
      %p130 = scmp.eq.s32.totalorder %s24, 2
      %p131 = scmp.ne.s32.totalorder %s126, %s128
      %p132 = scmp.eq.s32.totalorder %s24, 0
      %p133 = por %p131, %p132
      %p134 = scmp.ne.s32.totalorder %s126, %s128
      %p135 = scmp.eq.s32.totalorder %s29, 2
      %p136 = por %p134, %p135
      %p137 = scmp.ne.s32.totalorder %s128, %s129
      %p138 = scmp.eq.s32.totalorder %s29, 0
      %p139 = por %p137, %p138
      %p140 = scmp.ne.s32.totalorder %s128, %s129
      %p141 = scmp.eq.s32.totalorder %s30, 2
      %p142 = por %p140, %p141
      %p144 = scmp.ne.s32.totalorder %s129, %s143
      %p145 = scmp.eq.s32.totalorder %s30, 0
      %p146 = por %p144, %p145
      %s148 = sadd.s32 %s147, 1
      %p151 = scmp.eq.s32.totalorder %s24, 2
      %p152 = scmp.ne.s32.totalorder %s147, %s149
      %p153 = scmp.eq.s32.totalorder %s24, 0
      %p154 = por %p152, %p153
      %p155 = scmp.ne.s32.totalorder %s147, %s149
      %p156 = scmp.eq.s32.totalorder %s29, 2
      %p157 = por %p155, %p156
      %p158 = scmp.ne.s32.totalorder %s149, %s150
      %p159 = scmp.eq.s32.totalorder %s29, 0
      %p160 = por %p158, %p159
      %p161 = scmp.ne.s32.totalorder %s149, %s150
      %p162 = scmp.eq.s32.totalorder %s30, 2
      %p163 = por %p161, %p162
      %p165 = scmp.ne.s32.totalorder %s150, %s164
      %p166 = scmp.eq.s32.totalorder %s30, 0
      %p167 = por %p165, %p166
      %s169 = sadd.s32 %s168, 1
      %p172 = scmp.eq.s32.totalorder %s24, 2
      %p173 = scmp.ne.s32.totalorder %s168, %s170
      %p174 = scmp.eq.s32.totalorder %s24, 0
      %p175 = por %p173, %p174
      %p176 = scmp.ne.s32.totalorder %s168, %s170
      %p177 = scmp.eq.s32.totalorder %s29, 2
      %p178 = por %p176, %p177
      %p179 = scmp.ne.s32.totalorder %s170, %s171
      %p180 = scmp.eq.s32.totalorder %s29, 0
      %p181 = por %p179, %p180
      %p182 = scmp.ne.s32.totalorder %s170, %s171
      %p183 = scmp.eq.s32.totalorder %s30, 2
      %p184 = por %p182, %p183
      %p186 = scmp.ne.s32.totalorder %s171, %s185
      %p187 = scmp.eq.s32.totalorder %s30, 0
      %p188 = por %p186, %p187
      %s190 = sadd.s32 %s189, 1
      %p193 = scmp.eq.s32.totalorder %s24, 2
      %p194 = scmp.ne.s32.totalorder %s189, %s191
      %p195 = scmp.eq.s32.totalorder %s24, 0
      %p196 = por %p194, %p195
      %p197 = scmp.ne.s32.totalorder %s189, %s191
      %p198 = scmp.eq.s32.totalorder %s29, 2
      %p199 = por %p197, %p198
      %p200 = scmp.ne.s32.totalorder %s191, %s192
      %p201 = scmp.eq.s32.totalorder %s29, 0
      %p202 = por %p200, %p201
      %p203 = scmp.ne.s32.totalorder %s191, %s192
      %p204 = scmp.eq.s32.totalorder %s30, 2
      %p205 = por %p203, %p204
      %p207 = scmp.ne.s32.totalorder %s192, %s206
      %p208 = scmp.eq.s32.totalorder %s30, 0
      %p209 = por %p207, %p208
      %s211 = sadd.s32 %s210, 1
      %p214 = scmp.eq.s32.totalorder %s24, 2
      %p215 = scmp.ne.s32.totalorder %s210, %s212
      %p216 = scmp.eq.s32.totalorder %s24, 0
      %p217 = por %p215, %p216
      %p218 = scmp.ne.s32.totalorder %s210, %s212
      %p219 = scmp.eq.s32.totalorder %s29, 2
      %p220 = por %p218, %p219
      %p221 = scmp.ne.s32.totalorder %s212, %s213
      %p222 = scmp.eq.s32.totalorder %s29, 0
      %p223 = por %p221, %p222
      %p224 = scmp.ne.s32.totalorder %s212, %s213
      %p225 = scmp.eq.s32.totalorder %s30, 2
      %p226 = por %p224, %p225
      %p228 = scmp.ne.s32.totalorder %s213, %s227
      %p229 = scmp.eq.s32.totalorder %s30, 0
      %p230 = por %p228, %p229
      %s232 = sadd.s32 %s231, 1
      %p235 = scmp.eq.s32.totalorder %s24, 2
      %p236 = scmp.ne.s32.totalorder %s231, %s233
      %p237 = scmp.eq.s32.totalorder %s24, 0
      %p238 = por %p236, %p237
      %p239 = scmp.ne.s32.totalorder %s231, %s233
      %p240 = scmp.eq.s32.totalorder %s29, 2
      %p241 = por %p239, %p240
      %p242 = scmp.ne.s32.totalorder %s233, %s234
      %p243 = scmp.eq.s32.totalorder %s29, 0
      %p244 = por %p242, %p243
      %p245 = scmp.ne.s32.totalorder %s233, %s234
      %p246 = scmp.eq.s32.totalorder %s30, 2
      %p247 = por %p245, %p246
      %p249 = scmp.ne.s32.totalorder %s234, %s248
      %p250 = scmp.eq.s32.totalorder %s30, 0
      %p251 = por %p249, %p250
      %s253 = sadd.s32 %s252, 1
      %p256 = scmp.eq.s32.totalorder %s24, 2
      %p257 = scmp.ne.s32.totalorder %s252, %s254
      %p258 = scmp.eq.s32.totalorder %s24, 0
      %p259 = por %p257, %p258
      %p260 = scmp.ne.s32.totalorder %s252, %s254
      %p261 = scmp.eq.s32.totalorder %s29, 2
      %p262 = por %p260, %p261
      %p263 = scmp.ne.s32.totalorder %s254, %s255
      %p264 = scmp.eq.s32.totalorder %s29, 0
      %p265 = por %p263, %p264
      %p266 = scmp.ne.s32.totalorder %s254, %s255
      %p267 = scmp.eq.s32.totalorder %s30, 2
      %p268 = por %p266, %p267
      %p270 = scmp.ne.s32.totalorder %s255, %s269
      %p271 = scmp.eq.s32.totalorder %s30, 0
      %p272 = por %p270, %p271
      %s274 = sadd.s32 %s273, 1
      %p277 = scmp.eq.s32.totalorder %s24, 2
      %p278 = scmp.ne.s32.totalorder %s273, %s275
      %p279 = scmp.eq.s32.totalorder %s24, 0
      %p280 = por %p278, %p279
      %p281 = scmp.ne.s32.totalorder %s273, %s275
      %p282 = scmp.eq.s32.totalorder %s29, 2
      %p283 = por %p281, %p282
      %p284 = scmp.ne.s32.totalorder %s275, %s276
      %p285 = scmp.eq.s32.totalorder %s29, 0
      %p286 = por %p284, %p285
      %p287 = scmp.ne.s32.totalorder %s275, %s276
      %p288 = scmp.eq.s32.totalorder %s30, 2
      %p289 = por %p287, %p288
      %p291 = scmp.ne.s32.totalorder %s276, %s290
      %p292 = scmp.eq.s32.totalorder %s30, 0
      %p293 = por %p291, %p292
      %s295 = sadd.s32 %s294, 1
      %p298 = scmp.eq.s32.totalorder %s24, 2
      %p299 = scmp.ne.s32.totalorder %s294, %s296
      %p300 = scmp.eq.s32.totalorder %s24, 0
      %p301 = por %p299, %p300
      %p302 = scmp.ne.s32.totalorder %s294, %s296
      %p303 = scmp.eq.s32.totalorder %s29, 2
      %p304 = por %p302, %p303
      %p305 = scmp.ne.s32.totalorder %s296, %s297
      %p306 = scmp.eq.s32.totalorder %s29, 0
      %p307 = por %p305, %p306
      %p308 = scmp.ne.s32.totalorder %s296, %s297
      %p309 = scmp.eq.s32.totalorder %s30, 2
      %p310 = por %p308, %p309
      %p312 = scmp.ne.s32.totalorder %s297, %s311
      %p313 = scmp.eq.s32.totalorder %s30, 0
      %p314 = por %p312, %p313
      %s316 = sadd.s32 %s315, 1
      %p319 = scmp.eq.s32.totalorder %s24, 2
      %p320 = scmp.ne.s32.totalorder %s315, %s317
      %p321 = scmp.eq.s32.totalorder %s24, 0
      %p322 = por %p320, %p321
      %p323 = scmp.ne.s32.totalorder %s315, %s317
      %p324 = scmp.eq.s32.totalorder %s29, 2
      %p325 = por %p323, %p324
      %p326 = scmp.ne.s32.totalorder %s317, %s318
      %p327 = scmp.eq.s32.totalorder %s29, 0
      %p328 = por %p326, %p327
      %p329 = scmp.ne.s32.totalorder %s317, %s318
      %p330 = scmp.eq.s32.totalorder %s30, 2
      %p331 = por %p329, %p330
      %p333 = scmp.ne.s32.totalorder %s318, %s332
      %p334 = scmp.eq.s32.totalorder %s30, 0
      %p335 = por %p333, %p334
      %s337 = sadd.s32 %s336, 1
      %p340 = scmp.eq.s32.totalorder %s24, 2
      %p341 = scmp.ne.s32.totalorder %s336, %s338
      %p342 = scmp.eq.s32.totalorder %s24, 0
      %p343 = por %p341, %p342
      %p344 = scmp.ne.s32.totalorder %s336, %s338
      %p345 = scmp.eq.s32.totalorder %s29, 2
      %p346 = por %p344, %p345
      %p347 = scmp.ne.s32.totalorder %s338, %s339
      %p348 = scmp.eq.s32.totalorder %s29, 0
      %p349 = por %p347, %p348
      %p350 = scmp.ne.s32.totalorder %s338, %s339
      %p351 = scmp.eq.s32.totalorder %s30, 2
      %p352 = por %p350, %p351
      %p354 = scmp.ne.s32.totalorder %s339, %s353
      %p355 = scmp.eq.s32.totalorder %s30, 0
      %p356 = por %p354, %p355
      %s358 = sadd.s32 %s357, 1
      %p361 = scmp.eq.s32.totalorder %s24, 2
      %p362 = scmp.ne.s32.totalorder %s357, %s359
      %p363 = scmp.eq.s32.totalorder %s24, 0
      %p364 = por %p362, %p363
      %p365 = scmp.ne.s32.totalorder %s357, %s359
      %p366 = scmp.eq.s32.totalorder %s29, 2
      %p367 = por %p365, %p366
      %p368 = scmp.ne.s32.totalorder %s359, %s360
      %p369 = scmp.eq.s32.totalorder %s29, 0
      %p370 = por %p368, %p369
      %p371 = scmp.ne.s32.totalorder %s359, %s360
      %p372 = scmp.eq.s32.totalorder %s30, 2
      %p373 = por %p371, %p372
      %p375 = scmp.ne.s32.totalorder %s360, %s374
      %p376 = scmp.eq.s32.totalorder %s30, 0
      %p377 = por %p375, %p376
      %s379 = sadd.s32 %s378, 1
      %p382 = scmp.eq.s32.totalorder %s24, 2
      %p383 = scmp.ne.s32.totalorder %s378, %s380
      %p384 = scmp.eq.s32.totalorder %s24, 0
      %p385 = por %p383, %p384
      %p386 = scmp.ne.s32.totalorder %s378, %s380
      %p387 = scmp.eq.s32.totalorder %s29, 2
      %p388 = por %p386, %p387
      %p389 = scmp.ne.s32.totalorder %s380, %s381
      %p390 = scmp.eq.s32.totalorder %s29, 0
      %p391 = por %p389, %p390
      %p392 = scmp.ne.s32.totalorder %s380, %s381
      %p393 = scmp.eq.s32.totalorder %s30, 2
      %p394 = por %p392, %p393
      %p396 = scmp.ne.s32.totalorder %s381, %s395
      %p397 = scmp.eq.s32.totalorder %s30, 0
      %p398 = por %p396, %p397
      %s400 = sadd.s32 %s399, 1
      %p403 = scmp.eq.s32.totalorder %s24, 2
      %p404 = scmp.ne.s32.totalorder %s399, %s401
      %p405 = scmp.eq.s32.totalorder %s24, 0
      %p406 = por %p404, %p405
      %p407 = scmp.ne.s32.totalorder %s399, %s401
      %p408 = scmp.eq.s32.totalorder %s29, 2
      %p409 = por %p407, %p408
      %p410 = scmp.ne.s32.totalorder %s401, %s402
      %p411 = scmp.eq.s32.totalorder %s29, 0
      %p412 = por %p410, %p411
      %p413 = scmp.ne.s32.totalorder %s401, %s402
      %p414 = scmp.eq.s32.totalorder %s30, 2
      %p415 = por %p413, %p414
      %p417 = scmp.ne.s32.totalorder %s402, %s416
      %p418 = scmp.eq.s32.totalorder %s30, 0
      %p419 = por %p417, %p418
      %s420 = ssub.s32 %s24, %s31
      %p421 = scmp.eq.s32.totalorder %s420, 0
      %s423 = sadd.s32 %s422, 1
      %s424 = scalar_select %p421, %s422, %s423
      %p427 = pneg %p421
      %p428 = scmp.eq.s32.totalorder %s24, 2
      %p429 = por %p427, %p428
      %p430 = scmp.ne.s32.totalorder %s422, %s425
      %p431 = scmp.eq.s32.totalorder %s24, 0
      %p432 = por %p430, %p431
      %p433 = scmp.ne.s32.totalorder %s422, %s425
      %p434 = scmp.eq.s32.totalorder %s29, 2
      %p435 = por %p433, %p434
      %p436 = scmp.ne.s32.totalorder %s425, %s426
      %p437 = scmp.eq.s32.totalorder %s29, 0
      %p438 = por %p436, %p437
      %p439 = scmp.ne.s32.totalorder %s425, %s426
      %p440 = scmp.eq.s32.totalorder %s30, 2
      %p441 = por %p439, %p440
      %p443 = scmp.ne.s32.totalorder %s426, %s442
      %p444 = scmp.eq.s32.totalorder %s30, 0
      %p445 = por %p443, %p444
      %p446 = scmp.le.s32.totalorder 1, %s24
      %p447 = scmp.lt.s32.totalorder %s24, 4
      %p448 = pnand %p446, %p447
      %p449 = pneg %p448
      // Predicated region
      $region9: #{multi_stage_forward.1} parent=5 // pred_check
        _
      $region10: #{multi_stage_forward.1} parent=5 // pred_check_branch
        %451 = sbr.rel (%p448) target = $region12
      $region11: #{multi_stage_forward.1} parent=5 // pred_region
        %s452 = ssub.s32 %s24, 1
        // Predicated region
        $region13: #{multi_stage_forward.1} parent=11 // pred_check
          %p453 = pneg %p97
        $region14: #{multi_stage_forward.1} parent=11 // pred_check_branch
          %455 = sbr.rel (%p453) target = $region16
        $region15: #{multi_stage_forward.1} parent=11 // pred_region
          _
        $region16: #{multi_stage_forward.1} parent=11 // pred_fallthru
          _
        // Predicated region
        $region17: #{multi_stage_forward.1} parent=11 // pred_check
          %p456 = pneg %p118
        $region18: #{multi_stage_forward.1} parent=11 // pred_check_branch
          %458 = sbr.rel (%p456) target = $region20
        $region19: #{multi_stage_forward.1} parent=11 // pred_region
          _
        $region20: #{multi_stage_forward.1} parent=11 // pred_fallthru
          _
        // Predicated region
        $region21: #{multi_stage_forward.1} parent=11 // pred_check
          %p459 = pneg %p139
        $region22: #{multi_stage_forward.1} parent=11 // pred_check_branch
          %461 = sbr.rel (%p459) target = $region24
        $region23: #{multi_stage_forward.1} parent=11 // pred_region
          _
        $region24: #{multi_stage_forward.1} parent=11 // pred_fallthru
          _
        // Predicated region
        $region25: #{multi_stage_forward.1} parent=11 // pred_check
          %p462 = pneg %p160
        $region26: #{multi_stage_forward.1} parent=11 // pred_check_branch
          %464 = sbr.rel (%p462) target = $region28
        $region27: #{multi_stage_forward.1} parent=11 // pred_region
          _
        $region28: #{multi_stage_forward.1} parent=11 // pred_fallthru
          _
        // Predicated region
        $region29: #{multi_stage_forward.1} parent=11 // pred_check
          %p465 = pneg %p181
        $region30: #{multi_stage_forward.1} parent=11 // pred_check_branch
          %467 = sbr.rel (%p465) target = $region32
        $region31: #{multi_stage_forward.1} parent=11 // pred_region
          _
        $region32: #{multi_stage_forward.1} parent=11 // pred_fallthru
          _
        // Predicated region
        $region33: #{multi_stage_forward.1} parent=11 // pred_check
          %p468 = pneg %p202
        $region34: #{multi_stage_forward.1} parent=11 // pred_check_branch
          %470 = sbr.rel (%p468) target = $region36
        $region35: #{multi_stage_forward.1} parent=11 // pred_region
          _
        $region36: #{multi_stage_forward.1} parent=11 // pred_fallthru
          _
        // Predicated region
        $region37: #{multi_stage_forward.1} parent=11 // pred_check
          %p471 = pneg %p223
        $region38: #{multi_stage_forward.1} parent=11 // pred_check_branch
          %473 = sbr.rel (%p471) target = $region40
        $region39: #{multi_stage_forward.1} parent=11 // pred_region
          _
        $region40: #{multi_stage_forward.1} parent=11 // pred_fallthru
          _
        // Predicated region
        $region41: #{multi_stage_forward.1} parent=11 // pred_check
          %p474 = pneg %p244
        $region42: #{multi_stage_forward.1} parent=11 // pred_check_branch
          %476 = sbr.rel (%p474) target = $region44
        $region43: #{multi_stage_forward.1} parent=11 // pred_region
          _
        $region44: #{multi_stage_forward.1} parent=11 // pred_fallthru
          _
        // Predicated region
        $region45: #{multi_stage_forward.1} parent=11 // pred_check
          %p477 = pneg %p265
        $region46: #{multi_stage_forward.1} parent=11 // pred_check_branch
          %479 = sbr.rel (%p477) target = $region48
        $region47: #{multi_stage_forward.1} parent=11 // pred_region
          _
        $region48: #{multi_stage_forward.1} parent=11 // pred_fallthru
          _
        // Predicated region
        $region49: #{multi_stage_forward.1} parent=11 // pred_check
          %p480 = pneg %p286
        $region50: #{multi_stage_forward.1} parent=11 // pred_check_branch
          %482 = sbr.rel (%p480) target = $region52
        $region51: #{multi_stage_forward.1} parent=11 // pred_region
          _
        $region52: #{multi_stage_forward.1} parent=11 // pred_fallthru
          _
        // Predicated region
        $region53: #{multi_stage_forward.1} parent=11 // pred_check
          %p483 = pneg %p307
        $region54: #{multi_stage_forward.1} parent=11 // pred_check_branch
          %485 = sbr.rel (%p483) target = $region56
        $region55: #{multi_stage_forward.1} parent=11 // pred_region
          _
        $region56: #{multi_stage_forward.1} parent=11 // pred_fallthru
          _
        // Predicated region
        $region57: #{multi_stage_forward.1} parent=11 // pred_check
          %p486 = pneg %p328
        $region58: #{multi_stage_forward.1} parent=11 // pred_check_branch
          %488 = sbr.rel (%p486) target = $region60
        $region59: #{multi_stage_forward.1} parent=11 // pred_region
          _
        $region60: #{multi_stage_forward.1} parent=11 // pred_fallthru
          _
        // Predicated region
        $region61: #{multi_stage_forward.1} parent=11 // pred_check
          %p489 = pneg %p349
        $region62: #{multi_stage_forward.1} parent=11 // pred_check_branch
          %491 = sbr.rel (%p489) target = $region64
        $region63: #{multi_stage_forward.1} parent=11 // pred_region
          _
        $region64: #{multi_stage_forward.1} parent=11 // pred_fallthru
          _
        // Predicated region
        $region65: #{multi_stage_forward.1} parent=11 // pred_check
          %p492 = pneg %p370
        $region66: #{multi_stage_forward.1} parent=11 // pred_check_branch
          %494 = sbr.rel (%p492) target = $region68
        $region67: #{multi_stage_forward.1} parent=11 // pred_region
          _
        $region68: #{multi_stage_forward.1} parent=11 // pred_fallthru
          _
        // Predicated region
        $region69: #{multi_stage_forward.1} parent=11 // pred_check
          %p495 = pneg %p391
        $region70: #{multi_stage_forward.1} parent=11 // pred_check_branch
          %497 = sbr.rel (%p495) target = $region72
        $region71: #{multi_stage_forward.1} parent=11 // pred_region
          _
        $region72: #{multi_stage_forward.1} parent=11 // pred_fallthru
          _
        // Predicated region
        $region73: #{multi_stage_forward.1} parent=11 // pred_check
          %p498 = pneg %p412
        $region74: #{multi_stage_forward.1} parent=11 // pred_check_branch
          %500 = sbr.rel (%p498) target = $region76
        $region75: #{multi_stage_forward.1} parent=11 // pred_region
          _
        $region76: #{multi_stage_forward.1} parent=11 // pred_fallthru
          _
      $region12: #{multi_stage_forward.1} parent=5 // pred_fallthru
        _
      %p501 = scmp.lt.s32.totalorder %s24, 3
      // Predicated region
      $region77: #{multi_stage_forward.1} parent=5 // pred_check
        %p502 = pneg %p501
      $region78: #{multi_stage_forward.1} parent=5 // pred_check_branch
        %504 = sbr.rel (%p502) target = $region80
      $region79: #{multi_stage_forward.1} parent=5 // pred_region
        // Predicated region
        $region81: #{multi_stage_forward.1} parent=79 // pred_check
          %p505 = pneg %p44
        $region82: #{multi_stage_forward.1} parent=79 // pred_check_branch
          %507 = sbr.rel (%p505) target = $region84
        $region83: #{multi_stage_forward.1} parent=79 // pred_region
          %p508 = scmp.lt.s32.totalorder %s24, 2
          %s509 = scalar_select %p508, %s24, 2
          %s510 = smul.addr %s509, 4
          %s511 = scalar_lea.vmem %s0, %s510
        $region84: #{multi_stage_forward.1} parent=79 // pred_fallthru
          _
        // Predicated region
        $region85: #{multi_stage_forward.1} parent=79 // pred_check
          %p512 = pneg %p70
        $region86: #{multi_stage_forward.1} parent=79 // pred_check_branch
          %514 = sbr.rel (%p512) target = $region88
        $region87: #{multi_stage_forward.1} parent=79 // pred_region
          %p515 = scmp.lt.s32.totalorder %s24, 2
          %s516 = scalar_select %p515, %s24, 2
          %s517 = scalar_lea.vmem %s1, %s516
        $region88: #{multi_stage_forward.1} parent=79 // pred_fallthru
          _
      $region80: #{multi_stage_forward.1} parent=5 // pred_fallthru
        _
      %p518 = scmp.le.s32.totalorder 1, %s24
      %p519 = scmp.lt.s32.totalorder %s24, 4
      %p520 = pnand %p518, %p519
      %p521 = pneg %p520
      // Predicated region
      $region89: #{multi_stage_forward.1} parent=5 // pred_check
        _
      $region90: #{multi_stage_forward.1} parent=5 // pred_check_branch
        %523 = sbr.rel (%p520) target = $region92
      $region91: #{multi_stage_forward.1} parent=5 // pred_region
        %s524 = ssub.s32 %s24, 1
        %p525 = scmp.lt.s32.totalorder %s29, 2
        %s526 = scalar_select %p525, %s29, 2
        %s527 = smul.addr %s526, 4
        %s528 = scalar_lea.vmem %s0, %s527
        %p529 = pneg %p50
        %p530 = pneg %p47
        %p531 = scmp.lt.s32.totalorder %s29, 2
        %s532 = scalar_select %p531, %s29, 2
        %s533 = scalar_lea.vmem %s1, %s532
        %p534 = pneg %p76
        %p535 = pneg %p73
        %p536 = pneg %p97
        %p537 = pneg %p94
        %p538 = pneg %p118
        %p539 = pneg %p115
        %p540 = pneg %p139
        %p541 = pneg %p136
        %p542 = pneg %p160
        %p543 = pneg %p157
        %p544 = pneg %p181
        %p545 = pneg %p178
        %p546 = pneg %p202
        %p547 = pneg %p199
        %p548 = pneg %p223
        %p549 = pneg %p220
        %p550 = pneg %p244
        %p551 = pneg %p241
        %p552 = pneg %p265
        %p553 = pneg %p262
        %p554 = pneg %p286
        %p555 = pneg %p283
        %p556 = pneg %p307
        %p557 = pneg %p304
        %p558 = pneg %p328
        %p559 = pneg %p325
        %p560 = pneg %p349
        %p561 = pneg %p346
        %p562 = pneg %p370
        %p563 = pneg %p367
        %p564 = pneg %p391
        %p565 = pneg %p388
        %p566 = pneg %p412
        %p567 = pneg %p409
        %p568 = pneg %p438
        %p569 = pneg %p435
        %s570 = sand.u32 %s425, 1
        %s571 = sand.u32 %s425, 1
        %s572 = smul.addr %s571, 24
        %s573 = scalar_lea.vmem [#allocation2], %s572
        %p574 = scmp.lt.s32.totalorder %s29, 2
        %s575 = scalar_select %p574, %s29, 2
        %s576 = smul.addr %s575, 4
        %s577 = scalar_lea.vmem %s0, %s576
        %p578 = scmp.lt.s32.totalorder %s29, 2
        %s579 = scalar_select %p578, %s29, 2
        %s580 = scalar_lea.vmem %s1, %s579
        %v582 = vld [vmem:[%s577] sm:$0xf]
        %v583 = vld [vmem:[%s580] sm:$0x1]
        %v585 = vperm.slane %v583, 0
        %v587 = vlaneseq
        %v588 = vand.u32 %v587, 127
        %vm589 = vcmp.lt.s32.totalorder %v588, 24
        %v590 = vsel %vm589, 1, 0
        %v591 = vcvt.s32.f32 %v590
        %v592 = vld [vmem:[%s2] sm:$0xf]
        %v593 = vld [vmem:[%s2 + $0x4] sm:$0xf]
        %v594 = vld [vmem:[%s3] sm:$0xff]
        %v595 = vld [vmem:[%s3 + $0x8] sm:$0xff]
        %v596 = vld [vmem:[%s4] sm:$0xf]
        %v597 = vld [vmem:[%s4 + $0x4] sm:$0xf]
        %v598 = vld [vmem:[%s4 + $0x8] sm:$0xf]
        %v599 = vld [vmem:[%s4 + $0xc] sm:$0xf]
        %v600 = vld [vmem:[%s4 + $0x10] sm:$0xf]
        %v601 = vld [vmem:[%s4 + $0x14] sm:$0xf]
        %v602 = vld [vmem:[%s4 + $0x18] sm:$0xf]
        %v603 = vld [vmem:[%s4 + $0x1c] sm:$0xf]
        %v604 = vld [vmem:[%s4 + $0x20] sm:$0xf]
        %v605 = vld [vmem:[%s4 + $0x24] sm:$0xf]
        %v606 = vld [vmem:[%s4 + $0x28] sm:$0xf]
        %v607 = vld [vmem:[%s4 + $0x2c] sm:$0xf]
        %v608 = vld [vmem:[%s4 + $0x30] sm:$0xf]
        %v609 = vld [vmem:[%s4 + $0x34] sm:$0xf]
        %v610 = vld [vmem:[%s4 + $0x38] sm:$0xf]
        %v611 = vld [vmem:[%s4 + $0x3c] sm:$0xf]
        %v612 = vld [vmem:[%s4 + $0x40] sm:$0xf]
        %v613 = vld [vmem:[%s4 + $0x44] sm:$0xf]
        %v614 = vld [vmem:[%s4 + $0x48] sm:$0xf]
        %v615 = vld [vmem:[%s4 + $0x4c] sm:$0xf]
        %v616 = vld [vmem:[%s4 + $0x50] sm:$0xf]
        %v617 = vld [vmem:[%s4 + $0x54] sm:$0xf]
        %v618 = vld [vmem:[%s4 + $0x58] sm:$0xf]
        %v619 = vld [vmem:[%s4 + $0x5c] sm:$0xf]
        %v620 = vld [vmem:[%s5] sm:$0xff]
        %v621 = vld [vmem:[%s5 + $0x8] sm:$0xff]
        %v622 = vld [vmem:[%s5 + $0x10] sm:$0xff]
        %v623 = vld [vmem:[%s5 + $0x18] sm:$0xff]
        %v624 = vld [vmem:[%s5 + $0x20] sm:$0xff]
        %v625 = vld [vmem:[%s5 + $0x28] sm:$0xff]
        %v626 = vld [vmem:[%s5 + $0x30] sm:$0xff]
        %v627 = vld [vmem:[%s5 + $0x38] sm:$0xff]
        %v628 = vld [vmem:[%s6] sm:$0xf]
        %v629 = vld [vmem:[%s6 + $0x4] sm:$0xf]
        %v630 = vld [vmem:[%s6 + $0x8] sm:$0xf]
        %v631 = vld [vmem:[%s6 + $0xc] sm:$0xf]
        %v632 = vld [vmem:[%s6 + $0x10] sm:$0xf]
        %v633 = vld [vmem:[%s6 + $0x14] sm:$0xf]
        %v634 = vld [vmem:[%s6 + $0x18] sm:$0xf]
        %v635 = vld [vmem:[%s6 + $0x1c] sm:$0xf]
        %v636 = vld [vmem:[%s7] sm:$0xff]
        %v637 = vld [vmem:[%s7 + $0x8] sm:$0xff]
        %v638 = vld [vmem:[%s7 + $0x10] sm:$0xff]
        %v639 = vld [vmem:[%s7 + $0x18] sm:$0xff]
        %v640 = vld [vmem:[%s7 + $0x20] sm:$0xff]
        %v641 = vld [vmem:[%s7 + $0x28] sm:$0xff]
        %v642 = vld [vmem:[%s7 + $0x30] sm:$0xff]
        %v643 = vld [vmem:[%s7 + $0x38] sm:$0xff]
        %v644 = vld [vmem:[%s8] sm:$0xf]
        %v645 = vld [vmem:[%s9] sm:$0xff]
        %647 = vset.pattern.permute.xlu0 0
        %648 = vperm.xlu0 %647, %v594
        %v649 = vpop.permute.xlu0 %648
        %652 = vset.pattern.permute.xlu0 0
        %653 = vperm.xlu0 %652, %v595
        %v654 = vpop.permute.xlu0 %653
        %v658 = vunpack.c.l.b16 %v592
        %v659 = vunpack.c.l.b16 %v593
        %v660 = vpack.c.b16 %v659, %v658
        %vm661 = vcmask 64512
        %v663 = vsel %vm661, %v660, 0
        %vm665 = vcmask 1043456
        %v667 = vsel %vm665, %v582, 0
        %669 = vmatpush.bf16.msra.mxu0 0
        %670 = vmatpush.bf16.msra.mxu0 0
        %671 = vmatpush.bf16.msra.mxu0 0
        %672 = vmatpush.bf16.msra.mxu0 0
        %673 = vmatpush.bf16.msra.mxu0 0
        %674 = vmatpush.bf16.msra.mxu0 0
        %675 = vmatpush.bf16.msra.mxu0 0
        %676 = vmatpush.bf16.msra.mxu0 %v667
        %677 = vmatmul.bf16.gmra.mxu0 %v663
        %v678 = vpop.f32.mrf.mxu0
        %v679 = vadd.f32 %v649, %v678
        %v680 = vpop.f32.mrf.mxu0
        %v681 = vadd.f32 %v654, %v680
        %682 = vdwg.mxu0
        %v683 = vmul.f32 %v679, %v591
        %v684 = vmul.f32 %v681, %v591
        %v685 = vpack.c.bf16 %v684, %v683
        %v692 = vunpack.c.l.b16 %v596
        %v693 = vunpack.c.l.b16 %v597
        %v694 = vunpack.c.l.b16 %v598
        %v695 = vunpack.c.l.b16 %v599
        %v696 = vunpack.c.l.b16 %v600
        %v697 = vunpack.c.l.b16 %v601
        %v698 = vpack.c.b16 %v693, %v692
        %v699 = vpack.c.b16 %v695, %v694
        %v700 = vpack.c.b16 %v697, %v696
        %vm701 = vcmask 130048
        %v703 = vsel %vm701, %v698, 0
        %v706 = vsel %vm701, %v699, 0
        %v709 = vsel %vm701, %v700, 0
        %711 = vmatpush.bf16.msra.mxu0 0
        %712 = vmatpush.bf16.msra.mxu0 0
        %713 = vmatpush.bf16.msra.mxu0 0
        %714 = vmatpush.bf16.msra.mxu0 0
        %715 = vmatpush.bf16.msra.mxu0 0
        %716 = vmatpush.bf16.msra.mxu0 0
        %717 = vmatpush.bf16.msra.mxu0 0
        %718 = vmatpush.bf16.msra.mxu0 %v685
        %719 = vmatmul.bf16.gmra.mxu0 %v703
        %v720 = vpop.f32.mrf.mxu0
        %v721 = vadd.f32 0.0, %v720
        %v722 = vpop.f32.mrf.mxu0
        %v723 = vadd.f32 0.0, %v722
        %724 = vmatmul.bf16.gmra.mxu0 %v706
        %v725 = vpop.f32.mrf.mxu0
        %v726 = vadd.f32 0.0, %v725
        %v727 = vpop.f32.mrf.mxu0
        %v728 = vadd.f32 0.0, %v727
        %729 = vmatmul.bf16.gmra.mxu0 %v709
        %v730 = vpop.f32.mrf.mxu0
        %v731 = vadd.f32 0.0, %v730
        %v732 = vpop.f32.mrf.mxu0
        %v733 = vadd.f32 0.0, %v732
        %734 = vdwg.mxu0
        %735 = vrot.lane.b32.xlu0 %v721, 1
        %v736 = vpop.permute.xlu0 %735
        %737 = vrot.lane.b32.xlu0 %v723, 1
        %v738 = vpop.permute.xlu0 %737
        %739 = vrot.lane.b32.xlu0 %v731, 127
        %v740 = vpop.permute.xlu0 %739
        %741 = vrot.lane.b32.xlu0 %v733, 127
        %v742 = vpop.permute.xlu0 %741
        %v743 = vadd.f32 %v736, %v726
        %v744 = vadd.f32 %v738, %v728
        %v745 = vadd.f32 %v743, %v740
        %v746 = vadd.f32 %v744, %v742
        %748 = vset.pattern.permute.xlu0 0
        %749 = vperm.xlu0 %748, %v620
        %v750 = vpop.permute.xlu0 %749
        %753 = vset.pattern.permute.xlu0 0
        %754 = vperm.xlu0 %753, %v621
        %v755 = vpop.permute.xlu0 %754
        %v757 = vadd.f32 %v745, %v750
        %v758 = vadd.f32 %v746, %v755
        %v759 = vmax.f32 %v757, 0.0
        %v760 = vmax.f32 %v758, 0.0
        %v761 = vpack.c.bf16 %v760, %v759
        %763 = vset.pattern.permute.xlu0 0
        %764 = vperm.xlu0 %763, %v636
        %v765 = vpop.permute.xlu0 %764
        %768 = vset.pattern.permute.xlu0 0
        %769 = vperm.xlu0 %768, %v637
        %v770 = vpop.permute.xlu0 %769
        %v774 = vunpack.c.l.b16 %v628
        %v775 = vunpack.c.l.b16 %v629
        %v776 = vpack.c.b16 %v775, %v774
        %v778 = vsel %vm701, %v776, 0
        %780 = vmatpush.bf16.msra.mxu0 0
        %781 = vmatpush.bf16.msra.mxu0 0
        %782 = vmatpush.bf16.msra.mxu0 0
        %783 = vmatpush.bf16.msra.mxu0 0
        %784 = vmatpush.bf16.msra.mxu0 0
        %785 = vmatpush.bf16.msra.mxu0 0
        %786 = vmatpush.bf16.msra.mxu0 0
        %787 = vmatpush.bf16.msra.mxu0 %v761
        %788 = vmatmul.bf16.gmra.mxu0 %v778
        %v789 = vpop.f32.mrf.mxu0
        %v790 = vadd.f32 %v765, %v789
        %v791 = vpop.f32.mrf.mxu0
        %v792 = vadd.f32 %v770, %v791
        %793 = vdwg.mxu0
        %v794 = vadd.f32 %v683, %v790
        %v795 = vadd.f32 %v684, %v792
        %v796 = vmul.f32 %v794, %v585
        %v797 = vmul.f32 %v795, %v585
        %v798 = vpack.c.bf16 %v797, %v796
        %v805 = vunpack.c.l.b16 %v602
        %v806 = vunpack.c.l.b16 %v603
        %v807 = vunpack.c.l.b16 %v604
        %v808 = vunpack.c.l.b16 %v605
        %v809 = vunpack.c.l.b16 %v606
        %v810 = vunpack.c.l.b16 %v607
        %v811 = vpack.c.b16 %v806, %v805
        %v812 = vpack.c.b16 %v808, %v807
        %v813 = vpack.c.b16 %v810, %v809
        %v815 = vsel %vm701, %v811, 0
        %v818 = vsel %vm701, %v812, 0
        %v821 = vsel %vm701, %v813, 0
        %823 = vmatpush.bf16.msra.mxu0 0
        %824 = vmatpush.bf16.msra.mxu0 0
        %825 = vmatpush.bf16.msra.mxu0 0
        %826 = vmatpush.bf16.msra.mxu0 0
        %827 = vmatpush.bf16.msra.mxu0 0
        %828 = vmatpush.bf16.msra.mxu0 0
        %829 = vmatpush.bf16.msra.mxu0 0
        %830 = vmatpush.bf16.msra.mxu0 %v798
        %831 = vmatmul.bf16.gmra.mxu0 %v815
        %v832 = vpop.f32.mrf.mxu0
        %v833 = vadd.f32 0.0, %v832
        %v834 = vpop.f32.mrf.mxu0
        %v835 = vadd.f32 0.0, %v834
        %836 = vmatmul.bf16.gmra.mxu0 %v818
        %v837 = vpop.f32.mrf.mxu0
        %v838 = vadd.f32 0.0, %v837
        %v839 = vpop.f32.mrf.mxu0
        %v840 = vadd.f32 0.0, %v839
        %841 = vmatmul.bf16.gmra.mxu0 %v821
        %v842 = vpop.f32.mrf.mxu0
        %v843 = vadd.f32 0.0, %v842
        %v844 = vpop.f32.mrf.mxu0
        %v845 = vadd.f32 0.0, %v844
        %846 = vdwg.mxu0
        %847 = vrot.lane.b32.xlu0 %v833, 2
        %v848 = vpop.permute.xlu0 %847
        %849 = vrot.lane.b32.xlu0 %v835, 2
        %v850 = vpop.permute.xlu0 %849
        %851 = vrot.lane.b32.xlu0 %v843, 126
        %v852 = vpop.permute.xlu0 %851
        %853 = vrot.lane.b32.xlu0 %v845, 126
        %v854 = vpop.permute.xlu0 %853
        %v855 = vadd.f32 %v848, %v838
        %v856 = vadd.f32 %v850, %v840
        %v857 = vadd.f32 %v855, %v852
        %v858 = vadd.f32 %v856, %v854
        %860 = vset.pattern.permute.xlu0 0
        %861 = vperm.xlu0 %860, %v622
        %v862 = vpop.permute.xlu0 %861
        %865 = vset.pattern.permute.xlu0 0
        %866 = vperm.xlu0 %865, %v623
        %v867 = vpop.permute.xlu0 %866
        %v869 = vadd.f32 %v857, %v862
        %v870 = vadd.f32 %v858, %v867
        %v871 = vmax.f32 %v869, 0.0
        %v872 = vmax.f32 %v870, 0.0
        %v873 = vpack.c.bf16 %v872, %v871
        %875 = vset.pattern.permute.xlu0 0
        %876 = vperm.xlu0 %875, %v638
        %v877 = vpop.permute.xlu0 %876
        %880 = vset.pattern.permute.xlu0 0
        %881 = vperm.xlu0 %880, %v639
        %v882 = vpop.permute.xlu0 %881
        %v886 = vunpack.c.l.b16 %v630
        %v887 = vunpack.c.l.b16 %v631
        %v888 = vpack.c.b16 %v887, %v886
        %v890 = vsel %vm701, %v888, 0
        %892 = vmatpush.bf16.msra.mxu0 0
        %893 = vmatpush.bf16.msra.mxu0 0
        %894 = vmatpush.bf16.msra.mxu0 0
        %895 = vmatpush.bf16.msra.mxu0 0
        %896 = vmatpush.bf16.msra.mxu0 0
        %897 = vmatpush.bf16.msra.mxu0 0
        %898 = vmatpush.bf16.msra.mxu0 0
        %899 = vmatpush.bf16.msra.mxu0 %v873
        %900 = vmatmul.bf16.gmra.mxu0 %v890
        %v901 = vpop.f32.mrf.mxu0
        %v902 = vadd.f32 %v877, %v901
        %v903 = vpop.f32.mrf.mxu0
        %v904 = vadd.f32 %v882, %v903
        %905 = vdwg.mxu0
        %v906 = vadd.f32 %v796, %v902
        %v907 = vadd.f32 %v797, %v904
        %v908 = vmul.f32 %v906, %v585
        %v909 = vmul.f32 %v907, %v585
        %v910 = vpack.c.bf16 %v909, %v908
        %v917 = vunpack.c.l.b16 %v608
        %v918 = vunpack.c.l.b16 %v609
        %v919 = vunpack.c.l.b16 %v610
        %v920 = vunpack.c.l.b16 %v611
        %v921 = vunpack.c.l.b16 %v612
        %v922 = vunpack.c.l.b16 %v613
        %v923 = vpack.c.b16 %v918, %v917
        %v924 = vpack.c.b16 %v920, %v919
        %v925 = vpack.c.b16 %v922, %v921
        %v927 = vsel %vm701, %v923, 0
        %v930 = vsel %vm701, %v924, 0
        %v933 = vsel %vm701, %v925, 0
        %935 = vmatpush.bf16.msra.mxu0 0
        %936 = vmatpush.bf16.msra.mxu0 0
        %937 = vmatpush.bf16.msra.mxu0 0
        %938 = vmatpush.bf16.msra.mxu0 0
        %939 = vmatpush.bf16.msra.mxu0 0
        %940 = vmatpush.bf16.msra.mxu0 0
        %941 = vmatpush.bf16.msra.mxu0 0
        %942 = vmatpush.bf16.msra.mxu0 %v910
        %943 = vmatmul.bf16.gmra.mxu0 %v927
        %v944 = vpop.f32.mrf.mxu0
        %v945 = vadd.f32 0.0, %v944
        %v946 = vpop.f32.mrf.mxu0
        %v947 = vadd.f32 0.0, %v946
        %948 = vmatmul.bf16.gmra.mxu0 %v930
        %v949 = vpop.f32.mrf.mxu0
        %v950 = vadd.f32 0.0, %v949
        %v951 = vpop.f32.mrf.mxu0
        %v952 = vadd.f32 0.0, %v951
        %953 = vmatmul.bf16.gmra.mxu0 %v933
        %v954 = vpop.f32.mrf.mxu0
        %v955 = vadd.f32 0.0, %v954
        %v956 = vpop.f32.mrf.mxu0
        %v957 = vadd.f32 0.0, %v956
        %958 = vdwg.mxu0
        %959 = vrot.lane.b32.xlu0 %v945, 4
        %v960 = vpop.permute.xlu0 %959
        %961 = vrot.lane.b32.xlu0 %v947, 4
        %v962 = vpop.permute.xlu0 %961
        %963 = vrot.lane.b32.xlu0 %v955, 124
        %v964 = vpop.permute.xlu0 %963
        %965 = vrot.lane.b32.xlu0 %v957, 124
        %v966 = vpop.permute.xlu0 %965
        %v967 = vadd.f32 %v960, %v950
        %v968 = vadd.f32 %v962, %v952
        %v969 = vadd.f32 %v967, %v964
        %v970 = vadd.f32 %v968, %v966
        %972 = vset.pattern.permute.xlu0 0
        %973 = vperm.xlu0 %972, %v624
        %v974 = vpop.permute.xlu0 %973
        %977 = vset.pattern.permute.xlu0 0
        %978 = vperm.xlu0 %977, %v625
        %v979 = vpop.permute.xlu0 %978
        %v981 = vadd.f32 %v969, %v974
        %v982 = vadd.f32 %v970, %v979
        %v983 = vmax.f32 %v981, 0.0
        %v984 = vmax.f32 %v982, 0.0
        %v985 = vpack.c.bf16 %v984, %v983
        %987 = vset.pattern.permute.xlu0 0
        %988 = vperm.xlu0 %987, %v640
        %v989 = vpop.permute.xlu0 %988
        %992 = vset.pattern.permute.xlu0 0
        %993 = vperm.xlu0 %992, %v641
        %v994 = vpop.permute.xlu0 %993
        %v998 = vunpack.c.l.b16 %v632
        %v999 = vunpack.c.l.b16 %v633
        %v1000 = vpack.c.b16 %v999, %v998
        %v1002 = vsel %vm701, %v1000, 0
        %1004 = vmatpush.bf16.msra.mxu0 0
        %1005 = vmatpush.bf16.msra.mxu0 0
        %1006 = vmatpush.bf16.msra.mxu0 0
        %1007 = vmatpush.bf16.msra.mxu0 0
        %1008 = vmatpush.bf16.msra.mxu0 0
        %1009 = vmatpush.bf16.msra.mxu0 0
        %1010 = vmatpush.bf16.msra.mxu0 0
        %1011 = vmatpush.bf16.msra.mxu0 %v985
        %1012 = vmatmul.bf16.gmra.mxu0 %v1002
        %v1013 = vpop.f32.mrf.mxu0
        %v1014 = vadd.f32 %v989, %v1013
        %v1015 = vpop.f32.mrf.mxu0
        %v1016 = vadd.f32 %v994, %v1015
        %1017 = vdwg.mxu0
        %v1018 = vadd.f32 %v908, %v1014
        %v1019 = vadd.f32 %v909, %v1016
        %v1020 = vmul.f32 %v1018, %v585
        %v1021 = vmul.f32 %v1019, %v585
        %v1022 = vpack.c.bf16 %v1021, %v1020
        %v1029 = vunpack.c.l.b16 %v614
        %v1030 = vunpack.c.l.b16 %v615
        %v1031 = vunpack.c.l.b16 %v616
        %v1032 = vunpack.c.l.b16 %v617
        %v1033 = vunpack.c.l.b16 %v618
        %v1034 = vunpack.c.l.b16 %v619
        %v1035 = vpack.c.b16 %v1030, %v1029
        %v1036 = vpack.c.b16 %v1032, %v1031
        %v1037 = vpack.c.b16 %v1034, %v1033
        %v1039 = vsel %vm701, %v1035, 0
        %v1042 = vsel %vm701, %v1036, 0
        %v1045 = vsel %vm701, %v1037, 0
        %1047 = vmatpush.bf16.msra.mxu0 0
        %1048 = vmatpush.bf16.msra.mxu0 0
        %1049 = vmatpush.bf16.msra.mxu0 0
        %1050 = vmatpush.bf16.msra.mxu0 0
        %1051 = vmatpush.bf16.msra.mxu0 0
        %1052 = vmatpush.bf16.msra.mxu0 0
        %1053 = vmatpush.bf16.msra.mxu0 0
        %1054 = vmatpush.bf16.msra.mxu0 %v1022
        %1055 = vmatmul.bf16.gmra.mxu0 %v1039
        %v1056 = vpop.f32.mrf.mxu0
        %v1057 = vadd.f32 0.0, %v1056
        %v1058 = vpop.f32.mrf.mxu0
        %v1059 = vadd.f32 0.0, %v1058
        %1060 = vmatmul.bf16.gmra.mxu0 %v1042
        %v1061 = vpop.f32.mrf.mxu0
        %v1062 = vadd.f32 0.0, %v1061
        %v1063 = vpop.f32.mrf.mxu0
        %v1064 = vadd.f32 0.0, %v1063
        %1065 = vmatmul.bf16.gmra.mxu0 %v1045
        %v1066 = vpop.f32.mrf.mxu0
        %v1067 = vadd.f32 0.0, %v1066
        %v1068 = vpop.f32.mrf.mxu0
        %v1069 = vadd.f32 0.0, %v1068
        %1070 = vdwg.mxu0
        %1071 = vrot.lane.b32.xlu0 %v1057, 8
        %v1072 = vpop.permute.xlu0 %1071
        %1073 = vrot.lane.b32.xlu0 %v1059, 8
        %v1074 = vpop.permute.xlu0 %1073
        %1075 = vrot.lane.b32.xlu0 %v1067, 120
        %v1076 = vpop.permute.xlu0 %1075
        %1077 = vrot.lane.b32.xlu0 %v1069, 120
        %v1078 = vpop.permute.xlu0 %1077
        %v1079 = vadd.f32 %v1072, %v1062
        %v1080 = vadd.f32 %v1074, %v1064
        %v1081 = vadd.f32 %v1079, %v1076
        %v1082 = vadd.f32 %v1080, %v1078
        %1084 = vset.pattern.permute.xlu0 0
        %1085 = vperm.xlu0 %1084, %v626
        %v1086 = vpop.permute.xlu0 %1085
        %1089 = vset.pattern.permute.xlu0 0
        %1090 = vperm.xlu0 %1089, %v627
        %v1091 = vpop.permute.xlu0 %1090
        %v1093 = vadd.f32 %v1081, %v1086
        %v1094 = vadd.f32 %v1082, %v1091
        %v1095 = vmax.f32 %v1093, 0.0
        %v1096 = vmax.f32 %v1094, 0.0
        %v1097 = vpack.c.bf16 %v1096, %v1095
        %1099 = vset.pattern.permute.xlu0 0
        %1100 = vperm.xlu0 %1099, %v642
        %v1101 = vpop.permute.xlu0 %1100
        %1104 = vset.pattern.permute.xlu0 0
        %1105 = vperm.xlu0 %1104, %v643
        %v1106 = vpop.permute.xlu0 %1105
        %v1110 = vunpack.c.l.b16 %v634
        %v1111 = vunpack.c.l.b16 %v635
        %v1112 = vpack.c.b16 %v1111, %v1110
        %v1114 = vsel %vm701, %v1112, 0
        %1116 = vmatpush.bf16.msra.mxu0 0
        %1117 = vmatpush.bf16.msra.mxu0 0
        %1118 = vmatpush.bf16.msra.mxu0 0
        %1119 = vmatpush.bf16.msra.mxu0 0
        %1120 = vmatpush.bf16.msra.mxu0 0
        %1121 = vmatpush.bf16.msra.mxu0 0
        %1122 = vmatpush.bf16.msra.mxu0 0
        %1123 = vmatpush.bf16.msra.mxu0 %v1097
        %1124 = vmatmul.bf16.gmra.mxu0 %v1114
        %v1125 = vpop.f32.mrf.mxu0
        %v1126 = vadd.f32 %v1101, %v1125
        %v1127 = vpop.f32.mrf.mxu0
        %v1128 = vadd.f32 %v1106, %v1127
        %1129 = vdwg.mxu0
        %v1130 = vadd.f32 %v1020, %v1126
        %v1131 = vadd.f32 %v1021, %v1128
        %v1132 = vmul.f32 %v1130, %v585
        %v1133 = vmul.f32 %v1131, %v585
        %v1134 = vpack.c.bf16 %v1133, %v1132
        %1136 = vset.pattern.permute.xlu0 0
        %1137 = vperm.xlu0 %1136, %v645
        %v1138 = vpop.permute.xlu0 %1137
        %v1141 = vsel %vm701, %v644, 0
        %1143 = vmatpush.bf16.msra.mxu0 0
        %1144 = vmatpush.bf16.msra.mxu0 0
        %1145 = vmatpush.bf16.msra.mxu0 0
        %1146 = vmatpush.bf16.msra.mxu0 0
        %1147 = vmatpush.bf16.msra.mxu0 0
        %1148 = vmatpush.bf16.msra.mxu0 0
        %1149 = vmatpush.bf16.msra.mxu0 0
        %1150 = vmatpush.bf16.msra.mxu0 %v1134
        %1151 = vmatmul.bf16.gmra.mxu0 %v1141
        %v1152 = vpop.f32.mrf.mxu0
        %v1153 = vadd.f32 %v1138, %v1152
        %v1154 = vpop.f32.mrf.mxu0
        %1155 = vdwg.mxu0
        %v1156 = vmul.f32 %v1153, %v585
        %1157 = vst [vmem:[%s573] sm:$0xff] %v1156
        %v1158 = vrot.slane %v1156, 4
        %v1159 = vmax.f32 %v1156, %v1158
        %v1160 = vrot.slane %v1159, 2
        %v1161 = vmax.f32 %v1159, %v1160
        %v1162 = vrot.slane %v1161, 1
        %v1163 = vmax.f32 %v1161, %v1162
        %v1164 = vsub.f32 %v1156, %v1163
        %v1165 = vmul.f32 %v1164, 1.442695
        %v1166 = vpow.pop %v1165
        %v1167 = vrot.slane %v1166, 4
        %v1168 = vadd.f32 %v1166, %v1167
        %v1169 = vrot.slane %v1168, 2
        %v1170 = vadd.f32 %v1168, %v1169
        %v1171 = vrot.slane %v1170, 1
        %v1172 = vadd.f32 %v1170, %v1171
        %v1173 = vrcp.pop %v1172
        %v1174 = vmul.f32 %v1166, %v1173
        %v1175 = vmul.f32 %v1174, %v585
        %v1176 = vpack.c.bf16 %v1175, %v1175
        %v1177 = vld [vmem:[%s10] sm:$0xf]
        %v1178 = vld [vmem:[%s10 + $0x4] sm:$0xf]
        %v1179 = vld [vmem:[%s11] sm:$0xff]
        %v1180 = vld [vmem:[%s11 + $0x8] sm:$0xff]
        %v1181 = vld [vmem:[%s12] sm:$0xf]
        %v1182 = vld [vmem:[%s12 + $0x4] sm:$0xf]
        %v1183 = vld [vmem:[%s12 + $0x8] sm:$0xf]
        %v1184 = vld [vmem:[%s12 + $0xc] sm:$0xf]
        %v1185 = vld [vmem:[%s12 + $0x10] sm:$0xf]
        %v1186 = vld [vmem:[%s12 + $0x14] sm:$0xf]
        %v1187 = vld [vmem:[%s12 + $0x18] sm:$0xf]
        %v1188 = vld [vmem:[%s12 + $0x1c] sm:$0xf]
        %v1189 = vld [vmem:[%s12 + $0x20] sm:$0xf]
        %v1190 = vld [vmem:[%s12 + $0x24] sm:$0xf]
        %v1191 = vld [vmem:[%s12 + $0x28] sm:$0xf]
        %v1192 = vld [vmem:[%s12 + $0x2c] sm:$0xf]
        %v1193 = vld [vmem:[%s12 + $0x30] sm:$0xf]
        %v1194 = vld [vmem:[%s12 + $0x34] sm:$0xf]
        %v1195 = vld [vmem:[%s12 + $0x38] sm:$0xf]
        %v1196 = vld [vmem:[%s12 + $0x3c] sm:$0xf]
        %v1197 = vld [vmem:[%s12 + $0x40] sm:$0xf]
        %v1198 = vld [vmem:[%s12 + $0x44] sm:$0xf]
        %v1199 = vld [vmem:[%s12 + $0x48] sm:$0xf]
        %v1200 = vld [vmem:[%s12 + $0x4c] sm:$0xf]
        %v1201 = vld [vmem:[%s12 + $0x50] sm:$0xf]
        %v1202 = vld [vmem:[%s12 + $0x54] sm:$0xf]
        %v1203 = vld [vmem:[%s12 + $0x58] sm:$0xf]
        %v1204 = vld [vmem:[%s12 + $0x5c] sm:$0xf]
        %v1205 = vld [vmem:[%s13] sm:$0xff]
        %v1206 = vld [vmem:[%s13 + $0x8] sm:$0xff]
        %v1207 = vld [vmem:[%s13 + $0x10] sm:$0xff]
        %v1208 = vld [vmem:[%s13 + $0x18] sm:$0xff]
        %v1209 = vld [vmem:[%s13 + $0x20] sm:$0xff]
        %v1210 = vld [vmem:[%s13 + $0x28] sm:$0xff]
        %v1211 = vld [vmem:[%s13 + $0x30] sm:$0xff]
        %v1212 = vld [vmem:[%s13 + $0x38] sm:$0xff]
        %v1213 = vld [vmem:[%s14] sm:$0xf]
        %v1214 = vld [vmem:[%s14 + $0x4] sm:$0xf]
        %v1215 = vld [vmem:[%s14 + $0x8] sm:$0xf]
        %v1216 = vld [vmem:[%s14 + $0xc] sm:$0xf]
        %v1217 = vld [vmem:[%s14 + $0x10] sm:$0xf]
        %v1218 = vld [vmem:[%s14 + $0x14] sm:$0xf]
        %v1219 = vld [vmem:[%s14 + $0x18] sm:$0xf]
        %v1220 = vld [vmem:[%s14 + $0x1c] sm:$0xf]
        %v1221 = vld [vmem:[%s15] sm:$0xff]
        %v1222 = vld [vmem:[%s15 + $0x8] sm:$0xff]
        %v1223 = vld [vmem:[%s15 + $0x10] sm:$0xff]
        %v1224 = vld [vmem:[%s15 + $0x18] sm:$0xff]
        %v1225 = vld [vmem:[%s15 + $0x20] sm:$0xff]
        %v1226 = vld [vmem:[%s15 + $0x28] sm:$0xff]
        %v1227 = vld [vmem:[%s15 + $0x30] sm:$0xff]
        %v1228 = vld [vmem:[%s15 + $0x38] sm:$0xff]
        %v1229 = vld [vmem:[%s16] sm:$0xf]
        %v1230 = vld [vmem:[%s17] sm:$0xff]
        %1232 = vset.pattern.permute.xlu0 0
        %1233 = vperm.xlu0 %1232, %v1179
        %v1234 = vpop.permute.xlu0 %1233
        %1237 = vset.pattern.permute.xlu0 0
        %1238 = vperm.xlu0 %1237, %v1180
        %v1239 = vpop.permute.xlu0 %1238
        %v1243 = vunpack.c.l.b16 %v1177
        %v1244 = vunpack.c.l.b16 %v1178
        %v1245 = vpack.c.b16 %v1244, %v1243
        %v1247 = vsel %vm661, %v1245, 0
        %v1250 = vsel %vm665, %v1176, 0
        %1252 = vmatpush.bf16.msra.mxu0 0
        %1253 = vmatpush.bf16.msra.mxu0 0
        %1254 = vmatpush.bf16.msra.mxu0 0
        %1255 = vmatpush.bf16.msra.mxu0 0
        %1256 = vmatpush.bf16.msra.mxu0 0
        %1257 = vmatpush.bf16.msra.mxu0 0
        %1258 = vmatpush.bf16.msra.mxu0 0
        %1259 = vmatpush.bf16.msra.mxu0 %v1250
        %1260 = vmatmul.bf16.gmra.mxu0 %v1247
        %v1261 = vpop.f32.mrf.mxu0
        %v1262 = vadd.f32 %v1234, %v1261
        %v1263 = vpop.f32.mrf.mxu0
        %v1264 = vadd.f32 %v1239, %v1263
        %1265 = vdwg.mxu0
        %v1266 = vmul.f32 %v1262, %v591
        %v1267 = vmul.f32 %v1264, %v591
        %v1268 = vpack.c.bf16 %v1267, %v1266
        %v1275 = vunpack.c.l.b16 %v1181
        %v1276 = vunpack.c.l.b16 %v1182
        %v1277 = vunpack.c.l.b16 %v1183
        %v1278 = vunpack.c.l.b16 %v1184
        %v1279 = vunpack.c.l.b16 %v1185
        %v1280 = vunpack.c.l.b16 %v1186
        %v1281 = vpack.c.b16 %v1276, %v1275
        %v1282 = vpack.c.b16 %v1278, %v1277
        %v1283 = vpack.c.b16 %v1280, %v1279
        %v1285 = vsel %vm701, %v1281, 0
        %v1288 = vsel %vm701, %v1282, 0
        %v1291 = vsel %vm701, %v1283, 0
        %1293 = vmatpush.bf16.msra.mxu0 0
        %1294 = vmatpush.bf16.msra.mxu0 0
        %1295 = vmatpush.bf16.msra.mxu0 0
        %1296 = vmatpush.bf16.msra.mxu0 0
        %1297 = vmatpush.bf16.msra.mxu0 0
        %1298 = vmatpush.bf16.msra.mxu0 0
        %1299 = vmatpush.bf16.msra.mxu0 0
        %1300 = vmatpush.bf16.msra.mxu0 %v1268
        %1301 = vmatmul.bf16.gmra.mxu0 %v1285
        %v1302 = vpop.f32.mrf.mxu0
        %v1303 = vadd.f32 0.0, %v1302
        %v1304 = vpop.f32.mrf.mxu0
        %v1305 = vadd.f32 0.0, %v1304
        %1306 = vmatmul.bf16.gmra.mxu0 %v1288
        %v1307 = vpop.f32.mrf.mxu0
        %v1308 = vadd.f32 0.0, %v1307
        %v1309 = vpop.f32.mrf.mxu0
        %v1310 = vadd.f32 0.0, %v1309
        %1311 = vmatmul.bf16.gmra.mxu0 %v1291
        %v1312 = vpop.f32.mrf.mxu0
        %v1313 = vadd.f32 0.0, %v1312
        %v1314 = vpop.f32.mrf.mxu0
        %v1315 = vadd.f32 0.0, %v1314
        %1316 = vdwg.mxu0
        %1317 = vrot.lane.b32.xlu0 %v1303, 1
        %v1318 = vpop.permute.xlu0 %1317
        %1319 = vrot.lane.b32.xlu0 %v1305, 1
        %v1320 = vpop.permute.xlu0 %1319
        %1321 = vrot.lane.b32.xlu0 %v1313, 127
        %v1322 = vpop.permute.xlu0 %1321
        %1323 = vrot.lane.b32.xlu0 %v1315, 127
        %v1324 = vpop.permute.xlu0 %1323
        %v1325 = vadd.f32 %v1318, %v1308
        %v1326 = vadd.f32 %v1320, %v1310
        %v1327 = vadd.f32 %v1325, %v1322
        %v1328 = vadd.f32 %v1326, %v1324
        %1330 = vset.pattern.permute.xlu0 0
        %1331 = vperm.xlu0 %1330, %v1205
        %v1332 = vpop.permute.xlu0 %1331
        %1335 = vset.pattern.permute.xlu0 0
        %1336 = vperm.xlu0 %1335, %v1206
        %v1337 = vpop.permute.xlu0 %1336
        %v1339 = vadd.f32 %v1327, %v1332
        %v1340 = vadd.f32 %v1328, %v1337
        %v1341 = vmax.f32 %v1339, 0.0
        %v1342 = vmax.f32 %v1340, 0.0
        %v1343 = vpack.c.bf16 %v1342, %v1341
        %1345 = vset.pattern.permute.xlu0 0
        %1346 = vperm.xlu0 %1345, %v1221
        %v1347 = vpop.permute.xlu0 %1346
        %1350 = vset.pattern.permute.xlu0 0
        %1351 = vperm.xlu0 %1350, %v1222
        %v1352 = vpop.permute.xlu0 %1351
        %v1356 = vunpack.c.l.b16 %v1213
        %v1357 = vunpack.c.l.b16 %v1214
        %v1358 = vpack.c.b16 %v1357, %v1356
        %v1360 = vsel %vm701, %v1358, 0
        %1362 = vmatpush.bf16.msra.mxu0 0
        %1363 = vmatpush.bf16.msra.mxu0 0
        %1364 = vmatpush.bf16.msra.mxu0 0
        %1365 = vmatpush.bf16.msra.mxu0 0
        %1366 = vmatpush.bf16.msra.mxu0 0
        %1367 = vmatpush.bf16.msra.mxu0 0
        %1368 = vmatpush.bf16.msra.mxu0 0
        %1369 = vmatpush.bf16.msra.mxu0 %v1343
        %1370 = vmatmul.bf16.gmra.mxu0 %v1360
        %v1371 = vpop.f32.mrf.mxu0
        %v1372 = vadd.f32 %v1347, %v1371
        %v1373 = vpop.f32.mrf.mxu0
        %v1374 = vadd.f32 %v1352, %v1373
        %1375 = vdwg.mxu0
        %v1376 = vadd.f32 %v1266, %v1372
        %v1377 = vadd.f32 %v1267, %v1374
        %v1378 = vmul.f32 %v1376, %v585
        %v1379 = vmul.f32 %v1377, %v585
        %v1380 = vpack.c.bf16 %v1379, %v1378
        %v1387 = vunpack.c.l.b16 %v1187
        %v1388 = vunpack.c.l.b16 %v1188
        %v1389 = vunpack.c.l.b16 %v1189
        %v1390 = vunpack.c.l.b16 %v1190
        %v1391 = vunpack.c.l.b16 %v1191
        %v1392 = vunpack.c.l.b16 %v1192
        %v1393 = vpack.c.b16 %v1388, %v1387
        %v1394 = vpack.c.b16 %v1390, %v1389
        %v1395 = vpack.c.b16 %v1392, %v1391
        %v1397 = vsel %vm701, %v1393, 0
        %v1400 = vsel %vm701, %v1394, 0
        %v1403 = vsel %vm701, %v1395, 0
        %1405 = vmatpush.bf16.msra.mxu0 0
        %1406 = vmatpush.bf16.msra.mxu0 0
        %1407 = vmatpush.bf16.msra.mxu0 0
        %1408 = vmatpush.bf16.msra.mxu0 0
        %1409 = vmatpush.bf16.msra.mxu0 0
        %1410 = vmatpush.bf16.msra.mxu0 0
        %1411 = vmatpush.bf16.msra.mxu0 0
        %1412 = vmatpush.bf16.msra.mxu0 %v1380
        %1413 = vmatmul.bf16.gmra.mxu0 %v1397
        %v1414 = vpop.f32.mrf.mxu0
        %v1415 = vadd.f32 0.0, %v1414
        %v1416 = vpop.f32.mrf.mxu0
        %v1417 = vadd.f32 0.0, %v1416
        %1418 = vmatmul.bf16.gmra.mxu0 %v1400
        %v1419 = vpop.f32.mrf.mxu0
        %v1420 = vadd.f32 0.0, %v1419
        %v1421 = vpop.f32.mrf.mxu0
        %v1422 = vadd.f32 0.0, %v1421
        %1423 = vmatmul.bf16.gmra.mxu0 %v1403
        %v1424 = vpop.f32.mrf.mxu0
        %v1425 = vadd.f32 0.0, %v1424
        %v1426 = vpop.f32.mrf.mxu0
        %v1427 = vadd.f32 0.0, %v1426
        %1428 = vdwg.mxu0
        %1429 = vrot.lane.b32.xlu0 %v1415, 2
        %v1430 = vpop.permute.xlu0 %1429
        %1431 = vrot.lane.b32.xlu0 %v1417, 2
        %v1432 = vpop.permute.xlu0 %1431
        %1433 = vrot.lane.b32.xlu0 %v1425, 126
        %v1434 = vpop.permute.xlu0 %1433
        %1435 = vrot.lane.b32.xlu0 %v1427, 126
        %v1436 = vpop.permute.xlu0 %1435
        %v1437 = vadd.f32 %v1430, %v1420
        %v1438 = vadd.f32 %v1432, %v1422
        %v1439 = vadd.f32 %v1437, %v1434
        %v1440 = vadd.f32 %v1438, %v1436
        %1442 = vset.pattern.permute.xlu0 0
        %1443 = vperm.xlu0 %1442, %v1207
        %v1444 = vpop.permute.xlu0 %1443
        %1447 = vset.pattern.permute.xlu0 0
        %1448 = vperm.xlu0 %1447, %v1208
        %v1449 = vpop.permute.xlu0 %1448
        %v1451 = vadd.f32 %v1439, %v1444
        %v1452 = vadd.f32 %v1440, %v1449
        %v1453 = vmax.f32 %v1451, 0.0
        %v1454 = vmax.f32 %v1452, 0.0
        %v1455 = vpack.c.bf16 %v1454, %v1453
        %1457 = vset.pattern.permute.xlu0 0
        %1458 = vperm.xlu0 %1457, %v1223
        %v1459 = vpop.permute.xlu0 %1458
        %1462 = vset.pattern.permute.xlu0 0
        %1463 = vperm.xlu0 %1462, %v1224
        %v1464 = vpop.permute.xlu0 %1463
        %v1468 = vunpack.c.l.b16 %v1215
        %v1469 = vunpack.c.l.b16 %v1216
        %v1470 = vpack.c.b16 %v1469, %v1468
        %v1472 = vsel %vm701, %v1470, 0
        %1474 = vmatpush.bf16.msra.mxu0 0
        %1475 = vmatpush.bf16.msra.mxu0 0
        %1476 = vmatpush.bf16.msra.mxu0 0
        %1477 = vmatpush.bf16.msra.mxu0 0
        %1478 = vmatpush.bf16.msra.mxu0 0
        %1479 = vmatpush.bf16.msra.mxu0 0
        %1480 = vmatpush.bf16.msra.mxu0 0
        %1481 = vmatpush.bf16.msra.mxu0 %v1455
        %1482 = vmatmul.bf16.gmra.mxu0 %v1472
        %v1483 = vpop.f32.mrf.mxu0
        %v1484 = vadd.f32 %v1459, %v1483
        %v1485 = vpop.f32.mrf.mxu0
        %v1486 = vadd.f32 %v1464, %v1485
        %1487 = vdwg.mxu0
        %v1488 = vadd.f32 %v1378, %v1484
        %v1489 = vadd.f32 %v1379, %v1486
        %v1490 = vmul.f32 %v1488, %v585
        %v1491 = vmul.f32 %v1489, %v585
        %v1492 = vpack.c.bf16 %v1491, %v1490
        %v1499 = vunpack.c.l.b16 %v1193
        %v1500 = vunpack.c.l.b16 %v1194
        %v1501 = vunpack.c.l.b16 %v1195
        %v1502 = vunpack.c.l.b16 %v1196
        %v1503 = vunpack.c.l.b16 %v1197
        %v1504 = vunpack.c.l.b16 %v1198
        %v1505 = vpack.c.b16 %v1500, %v1499
        %v1506 = vpack.c.b16 %v1502, %v1501
        %v1507 = vpack.c.b16 %v1504, %v1503
        %v1509 = vsel %vm701, %v1505, 0
        %v1512 = vsel %vm701, %v1506, 0
        %v1515 = vsel %vm701, %v1507, 0
        %1517 = vmatpush.bf16.msra.mxu0 0
        %1518 = vmatpush.bf16.msra.mxu0 0
        %1519 = vmatpush.bf16.msra.mxu0 0
        %1520 = vmatpush.bf16.msra.mxu0 0
        %1521 = vmatpush.bf16.msra.mxu0 0
        %1522 = vmatpush.bf16.msra.mxu0 0
        %1523 = vmatpush.bf16.msra.mxu0 0
        %1524 = vmatpush.bf16.msra.mxu0 %v1492
        %1525 = vmatmul.bf16.gmra.mxu0 %v1509
        %v1526 = vpop.f32.mrf.mxu0
        %v1527 = vadd.f32 0.0, %v1526
        %v1528 = vpop.f32.mrf.mxu0
        %v1529 = vadd.f32 0.0, %v1528
        %1530 = vmatmul.bf16.gmra.mxu0 %v1512
        %v1531 = vpop.f32.mrf.mxu0
        %v1532 = vadd.f32 0.0, %v1531
        %v1533 = vpop.f32.mrf.mxu0
        %v1534 = vadd.f32 0.0, %v1533
        %1535 = vmatmul.bf16.gmra.mxu0 %v1515
        %v1536 = vpop.f32.mrf.mxu0
        %v1537 = vadd.f32 0.0, %v1536
        %v1538 = vpop.f32.mrf.mxu0
        %v1539 = vadd.f32 0.0, %v1538
        %1540 = vdwg.mxu0
        %1541 = vrot.lane.b32.xlu0 %v1527, 4
        %v1542 = vpop.permute.xlu0 %1541
        %1543 = vrot.lane.b32.xlu0 %v1529, 4
        %v1544 = vpop.permute.xlu0 %1543
        %1545 = vrot.lane.b32.xlu0 %v1537, 124
        %v1546 = vpop.permute.xlu0 %1545
        %1547 = vrot.lane.b32.xlu0 %v1539, 124
        %v1548 = vpop.permute.xlu0 %1547
        %v1549 = vadd.f32 %v1542, %v1532
        %v1550 = vadd.f32 %v1544, %v1534
        %v1551 = vadd.f32 %v1549, %v1546
        %v1552 = vadd.f32 %v1550, %v1548
        %1554 = vset.pattern.permute.xlu0 0
        %1555 = vperm.xlu0 %1554, %v1209
        %v1556 = vpop.permute.xlu0 %1555
        %1559 = vset.pattern.permute.xlu0 0
        %1560 = vperm.xlu0 %1559, %v1210
        %v1561 = vpop.permute.xlu0 %1560
        %v1563 = vadd.f32 %v1551, %v1556
        %v1564 = vadd.f32 %v1552, %v1561
        %v1565 = vmax.f32 %v1563, 0.0
        %v1566 = vmax.f32 %v1564, 0.0
        %v1567 = vpack.c.bf16 %v1566, %v1565
        %1569 = vset.pattern.permute.xlu0 0
        %1570 = vperm.xlu0 %1569, %v1225
        %v1571 = vpop.permute.xlu0 %1570
        %1574 = vset.pattern.permute.xlu0 0
        %1575 = vperm.xlu0 %1574, %v1226
        %v1576 = vpop.permute.xlu0 %1575
        %v1580 = vunpack.c.l.b16 %v1217
        %v1581 = vunpack.c.l.b16 %v1218
        %v1582 = vpack.c.b16 %v1581, %v1580
        %v1584 = vsel %vm701, %v1582, 0
        %1586 = vmatpush.bf16.msra.mxu0 0
        %1587 = vmatpush.bf16.msra.mxu0 0
        %1588 = vmatpush.bf16.msra.mxu0 0
        %1589 = vmatpush.bf16.msra.mxu0 0
        %1590 = vmatpush.bf16.msra.mxu0 0
        %1591 = vmatpush.bf16.msra.mxu0 0
        %1592 = vmatpush.bf16.msra.mxu0 0
        %1593 = vmatpush.bf16.msra.mxu0 %v1567
        %1594 = vmatmul.bf16.gmra.mxu0 %v1584
        %v1595 = vpop.f32.mrf.mxu0
        %v1596 = vadd.f32 %v1571, %v1595
        %v1597 = vpop.f32.mrf.mxu0
        %v1598 = vadd.f32 %v1576, %v1597
        %1599 = vdwg.mxu0
        %v1600 = vadd.f32 %v1490, %v1596
        %v1601 = vadd.f32 %v1491, %v1598
        %v1602 = vmul.f32 %v1600, %v585
        %v1603 = vmul.f32 %v1601, %v585
        %v1604 = vpack.c.bf16 %v1603, %v1602
        %v1611 = vunpack.c.l.b16 %v1199
        %v1612 = vunpack.c.l.b16 %v1200
        %v1613 = vunpack.c.l.b16 %v1201
        %v1614 = vunpack.c.l.b16 %v1202
        %v1615 = vunpack.c.l.b16 %v1203
        %v1616 = vunpack.c.l.b16 %v1204
        %v1617 = vpack.c.b16 %v1612, %v1611
        %v1618 = vpack.c.b16 %v1614, %v1613
        %v1619 = vpack.c.b16 %v1616, %v1615
        %v1621 = vsel %vm701, %v1617, 0
        %v1624 = vsel %vm701, %v1618, 0
        %v1627 = vsel %vm701, %v1619, 0
        %1629 = vmatpush.bf16.msra.mxu0 0
        %1630 = vmatpush.bf16.msra.mxu0 0
        %1631 = vmatpush.bf16.msra.mxu0 0
        %1632 = vmatpush.bf16.msra.mxu0 0
        %1633 = vmatpush.bf16.msra.mxu0 0
        %1634 = vmatpush.bf16.msra.mxu0 0
        %1635 = vmatpush.bf16.msra.mxu0 0
        %1636 = vmatpush.bf16.msra.mxu0 %v1604
        %1637 = vmatmul.bf16.gmra.mxu0 %v1621
        %v1638 = vpop.f32.mrf.mxu0
        %v1639 = vadd.f32 0.0, %v1638
        %v1640 = vpop.f32.mrf.mxu0
        %v1641 = vadd.f32 0.0, %v1640
        %1642 = vmatmul.bf16.gmra.mxu0 %v1624
        %v1643 = vpop.f32.mrf.mxu0
        %v1644 = vadd.f32 0.0, %v1643
        %v1645 = vpop.f32.mrf.mxu0
        %v1646 = vadd.f32 0.0, %v1645
        %1647 = vmatmul.bf16.gmra.mxu0 %v1627
        %v1648 = vpop.f32.mrf.mxu0
        %v1649 = vadd.f32 0.0, %v1648
        %v1650 = vpop.f32.mrf.mxu0
        %v1651 = vadd.f32 0.0, %v1650
        %1652 = vdwg.mxu0
        %1653 = vrot.lane.b32.xlu0 %v1639, 8
        %v1654 = vpop.permute.xlu0 %1653
        %1655 = vrot.lane.b32.xlu0 %v1641, 8
        %v1656 = vpop.permute.xlu0 %1655
        %1657 = vrot.lane.b32.xlu0 %v1649, 120
        %v1658 = vpop.permute.xlu0 %1657
        %1659 = vrot.lane.b32.xlu0 %v1651, 120
        %v1660 = vpop.permute.xlu0 %1659
        %v1661 = vadd.f32 %v1654, %v1644
        %v1662 = vadd.f32 %v1656, %v1646
        %v1663 = vadd.f32 %v1661, %v1658
        %v1664 = vadd.f32 %v1662, %v1660
        %1666 = vset.pattern.permute.xlu0 0
        %1667 = vperm.xlu0 %1666, %v1211
        %v1668 = vpop.permute.xlu0 %1667
        %1671 = vset.pattern.permute.xlu0 0
        %1672 = vperm.xlu0 %1671, %v1212
        %v1673 = vpop.permute.xlu0 %1672
        %v1675 = vadd.f32 %v1663, %v1668
        %v1676 = vadd.f32 %v1664, %v1673
        %v1677 = vmax.f32 %v1675, 0.0
        %v1678 = vmax.f32 %v1676, 0.0
        %v1679 = vpack.c.bf16 %v1678, %v1677
        %1681 = vset.pattern.permute.xlu0 0
        %1682 = vperm.xlu0 %1681, %v1227
        %v1683 = vpop.permute.xlu0 %1682
        %1686 = vset.pattern.permute.xlu0 0
        %1687 = vperm.xlu0 %1686, %v1228
        %v1688 = vpop.permute.xlu0 %1687
        %v1692 = vunpack.c.l.b16 %v1219
        %v1693 = vunpack.c.l.b16 %v1220
        %v1694 = vpack.c.b16 %v1693, %v1692
        %v1696 = vsel %vm701, %v1694, 0
        %1698 = vmatpush.bf16.msra.mxu0 0
        %1699 = vmatpush.bf16.msra.mxu0 0
        %1700 = vmatpush.bf16.msra.mxu0 0
        %1701 = vmatpush.bf16.msra.mxu0 0
        %1702 = vmatpush.bf16.msra.mxu0 0
        %1703 = vmatpush.bf16.msra.mxu0 0
        %1704 = vmatpush.bf16.msra.mxu0 0
        %1705 = vmatpush.bf16.msra.mxu0 %v1679
        %1706 = vmatmul.bf16.gmra.mxu0 %v1696
        %v1707 = vpop.f32.mrf.mxu0
        %v1708 = vadd.f32 %v1683, %v1707
        %v1709 = vpop.f32.mrf.mxu0
        %v1710 = vadd.f32 %v1688, %v1709
        %1711 = vdwg.mxu0
        %v1712 = vadd.f32 %v1602, %v1708
        %v1713 = vadd.f32 %v1603, %v1710
        %v1714 = vmul.f32 %v1712, %v585
        %v1715 = vmul.f32 %v1713, %v585
        %v1716 = vpack.c.bf16 %v1715, %v1714
        %1718 = vset.pattern.permute.xlu0 0
        %1719 = vperm.xlu0 %1718, %v1230
        %v1720 = vpop.permute.xlu0 %1719
        %v1723 = vsel %vm701, %v1229, 0
        %1725 = vmatpush.bf16.msra.mxu0 0
        %1726 = vmatpush.bf16.msra.mxu0 0
        %1727 = vmatpush.bf16.msra.mxu0 0
        %1728 = vmatpush.bf16.msra.mxu0 0
        %1729 = vmatpush.bf16.msra.mxu0 0
        %1730 = vmatpush.bf16.msra.mxu0 0
        %1731 = vmatpush.bf16.msra.mxu0 0
        %1732 = vmatpush.bf16.msra.mxu0 %v1716
        %1733 = vmatmul.bf16.gmra.mxu0 %v1723
        %v1734 = vpop.f32.mrf.mxu0
        %v1735 = vadd.f32 %v1720, %v1734
        %v1736 = vpop.f32.mrf.mxu0
        %1737 = vdwg.mxu0
        %v1738 = vmul.f32 %v1735, %v585
        %s1739 = scalar_lea.vmem %s573, 8 [#allocation2]
        %1740 = vst [vmem:[%s1739] sm:$0xff] %v1738
        %v1741 = vrot.slane %v1738, 4
        %v1742 = vmax.f32 %v1738, %v1741
        %v1743 = vrot.slane %v1742, 2
        %v1744 = vmax.f32 %v1742, %v1743
        %v1745 = vrot.slane %v1744, 1
        %v1746 = vmax.f32 %v1744, %v1745
        %v1747 = vsub.f32 %v1738, %v1746
        %v1748 = vmul.f32 %v1747, 1.442695
        %v1749 = vpow.pop %v1748
        %v1750 = vrot.slane %v1749, 4
        %v1751 = vadd.f32 %v1749, %v1750
        %v1752 = vrot.slane %v1751, 2
        %v1753 = vadd.f32 %v1751, %v1752
        %v1754 = vrot.slane %v1753, 1
        %v1755 = vadd.f32 %v1753, %v1754
        %v1756 = vrcp.pop %v1755
        %v1757 = vmul.f32 %v1749, %v1756
        %v1758 = vmul.f32 %v1757, %v585
        %v1759 = vpack.c.bf16 %v1758, %v1758
        %s1760 = scalar_lea.vmem %s10, 8
        %v1761 = vld [vmem:[%s1760] sm:$0xf]
        %v1762 = vld [vmem:[%s1760 + $0x4] sm:$0xf]
        %s1763 = scalar_lea.vmem %s11, 16
        %v1764 = vld [vmem:[%s1763] sm:$0xff]
        %v1765 = vld [vmem:[%s1763 + $0x8] sm:$0xff]
        %s1766 = scalar_lea.vmem %s12, 96
        %v1767 = vld [vmem:[%s1766] sm:$0xf]
        %v1768 = vld [vmem:[%s1766 + $0x4] sm:$0xf]
        %v1769 = vld [vmem:[%s1766 + $0x8] sm:$0xf]
        %v1770 = vld [vmem:[%s1766 + $0xc] sm:$0xf]
        %v1771 = vld [vmem:[%s1766 + $0x10] sm:$0xf]
        %v1772 = vld [vmem:[%s1766 + $0x14] sm:$0xf]
        %v1773 = vld [vmem:[%s1766 + $0x18] sm:$0xf]
        %v1774 = vld [vmem:[%s1766 + $0x1c] sm:$0xf]
        %v1775 = vld [vmem:[%s1766 + $0x20] sm:$0xf]
        %v1776 = vld [vmem:[%s1766 + $0x24] sm:$0xf]
        %v1777 = vld [vmem:[%s1766 + $0x28] sm:$0xf]
        %v1778 = vld [vmem:[%s1766 + $0x2c] sm:$0xf]
        %v1779 = vld [vmem:[%s1766 + $0x30] sm:$0xf]
        %v1780 = vld [vmem:[%s1766 + $0x34] sm:$0xf]
        %v1781 = vld [vmem:[%s1766 + $0x38] sm:$0xf]
        %v1782 = vld [vmem:[%s1766 + $0x3c] sm:$0xf]
        %v1783 = vld [vmem:[%s1766 + $0x40] sm:$0xf]
        %v1784 = vld [vmem:[%s1766 + $0x44] sm:$0xf]
        %v1785 = vld [vmem:[%s1766 + $0x48] sm:$0xf]
        %v1786 = vld [vmem:[%s1766 + $0x4c] sm:$0xf]
        %v1787 = vld [vmem:[%s1766 + $0x50] sm:$0xf]
        %v1788 = vld [vmem:[%s1766 + $0x54] sm:$0xf]
        %v1789 = vld [vmem:[%s1766 + $0x58] sm:$0xf]
        %v1790 = vld [vmem:[%s1766 + $0x5c] sm:$0xf]
        %s1791 = scalar_lea.vmem %s13, 64
        %v1792 = vld [vmem:[%s1791] sm:$0xff]
        %v1793 = vld [vmem:[%s1791 + $0x8] sm:$0xff]
        %v1794 = vld [vmem:[%s1791 + $0x10] sm:$0xff]
        %v1795 = vld [vmem:[%s1791 + $0x18] sm:$0xff]
        %v1796 = vld [vmem:[%s1791 + $0x20] sm:$0xff]
        %v1797 = vld [vmem:[%s1791 + $0x28] sm:$0xff]
        %v1798 = vld [vmem:[%s1791 + $0x30] sm:$0xff]
        %v1799 = vld [vmem:[%s1791 + $0x38] sm:$0xff]
        %s1800 = scalar_lea.vmem %s14, 32
        %v1801 = vld [vmem:[%s1800] sm:$0xf]
        %v1802 = vld [vmem:[%s1800 + $0x4] sm:$0xf]
        %v1803 = vld [vmem:[%s1800 + $0x8] sm:$0xf]
        %v1804 = vld [vmem:[%s1800 + $0xc] sm:$0xf]
        %v1805 = vld [vmem:[%s1800 + $0x10] sm:$0xf]
        %v1806 = vld [vmem:[%s1800 + $0x14] sm:$0xf]
        %v1807 = vld [vmem:[%s1800 + $0x18] sm:$0xf]
        %v1808 = vld [vmem:[%s1800 + $0x1c] sm:$0xf]
        %s1809 = scalar_lea.vmem %s15, 64
        %v1810 = vld [vmem:[%s1809] sm:$0xff]
        %v1811 = vld [vmem:[%s1809 + $0x8] sm:$0xff]
        %v1812 = vld [vmem:[%s1809 + $0x10] sm:$0xff]
        %v1813 = vld [vmem:[%s1809 + $0x18] sm:$0xff]
        %v1814 = vld [vmem:[%s1809 + $0x20] sm:$0xff]
        %v1815 = vld [vmem:[%s1809 + $0x28] sm:$0xff]
        %v1816 = vld [vmem:[%s1809 + $0x30] sm:$0xff]
        %v1817 = vld [vmem:[%s1809 + $0x38] sm:$0xff]
        %s1818 = scalar_lea.vmem %s16, 4
        %v1819 = vld [vmem:[%s1818] sm:$0xf]
        %s1820 = scalar_lea.vmem %s17, 8
        %v1821 = vld [vmem:[%s1820] sm:$0xff]
        %1823 = vset.pattern.permute.xlu0 0
        %1824 = vperm.xlu0 %1823, %v1764
        %v1825 = vpop.permute.xlu0 %1824
        %1828 = vset.pattern.permute.xlu0 0
        %1829 = vperm.xlu0 %1828, %v1765
        %v1830 = vpop.permute.xlu0 %1829
        %v1834 = vunpack.c.l.b16 %v1761
        %v1835 = vunpack.c.l.b16 %v1762
        %v1836 = vpack.c.b16 %v1835, %v1834
        %v1838 = vsel %vm661, %v1836, 0
        %v1841 = vsel %vm665, %v1759, 0
        %1843 = vmatpush.bf16.msra.mxu0 0
        %1844 = vmatpush.bf16.msra.mxu0 0
        %1845 = vmatpush.bf16.msra.mxu0 0
        %1846 = vmatpush.bf16.msra.mxu0 0
        %1847 = vmatpush.bf16.msra.mxu0 0
        %1848 = vmatpush.bf16.msra.mxu0 0
        %1849 = vmatpush.bf16.msra.mxu0 0
        %1850 = vmatpush.bf16.msra.mxu0 %v1841
        %1851 = vmatmul.bf16.gmra.mxu0 %v1838
        %v1852 = vpop.f32.mrf.mxu0
        %v1853 = vadd.f32 %v1825, %v1852
        %v1854 = vpop.f32.mrf.mxu0
        %v1855 = vadd.f32 %v1830, %v1854
        %1856 = vdwg.mxu0
        %v1857 = vmul.f32 %v1853, %v591
        %v1858 = vmul.f32 %v1855, %v591
        %v1859 = vpack.c.bf16 %v1858, %v1857
        %v1866 = vunpack.c.l.b16 %v1767
        %v1867 = vunpack.c.l.b16 %v1768
        %v1868 = vunpack.c.l.b16 %v1769
        %v1869 = vunpack.c.l.b16 %v1770
        %v1870 = vunpack.c.l.b16 %v1771
        %v1871 = vunpack.c.l.b16 %v1772
        %v1872 = vpack.c.b16 %v1867, %v1866
        %v1873 = vpack.c.b16 %v1869, %v1868
        %v1874 = vpack.c.b16 %v1871, %v1870
        %v1876 = vsel %vm701, %v1872, 0
        %v1879 = vsel %vm701, %v1873, 0
        %v1882 = vsel %vm701, %v1874, 0
        %1884 = vmatpush.bf16.msra.mxu0 0
        %1885 = vmatpush.bf16.msra.mxu0 0
        %1886 = vmatpush.bf16.msra.mxu0 0
        %1887 = vmatpush.bf16.msra.mxu0 0
        %1888 = vmatpush.bf16.msra.mxu0 0
        %1889 = vmatpush.bf16.msra.mxu0 0
        %1890 = vmatpush.bf16.msra.mxu0 0
        %1891 = vmatpush.bf16.msra.mxu0 %v1859
        %1892 = vmatmul.bf16.gmra.mxu0 %v1876
        %v1893 = vpop.f32.mrf.mxu0
        %v1894 = vadd.f32 0.0, %v1893
        %v1895 = vpop.f32.mrf.mxu0
        %v1896 = vadd.f32 0.0, %v1895
        %1897 = vmatmul.bf16.gmra.mxu0 %v1879
        %v1898 = vpop.f32.mrf.mxu0
        %v1899 = vadd.f32 0.0, %v1898
        %v1900 = vpop.f32.mrf.mxu0
        %v1901 = vadd.f32 0.0, %v1900
        %1902 = vmatmul.bf16.gmra.mxu0 %v1882
        %v1903 = vpop.f32.mrf.mxu0
        %v1904 = vadd.f32 0.0, %v1903
        %v1905 = vpop.f32.mrf.mxu0
        %v1906 = vadd.f32 0.0, %v1905
        %1907 = vdwg.mxu0
        %1908 = vrot.lane.b32.xlu0 %v1894, 1
        %v1909 = vpop.permute.xlu0 %1908
        %1910 = vrot.lane.b32.xlu0 %v1896, 1
        %v1911 = vpop.permute.xlu0 %1910
        %1912 = vrot.lane.b32.xlu0 %v1904, 127
        %v1913 = vpop.permute.xlu0 %1912
        %1914 = vrot.lane.b32.xlu0 %v1906, 127
        %v1915 = vpop.permute.xlu0 %1914
        %v1916 = vadd.f32 %v1909, %v1899
        %v1917 = vadd.f32 %v1911, %v1901
        %v1918 = vadd.f32 %v1916, %v1913
        %v1919 = vadd.f32 %v1917, %v1915
        %1921 = vset.pattern.permute.xlu0 0
        %1922 = vperm.xlu0 %1921, %v1792
        %v1923 = vpop.permute.xlu0 %1922
        %1926 = vset.pattern.permute.xlu0 0
        %1927 = vperm.xlu0 %1926, %v1793
        %v1928 = vpop.permute.xlu0 %1927
        %v1930 = vadd.f32 %v1918, %v1923
        %v1931 = vadd.f32 %v1919, %v1928
        %v1932 = vmax.f32 %v1930, 0.0
        %v1933 = vmax.f32 %v1931, 0.0
        %v1934 = vpack.c.bf16 %v1933, %v1932
        %1936 = vset.pattern.permute.xlu0 0
        %1937 = vperm.xlu0 %1936, %v1810
        %v1938 = vpop.permute.xlu0 %1937
        %1941 = vset.pattern.permute.xlu0 0
        %1942 = vperm.xlu0 %1941, %v1811
        %v1943 = vpop.permute.xlu0 %1942
        %v1947 = vunpack.c.l.b16 %v1801
        %v1948 = vunpack.c.l.b16 %v1802
        %v1949 = vpack.c.b16 %v1948, %v1947
        %v1951 = vsel %vm701, %v1949, 0
        %1953 = vmatpush.bf16.msra.mxu0 0
        %1954 = vmatpush.bf16.msra.mxu0 0
        %1955 = vmatpush.bf16.msra.mxu0 0
        %1956 = vmatpush.bf16.msra.mxu0 0
        %1957 = vmatpush.bf16.msra.mxu0 0
        %1958 = vmatpush.bf16.msra.mxu0 0
        %1959 = vmatpush.bf16.msra.mxu0 0
        %1960 = vmatpush.bf16.msra.mxu0 %v1934
        %1961 = vmatmul.bf16.gmra.mxu0 %v1951
        %v1962 = vpop.f32.mrf.mxu0
        %v1963 = vadd.f32 %v1938, %v1962
        %v1964 = vpop.f32.mrf.mxu0
        %v1965 = vadd.f32 %v1943, %v1964
        %1966 = vdwg.mxu0
        %v1967 = vadd.f32 %v1857, %v1963
        %v1968 = vadd.f32 %v1858, %v1965
        %v1969 = vmul.f32 %v1967, %v585
        %v1970 = vmul.f32 %v1968, %v585
        %v1971 = vpack.c.bf16 %v1970, %v1969
        %v1978 = vunpack.c.l.b16 %v1773
        %v1979 = vunpack.c.l.b16 %v1774
        %v1980 = vunpack.c.l.b16 %v1775
        %v1981 = vunpack.c.l.b16 %v1776
        %v1982 = vunpack.c.l.b16 %v1777
        %v1983 = vunpack.c.l.b16 %v1778
        %v1984 = vpack.c.b16 %v1979, %v1978
        %v1985 = vpack.c.b16 %v1981, %v1980
        %v1986 = vpack.c.b16 %v1983, %v1982
        %v1988 = vsel %vm701, %v1984, 0
        %v1991 = vsel %vm701, %v1985, 0
        %v1994 = vsel %vm701, %v1986, 0
        %1996 = vmatpush.bf16.msra.mxu0 0
        %1997 = vmatpush.bf16.msra.mxu0 0
        %1998 = vmatpush.bf16.msra.mxu0 0
        %1999 = vmatpush.bf16.msra.mxu0 0
        %2000 = vmatpush.bf16.msra.mxu0 0
        %2001 = vmatpush.bf16.msra.mxu0 0
        %2002 = vmatpush.bf16.msra.mxu0 0
        %2003 = vmatpush.bf16.msra.mxu0 %v1971
        %2004 = vmatmul.bf16.gmra.mxu0 %v1988
        %v2005 = vpop.f32.mrf.mxu0
        %v2006 = vadd.f32 0.0, %v2005
        %v2007 = vpop.f32.mrf.mxu0
        %v2008 = vadd.f32 0.0, %v2007
        %2009 = vmatmul.bf16.gmra.mxu0 %v1991
        %v2010 = vpop.f32.mrf.mxu0
        %v2011 = vadd.f32 0.0, %v2010
        %v2012 = vpop.f32.mrf.mxu0
        %v2013 = vadd.f32 0.0, %v2012
        %2014 = vmatmul.bf16.gmra.mxu0 %v1994
        %v2015 = vpop.f32.mrf.mxu0
        %v2016 = vadd.f32 0.0, %v2015
        %v2017 = vpop.f32.mrf.mxu0
        %v2018 = vadd.f32 0.0, %v2017
        %2019 = vdwg.mxu0
        %2020 = vrot.lane.b32.xlu0 %v2006, 2
        %v2021 = vpop.permute.xlu0 %2020
        %2022 = vrot.lane.b32.xlu0 %v2008, 2
        %v2023 = vpop.permute.xlu0 %2022
        %2024 = vrot.lane.b32.xlu0 %v2016, 126
        %v2025 = vpop.permute.xlu0 %2024
        %2026 = vrot.lane.b32.xlu0 %v2018, 126
        %v2027 = vpop.permute.xlu0 %2026
        %v2028 = vadd.f32 %v2021, %v2011
        %v2029 = vadd.f32 %v2023, %v2013
        %v2030 = vadd.f32 %v2028, %v2025
        %v2031 = vadd.f32 %v2029, %v2027
        %2033 = vset.pattern.permute.xlu0 0
        %2034 = vperm.xlu0 %2033, %v1794
        %v2035 = vpop.permute.xlu0 %2034
        %2038 = vset.pattern.permute.xlu0 0
        %2039 = vperm.xlu0 %2038, %v1795
        %v2040 = vpop.permute.xlu0 %2039
        %v2042 = vadd.f32 %v2030, %v2035
        %v2043 = vadd.f32 %v2031, %v2040
        %v2044 = vmax.f32 %v2042, 0.0
        %v2045 = vmax.f32 %v2043, 0.0
        %v2046 = vpack.c.bf16 %v2045, %v2044
        %2048 = vset.pattern.permute.xlu0 0
        %2049 = vperm.xlu0 %2048, %v1812
        %v2050 = vpop.permute.xlu0 %2049
        %2053 = vset.pattern.permute.xlu0 0
        %2054 = vperm.xlu0 %2053, %v1813
        %v2055 = vpop.permute.xlu0 %2054
        %v2059 = vunpack.c.l.b16 %v1803
        %v2060 = vunpack.c.l.b16 %v1804
        %v2061 = vpack.c.b16 %v2060, %v2059
        %v2063 = vsel %vm701, %v2061, 0
        %2065 = vmatpush.bf16.msra.mxu0 0
        %2066 = vmatpush.bf16.msra.mxu0 0
        %2067 = vmatpush.bf16.msra.mxu0 0
        %2068 = vmatpush.bf16.msra.mxu0 0
        %2069 = vmatpush.bf16.msra.mxu0 0
        %2070 = vmatpush.bf16.msra.mxu0 0
        %2071 = vmatpush.bf16.msra.mxu0 0
        %2072 = vmatpush.bf16.msra.mxu0 %v2046
        %2073 = vmatmul.bf16.gmra.mxu0 %v2063
        %v2074 = vpop.f32.mrf.mxu0
        %v2075 = vadd.f32 %v2050, %v2074
        %v2076 = vpop.f32.mrf.mxu0
        %v2077 = vadd.f32 %v2055, %v2076
        %2078 = vdwg.mxu0
        %v2079 = vadd.f32 %v1969, %v2075
        %v2080 = vadd.f32 %v1970, %v2077
        %v2081 = vmul.f32 %v2079, %v585
        %v2082 = vmul.f32 %v2080, %v585
        %v2083 = vpack.c.bf16 %v2082, %v2081
        %v2090 = vunpack.c.l.b16 %v1779
        %v2091 = vunpack.c.l.b16 %v1780
        %v2092 = vunpack.c.l.b16 %v1781
        %v2093 = vunpack.c.l.b16 %v1782
        %v2094 = vunpack.c.l.b16 %v1783
        %v2095 = vunpack.c.l.b16 %v1784
        %v2096 = vpack.c.b16 %v2091, %v2090
        %v2097 = vpack.c.b16 %v2093, %v2092
        %v2098 = vpack.c.b16 %v2095, %v2094
        %v2100 = vsel %vm701, %v2096, 0
        %v2103 = vsel %vm701, %v2097, 0
        %v2106 = vsel %vm701, %v2098, 0
        %2108 = vmatpush.bf16.msra.mxu0 0
        %2109 = vmatpush.bf16.msra.mxu0 0
        %2110 = vmatpush.bf16.msra.mxu0 0
        %2111 = vmatpush.bf16.msra.mxu0 0
        %2112 = vmatpush.bf16.msra.mxu0 0
        %2113 = vmatpush.bf16.msra.mxu0 0
        %2114 = vmatpush.bf16.msra.mxu0 0
        %2115 = vmatpush.bf16.msra.mxu0 %v2083
        %2116 = vmatmul.bf16.gmra.mxu0 %v2100
        %v2117 = vpop.f32.mrf.mxu0
        %v2118 = vadd.f32 0.0, %v2117
        %v2119 = vpop.f32.mrf.mxu0
        %v2120 = vadd.f32 0.0, %v2119
        %2121 = vmatmul.bf16.gmra.mxu0 %v2103
        %v2122 = vpop.f32.mrf.mxu0
        %v2123 = vadd.f32 0.0, %v2122
        %v2124 = vpop.f32.mrf.mxu0
        %v2125 = vadd.f32 0.0, %v2124
        %2126 = vmatmul.bf16.gmra.mxu0 %v2106
        %v2127 = vpop.f32.mrf.mxu0
        %v2128 = vadd.f32 0.0, %v2127
        %v2129 = vpop.f32.mrf.mxu0
        %v2130 = vadd.f32 0.0, %v2129
        %2131 = vdwg.mxu0
        %2132 = vrot.lane.b32.xlu0 %v2118, 4
        %v2133 = vpop.permute.xlu0 %2132
        %2134 = vrot.lane.b32.xlu0 %v2120, 4
        %v2135 = vpop.permute.xlu0 %2134
        %2136 = vrot.lane.b32.xlu0 %v2128, 124
        %v2137 = vpop.permute.xlu0 %2136
        %2138 = vrot.lane.b32.xlu0 %v2130, 124
        %v2139 = vpop.permute.xlu0 %2138
        %v2140 = vadd.f32 %v2133, %v2123
        %v2141 = vadd.f32 %v2135, %v2125
        %v2142 = vadd.f32 %v2140, %v2137
        %v2143 = vadd.f32 %v2141, %v2139
        %2145 = vset.pattern.permute.xlu0 0
        %2146 = vperm.xlu0 %2145, %v1796
        %v2147 = vpop.permute.xlu0 %2146
        %2150 = vset.pattern.permute.xlu0 0
        %2151 = vperm.xlu0 %2150, %v1797
        %v2152 = vpop.permute.xlu0 %2151
        %v2154 = vadd.f32 %v2142, %v2147
        %v2155 = vadd.f32 %v2143, %v2152
        %v2156 = vmax.f32 %v2154, 0.0
        %v2157 = vmax.f32 %v2155, 0.0
        %v2158 = vpack.c.bf16 %v2157, %v2156
        %2160 = vset.pattern.permute.xlu0 0
        %2161 = vperm.xlu0 %2160, %v1814
        %v2162 = vpop.permute.xlu0 %2161
        %2165 = vset.pattern.permute.xlu0 0
        %2166 = vperm.xlu0 %2165, %v1815
        %v2167 = vpop.permute.xlu0 %2166
        %v2171 = vunpack.c.l.b16 %v1805
        %v2172 = vunpack.c.l.b16 %v1806
        %v2173 = vpack.c.b16 %v2172, %v2171
        %v2175 = vsel %vm701, %v2173, 0
        %2177 = vmatpush.bf16.msra.mxu0 0
        %2178 = vmatpush.bf16.msra.mxu0 0
        %2179 = vmatpush.bf16.msra.mxu0 0
        %2180 = vmatpush.bf16.msra.mxu0 0
        %2181 = vmatpush.bf16.msra.mxu0 0
        %2182 = vmatpush.bf16.msra.mxu0 0
        %2183 = vmatpush.bf16.msra.mxu0 0
        %2184 = vmatpush.bf16.msra.mxu0 %v2158
        %2185 = vmatmul.bf16.gmra.mxu0 %v2175
        %v2186 = vpop.f32.mrf.mxu0
        %v2187 = vadd.f32 %v2162, %v2186
        %v2188 = vpop.f32.mrf.mxu0
        %v2189 = vadd.f32 %v2167, %v2188
        %2190 = vdwg.mxu0
        %v2191 = vadd.f32 %v2081, %v2187
        %v2192 = vadd.f32 %v2082, %v2189
        %v2193 = vmul.f32 %v2191, %v585
        %v2194 = vmul.f32 %v2192, %v585
        %v2195 = vpack.c.bf16 %v2194, %v2193
        %v2202 = vunpack.c.l.b16 %v1785
        %v2203 = vunpack.c.l.b16 %v1786
        %v2204 = vunpack.c.l.b16 %v1787
        %v2205 = vunpack.c.l.b16 %v1788
        %v2206 = vunpack.c.l.b16 %v1789
        %v2207 = vunpack.c.l.b16 %v1790
        %v2208 = vpack.c.b16 %v2203, %v2202
        %v2209 = vpack.c.b16 %v2205, %v2204
        %v2210 = vpack.c.b16 %v2207, %v2206
        %v2212 = vsel %vm701, %v2208, 0
        %v2215 = vsel %vm701, %v2209, 0
        %v2218 = vsel %vm701, %v2210, 0
        %2220 = vmatpush.bf16.msra.mxu0 0
        %2221 = vmatpush.bf16.msra.mxu0 0
        %2222 = vmatpush.bf16.msra.mxu0 0
        %2223 = vmatpush.bf16.msra.mxu0 0
        %2224 = vmatpush.bf16.msra.mxu0 0
        %2225 = vmatpush.bf16.msra.mxu0 0
        %2226 = vmatpush.bf16.msra.mxu0 0
        %2227 = vmatpush.bf16.msra.mxu0 %v2195
        %2228 = vmatmul.bf16.gmra.mxu0 %v2212
        %v2229 = vpop.f32.mrf.mxu0
        %v2230 = vadd.f32 0.0, %v2229
        %v2231 = vpop.f32.mrf.mxu0
        %v2232 = vadd.f32 0.0, %v2231
        %2233 = vmatmul.bf16.gmra.mxu0 %v2215
        %v2234 = vpop.f32.mrf.mxu0
        %v2235 = vadd.f32 0.0, %v2234
        %v2236 = vpop.f32.mrf.mxu0
        %v2237 = vadd.f32 0.0, %v2236
        %2238 = vmatmul.bf16.gmra.mxu0 %v2218
        %v2239 = vpop.f32.mrf.mxu0
        %v2240 = vadd.f32 0.0, %v2239
        %v2241 = vpop.f32.mrf.mxu0
        %v2242 = vadd.f32 0.0, %v2241
        %2243 = vdwg.mxu0
        %2244 = vrot.lane.b32.xlu0 %v2230, 8
        %v2245 = vpop.permute.xlu0 %2244
        %2246 = vrot.lane.b32.xlu0 %v2232, 8
        %v2247 = vpop.permute.xlu0 %2246
        %2248 = vrot.lane.b32.xlu0 %v2240, 120
        %v2249 = vpop.permute.xlu0 %2248
        %2250 = vrot.lane.b32.xlu0 %v2242, 120
        %v2251 = vpop.permute.xlu0 %2250
        %v2252 = vadd.f32 %v2245, %v2235
        %v2253 = vadd.f32 %v2247, %v2237
        %v2254 = vadd.f32 %v2252, %v2249
        %v2255 = vadd.f32 %v2253, %v2251
        %2257 = vset.pattern.permute.xlu0 0
        %2258 = vperm.xlu0 %2257, %v1798
        %v2259 = vpop.permute.xlu0 %2258
        %2262 = vset.pattern.permute.xlu0 0
        %2263 = vperm.xlu0 %2262, %v1799
        %v2264 = vpop.permute.xlu0 %2263
        %v2266 = vadd.f32 %v2254, %v2259
        %v2267 = vadd.f32 %v2255, %v2264
        %v2268 = vmax.f32 %v2266, 0.0
        %v2269 = vmax.f32 %v2267, 0.0
        %v2270 = vpack.c.bf16 %v2269, %v2268
        %2272 = vset.pattern.permute.xlu0 0
        %2273 = vperm.xlu0 %2272, %v1816
        %v2274 = vpop.permute.xlu0 %2273
        %2277 = vset.pattern.permute.xlu0 0
        %2278 = vperm.xlu0 %2277, %v1817
        %v2279 = vpop.permute.xlu0 %2278
        %v2283 = vunpack.c.l.b16 %v1807
        %v2284 = vunpack.c.l.b16 %v1808
        %v2285 = vpack.c.b16 %v2284, %v2283
        %v2287 = vsel %vm701, %v2285, 0
        %2289 = vmatpush.bf16.msra.mxu0 0
        %2290 = vmatpush.bf16.msra.mxu0 0
        %2291 = vmatpush.bf16.msra.mxu0 0
        %2292 = vmatpush.bf16.msra.mxu0 0
        %2293 = vmatpush.bf16.msra.mxu0 0
        %2294 = vmatpush.bf16.msra.mxu0 0
        %2295 = vmatpush.bf16.msra.mxu0 0
        %2296 = vmatpush.bf16.msra.mxu0 %v2270
        %2297 = vmatmul.bf16.gmra.mxu0 %v2287
        %v2298 = vpop.f32.mrf.mxu0
        %v2299 = vadd.f32 %v2274, %v2298
        %v2300 = vpop.f32.mrf.mxu0
        %v2301 = vadd.f32 %v2279, %v2300
        %2302 = vdwg.mxu0
        %v2303 = vadd.f32 %v2193, %v2299
        %v2304 = vadd.f32 %v2194, %v2301
        %v2305 = vmul.f32 %v2303, %v585
        %v2306 = vmul.f32 %v2304, %v585
        %v2307 = vpack.c.bf16 %v2306, %v2305
        %2309 = vset.pattern.permute.xlu0 0
        %2310 = vperm.xlu0 %2309, %v1821
        %v2311 = vpop.permute.xlu0 %2310
        %v2314 = vsel %vm701, %v1819, 0
        %2316 = vmatpush.bf16.msra.mxu0 0
        %2317 = vmatpush.bf16.msra.mxu0 0
        %2318 = vmatpush.bf16.msra.mxu0 0
        %2319 = vmatpush.bf16.msra.mxu0 0
        %2320 = vmatpush.bf16.msra.mxu0 0
        %2321 = vmatpush.bf16.msra.mxu0 0
        %2322 = vmatpush.bf16.msra.mxu0 0
        %2323 = vmatpush.bf16.msra.mxu0 %v2307
        %2324 = vmatmul.bf16.gmra.mxu0 %v2314
        %v2325 = vpop.f32.mrf.mxu0
        %v2326 = vadd.f32 %v2311, %v2325
        %v2327 = vpop.f32.mrf.mxu0
        %2328 = vdwg.mxu0
        %v2329 = vmul.f32 %v2326, %v585
        %s2330 = scalar_lea.vmem %s573, 16 [#allocation2]
        %2331 = vst [vmem:[%s2330] sm:$0xff] %v2329
        %s2332 = sand.u32 %s425, 1
        %s2333 = sand.u32 %s425, 1
        %s2334 = smul.addr %s2333, 24
        %s2335 = scalar_lea.vmem [#allocation2], %s2334
        // Predicated region
        $region93: #{multi_stage_forward.1} parent=91 // pred_check
          %p2336 = pneg %p435
        $region94: #{multi_stage_forward.1} parent=91 // pred_check_branch
          %2338 = sbr.rel (%p2336) target = $region96
        $region95: #{multi_stage_forward.1} parent=91 // pred_region
          %s2339 = smul.addr %s29, 8
          %s2340 = scalar_lea.vmem %s18, %s2339
          // Predicated region
          $region97: #{multi_stage_forward.1} parent=95 // pred_check
            _
          $region98: #{multi_stage_forward.1} parent=95 // pred_check_branch
            %2342 = sbr.rel (0) target = $region100
          $region99: #{multi_stage_forward.1} parent=95 // pred_region
            // Predicated region
            $region101: #{multi_stage_forward.1} parent=99 // pred_check
              _
            $region102: #{multi_stage_forward.1} parent=99 // pred_check_branch
              %2344 = sbr.rel (0) target = $region104
            $region103: #{multi_stage_forward.1} parent=99 // pred_region
              // Predicated region
              $region116: #{multi_stage_forward.1} parent=103 // pred_check
                _
              $region117: #{multi_stage_forward.1} parent=103 // pred_check_branch
                %2364 = sbr.rel (0) target = $region119
              $region118: #{multi_stage_forward.1} parent=103 // pred_region
                loop: start=0, step=1, limit=1
                $region120: #{multi_stage_forward.1} parent=118 // loop_pre_header
                  _
                $region121: #{multi_stage_forward.1} parent=118 // loop_header
                  %s2366 = sphi 0, %s2370
                  %p2367 = scmp.ge.s32.totalorder %s2366, 1
                  %s2371 = sphi %s2335, %s2335
                  %s2372 = sphi %s2340, %s2340
                $region122: #{multi_stage_forward.1} parent=118 // loop_header_branch
                  %2369 = sbr.rel (%p2367) target = $region126
                $region123: #{multi_stage_forward.1} parent=118 // loop_body
                  %v2373 = vld [vmem:[%s2371] sm:$0xff]
                  %2374 = vst [vmem:[%s2372] sm:$0xff] %v2373
                  %v2375 = vld [vmem:[%s2371 + $0x8] sm:$0xff]
                  %2376 = vst [vmem:[%s2372 + $0x18] sm:$0xff] %v2375
                  %v2377 = vld [vmem:[%s2371 + $0x10] sm:$0xff]
                  %2378 = vst [vmem:[%s2372 + $0x30] sm:$0xff] %v2377
                $region124: #{multi_stage_forward.1} parent=118 // loop_footer
                  %s2370 = sadd.s32 1, %s2366
                $region125: #{multi_stage_forward.1} parent=118 // loop_footer_branch
                  %2365 = sbr.rel target = $region121
                $region126: #{multi_stage_forward.1} parent=118 // loop_exit
                  _
              $region119: #{multi_stage_forward.1} parent=103 // pred_fallthru
                _
              // Predicated region
              $region127: #{multi_stage_forward.1} parent=103 // pred_check
                _
              $region128: #{multi_stage_forward.1} parent=103 // pred_check_branch
                %2380 = sbr.rel target = $region130
              $region129: #{multi_stage_forward.1} parent=103 // pred_region
                _
              $region130: #{multi_stage_forward.1} parent=103 // pred_fallthru
                _
            $region104: #{multi_stage_forward.1} parent=99 // pred_fallthru
              _
            // Predicated region
            $region105: #{multi_stage_forward.1} parent=99 // pred_check
              _
            $region106: #{multi_stage_forward.1} parent=99 // pred_check_branch
              %2346 = sbr.rel target = $region108
            $region107: #{multi_stage_forward.1} parent=99 // pred_region
              %s2348 = ssub.s32 256, 1
              loop: start=0, step=1, limit=1
              $region109: #{multi_stage_forward.1} parent=107 // loop_pre_header
                _
              $region110: #{multi_stage_forward.1} parent=107 // loop_header
                %s2350 = sphi 0, %s2354
                %p2351 = scmp.ge.s32.totalorder %s2350, 1
                %s2355 = sphi %s2335, %s2335
                %s2356 = sphi %s2340, %s2340
              $region111: #{multi_stage_forward.1} parent=107 // loop_header_branch
                %2353 = sbr.rel (%p2351) target = $region115
              $region112: #{multi_stage_forward.1} parent=107 // loop_body
                %v2357 = vld [vmem:[%s2355] sm:%s2348]
                %2358 = vst [vmem:[%s2356] sm:%s2348] %v2357
                %v2359 = vld [vmem:[%s2355 + $0x8] sm:%s2348]
                %2360 = vst [vmem:[%s2356 + $0x18] sm:%s2348] %v2359
                %v2361 = vld [vmem:[%s2355 + $0x10] sm:%s2348]
                %2362 = vst [vmem:[%s2356 + $0x30] sm:%s2348] %v2361
              $region113: #{multi_stage_forward.1} parent=107 // loop_footer
                %s2354 = sadd.s32 1, %s2350
              $region114: #{multi_stage_forward.1} parent=107 // loop_footer_branch
                %2349 = sbr.rel target = $region110
              $region115: #{multi_stage_forward.1} parent=107 // loop_exit
                _
            $region108: #{multi_stage_forward.1} parent=99 // pred_fallthru
              _
          $region100: #{multi_stage_forward.1} parent=95 // pred_fallthru
            _
          %2381 = vnop
        $region96: #{multi_stage_forward.1} parent=91 // pred_fallthru
          _
      $region92: #{multi_stage_forward.1} parent=5 // pred_fallthru
        _
      %p2382 = scmp.le.s32.totalorder 2, %s24
      // Predicated region
      $region131: #{multi_stage_forward.1} parent=5 // pred_check
        %p2383 = pneg %p2382
      $region132: #{multi_stage_forward.1} parent=5 // pred_check_branch
        %2385 = sbr.rel (%p2383) target = $region134
      $region133: #{multi_stage_forward.1} parent=5 // pred_region
        %s2386 = ssub.s32 %s24, 2
        // Predicated region
        $region135: #{multi_stage_forward.1} parent=133 // pred_check
          %p2387 = pneg %p441
        $region136: #{multi_stage_forward.1} parent=133 // pred_check_branch
          %2389 = sbr.rel (%p2387) target = $region138
        $region137: #{multi_stage_forward.1} parent=133 // pred_region
          %s2390 = sand.u32 %s426, 1
          %s2391 = sand.u32 %s426, 1
          %s2392 = smul.addr %s2391, 24
          %s2393 = scalar_lea.vmem [#allocation2], %s2392
        $region138: #{multi_stage_forward.1} parent=133 // pred_fallthru
          _
      $region134: #{multi_stage_forward.1} parent=5 // pred_fallthru
        _
    $region6: #{multi_stage_forward.1} parent=1 // loop_footer
      %s28 = sadd.s32 1, %s24
    $region7: #{multi_stage_forward.1} parent=1 // loop_footer_branch
      %23 = sbr.rel target = $region3
    $region8: #{multi_stage_forward.1} parent=1 // loop_exit
      _

</llo_original>
